<compile_context>
chip_gen: v6e
topology: v6e:2x2x1
jax: 0.10.0
libtpu: 0.0.40
codegen_flags: <defaults>
</compile_context>

<pallas_src>
import functools
import math

import jax
import jax.numpy as jnp
from jax import lax
from jax.experimental import pallas as pl
from jax.experimental.pallas import tpu as pltpu

_LN_EPS = 1e-5


# ----------------------------------------------------------------------------
# Fused encoder-block kernel.  Rows of x are batch-major: row index = n*L + l.
# ----------------------------------------------------------------------------
def _encoder_kernel(x_ref, wqkv_ref, bqkv_ref, wo_ref, bo_ref,
                    gamma_ref, beta_ref, w1_ref, b1_ref, w2_ref, b2_ref,
                    out_ref, *, n_batch, seq_len, num_heads):
    x = x_ref[...]                                    # (M, E), M = n_batch*seq_len
    M, E = x.shape
    dh = E // num_heads
    scale = 1.0 / math.sqrt(dh)

    # Fused (state ∘ in_proj) projection: one (M,E) @ (E,3E) matmul.
    qkv = jnp.dot(x, wqkv_ref[...],
                  preferred_element_type=jnp.float32) + bqkv_ref[...]
    q = qkv[:, 0:E]
    k = qkv[:, E:2 * E]
    v = qkv[:, 2 * E:3 * E]

    # Multi-head scaled-dot-product attention, unrolled over (batch, head).
    batch_rows = []
    for n in range(n_batch):
        r0 = n * seq_len
        qn = q[r0:r0 + seq_len, :]
        kn = k[r0:r0 + seq_len, :]
        vn = v[r0:r0 + seq_len, :]
        head_cols = []
        for h in range(num_heads):
            c0 = h * dh
            qh = qn[:, c0:c0 + dh]                    # (L, dh)
            kh = kn[:, c0:c0 + dh]
            vh = vn[:, c0:c0 + dh]
            s = lax.dot_general(qh, kh, (((1,), (1,)), ((), ())),
                                preferred_element_type=jnp.float32) * scale
            s = s - jnp.max(s, axis=-1, keepdims=True)
            p = jnp.exp(s)
            p = p / jnp.sum(p, axis=-1, keepdims=True)
            head_cols.append(jnp.dot(p, vh, preferred_element_type=jnp.float32))
        batch_rows.append(jnp.concatenate(head_cols, axis=-1))   # (L, E)
    ctx = jnp.concatenate(batch_rows, axis=0)                    # (M, E)

    # Attention output projection.
    o1 = jnp.dot(ctx, wo_ref[...],
                 preferred_element_type=jnp.float32) + bo_ref[...]

    # AddNorm 1.
    a = o1 + x
    mu = jnp.mean(a, axis=-1, keepdims=True)
    var = jnp.mean((a - mu) ** 2, axis=-1, keepdims=True)
    o2 = (a - mu) * lax.rsqrt(var + _LN_EPS) * gamma_ref[...] + beta_ref[...]

    # FeedForward: Linear(E, F) -> ReLU -> Linear(F, E).
    h1 = jnp.dot(o2, w1_ref[...],
                 preferred_element_type=jnp.float32) + b1_ref[...]
    h1 = jnp.maximum(h1, 0.0)
    o3 = jnp.dot(h1, w2_ref[...],
                 preferred_element_type=jnp.float32) + b2_ref[...]

    # AddNorm 2 (same LayerNorm parameters).
    b = o3 + o2
    mu2 = jnp.mean(b, axis=-1, keepdims=True)
    var2 = jnp.mean((b - mu2) ** 2, axis=-1, keepdims=True)
    o4 = (b - mu2) * lax.rsqrt(var2 + _LN_EPS) * gamma_ref[...] + beta_ref[...]
    out_ref[...] = o4.astype(out_ref.dtype)


def encoder_forward(x, p, num_heads):
    """x: (L, N, E) seq-major (PyTorch nn.MultiheadAttention layout)."""
    L, N, E = x.shape
    # Batch-major, lane-dense 2-D layout for the kernel (layout plumbing only).
    xb = jnp.transpose(x, (1, 0, 2)).reshape(N * L, E)
    kern = functools.partial(_encoder_kernel, n_batch=N, seq_len=L,
                             num_heads=num_heads)
    vmem_spec = pl.BlockSpec(memory_space=pltpu.MemorySpace.VMEM)
    out2 = pl.pallas_call(
        kern,
        out_shape=jax.ShapeDtypeStruct((N * L, E), jnp.float32),
        in_specs=[vmem_spec] * 11,
        out_specs=vmem_spec,
    )(xb, p["wqkv_t"], p["bqkv"], p["wo_t"], p["bo"],
      p["gamma"], p["beta"], p["w1_t"], p["b1"], p["w2_t"], p["b2"])
    return out2.reshape(N, L, E).transpose(1, 0, 2)


# ----------------------------------------------------------------------------
# Module setup (plain JAX glue): deterministic parameters + fused weights.
# ----------------------------------------------------------------------------
def _init_linear(key, fan_in, fan_out):
    kw, kb = jax.random.split(key)
    bound = 1.0 / math.sqrt(fan_in)
    w = jax.random.uniform(kw, (fan_out, fan_in), jnp.float32, -bound, bound)
    b = jax.random.uniform(kb, (fan_out,), jnp.float32, -bound, bound)
    return w, b


class EncoderPallas:
    def __init__(self, embedding_size=128, num_heads=8, ff_hidden=80, key=None):
        assert embedding_size % num_heads == 0
        self.E = embedding_size
        self.H = num_heads
        self.F = ff_hidden
        k1, k2, k3, k4, k5 = jax.random.split(key, 5)

        # Unfused parameters (mirror the PyTorch module; used by the reference).
        self.Ws, self.bs = _init_linear(k1, self.E, self.E)          # state (LazyLinear)
        self.Win, self.bin = _init_linear(k2, self.E, 3 * self.E)    # MHA in_proj
        self.Wo, self.bo = _init_linear(k3, self.E, self.E)          # MHA out_proj
        self.gamma = jnp.ones((self.E,), jnp.float32)                # LayerNorm
        self.beta = jnp.zeros((self.E,), jnp.float32)
        self.W1, self.b1 = _init_linear(k4, self.E, self.F)          # FF linear 1
        self.W2, self.b2 = _init_linear(k5, self.F, self.E)          # FF linear 2

        # Kernel parameters: weights pre-transposed to (in, out), the `state`
        # linear algebraically folded into the (combined) q/k/v in_proj,
        # biases kept as (1, D) rows for in-kernel broadcast.
        wqkv_t = self.Ws.T @ self.Win.T                              # (E, 3E)
        bqkv = (self.bs @ self.Win.T + self.bin)[None, :]            # (1, 3E)
        self.params = dict(
            wqkv_t=wqkv_t, bqkv=bqkv,
            wo_t=self.Wo.T, bo=self.bo[None, :],
            gamma=self.gamma[None, :], beta=self.beta[None, :],
            w1_t=self.W1.T, b1=self.b1[None, :],
            w2_t=self.W2.T, b2=self.b2[None, :],
        )

    def __call__(self, x):
        return encoder_forward(x, self.params, self.H)


# ----------------------------------------------------------------------------
# Reference (pure JAX, unfused) for a correctness check.
# ----------------------------------------------------------------------------
def _layer_norm(a, gamma, beta):
    mu = jnp.mean(a, axis=-1, keepdims=True)
    var = jnp.mean((a - mu) ** 2, axis=-1, keepdims=True)
    return (a - mu) / jnp.sqrt(var + _LN_EPS) * gamma + beta


def reference_forward(m, x):
    L, N, E = x.shape
    H, Dh = m.H, E // m.H
    s = x @ m.Ws.T + m.bs                                            # state(x)
    qkv = s @ m.Win.T + m.bin                                        # in_proj
    q, k, v = jnp.split(qkv, 3, axis=-1)
    qh = q.reshape(L, N, H, Dh)
    kh = k.reshape(L, N, H, Dh)
    vh = v.reshape(L, N, H, Dh)
    scores = jnp.einsum("lnhd,mnhd->nhlm", qh, kh) / math.sqrt(Dh)
    p = jax.nn.softmax(scores, axis=-1)
    ctx = jnp.einsum("nhlm,mnhd->lnhd", p, vh).reshape(L, N, E)
    o1 = ctx @ m.Wo.T + m.bo
    o2 = _layer_norm(o1 + x, m.gamma, m.beta)
    h1 = jax.nn.relu(o2 @ m.W1.T + m.b1)
    o3 = h1 @ m.W2.T + m.b2
    return _layer_norm(o3 + o2, m.gamma, m.beta)


if __name__ == "__main__":
    key = jax.random.PRNGKey(0)
    k_params, k_input = jax.random.split(key)

    # Small shapes consistent with the module: (seq, batch, embed) with
    # embed divisible by 8 heads; FF hidden kept at 80 as in the spec.
    seq_len, batch, embed = 8, 2, 128

    module = EncoderPallas(embedding_size=embed, num_heads=8, ff_hidden=80,
                           key=k_params)
    x = jax.random.normal(k_input, (seq_len, batch, embed), jnp.float32)

    out = module(x)
    out = jax.block_until_ready(out)

    ref = reference_forward(module, x)
    assert out.shape == (seq_len, batch, embed)
    assert jnp.allclose(out, ref, atol=1e-3, rtol=1e-3), "mismatch vs reference"

    print("KERNEL_OK")
</pallas_src>

<mosaic_0001>
module attributes {stable_mosaic.version = 11 : i64} {
  func.func @_encoder_kernel(%arg0: memref<16x128xf32, #tpu.memory_space<vmem>>, %arg1: memref<128x384xf32, #tpu.memory_space<vmem>>, %arg2: memref<1x384xf32, #tpu.memory_space<vmem>>, %arg3: memref<128x128xf32, #tpu.memory_space<vmem>>, %arg4: memref<1x128xf32, #tpu.memory_space<vmem>>, %arg5: memref<1x128xf32, #tpu.memory_space<vmem>>, %arg6: memref<1x128xf32, #tpu.memory_space<vmem>>, %arg7: memref<128x80xf32, #tpu.memory_space<vmem>>, %arg8: memref<1x80xf32, #tpu.memory_space<vmem>>, %arg9: memref<80x128xf32, #tpu.memory_space<vmem>>, %arg10: memref<1x128xf32, #tpu.memory_space<vmem>>, %arg11: memref<16x128xf32, #tpu.memory_space<vmem>>) attributes {dimension_semantics = [], scalar_prefetch = 0 : i64, scratch_operands = 0 : i64, tpu.core_type = #tpu.core_type<tc>} {
    %c0 = arith.constant 0 : index
    %c0_0 = arith.constant 0 : index
    %0 = vector.load %arg0[%c0, %c0_0] : memref<16x128xf32, #tpu.memory_space<vmem>>, vector<16x128xf32>
    %c0_1 = arith.constant 0 : index
    %c0_2 = arith.constant 0 : index
    %1 = vector.load %arg1[%c0_1, %c0_2] : memref<128x384xf32, #tpu.memory_space<vmem>>, vector<128x384xf32>
    %cst = arith.constant dense<0.000000e+00> : vector<16x384xf32>
    %2 = tpu.matmul %0, %1, %cst {dimension_numbers = #tpu.dot_dimension_numbers<[1], [0], [0], [1], [0, 0, 1, 1], [], []>} : vector<16x128xf32>, vector<128x384xf32>, vector<16x384xf32> -> vector<16x384xf32>
    %c0_3 = arith.constant 0 : index
    %c0_4 = arith.constant 0 : index
    %3 = vector.load %arg2[%c0_3, %c0_4] : memref<1x384xf32, #tpu.memory_space<vmem>>, vector<1x384xf32>
    %4 = vector.broadcast %3 : vector<1x384xf32> to vector<16x384xf32>
    %5 = arith.addf %2, %4 : vector<16x384xf32>
    %6 = vector.extract_strided_slice %5 {offsets = [0, 0], sizes = [16, 128], strides = [1, 1]} : vector<16x384xf32> to vector<16x128xf32>
    %7 = vector.extract_strided_slice %5 {offsets = [0, 128], sizes = [16, 128], strides = [1, 1]} : vector<16x384xf32> to vector<16x128xf32>
    %8 = vector.extract_strided_slice %5 {offsets = [0, 256], sizes = [16, 128], strides = [1, 1]} : vector<16x384xf32> to vector<16x128xf32>
    %9 = vector.extract_strided_slice %6 {offsets = [0, 0], sizes = [8, 128], strides = [1, 1]} : vector<16x128xf32> to vector<8x128xf32>
    %10 = vector.extract_strided_slice %7 {offsets = [0, 0], sizes = [8, 128], strides = [1, 1]} : vector<16x128xf32> to vector<8x128xf32>
    %11 = vector.extract_strided_slice %8 {offsets = [0, 0], sizes = [8, 128], strides = [1, 1]} : vector<16x128xf32> to vector<8x128xf32>
    %12 = vector.extract_strided_slice %9 {offsets = [0, 0], sizes = [8, 16], strides = [1, 1]} : vector<8x128xf32> to vector<8x16xf32>
    %13 = vector.extract_strided_slice %10 {offsets = [0, 0], sizes = [8, 16], strides = [1, 1]} : vector<8x128xf32> to vector<8x16xf32>
    %14 = vector.extract_strided_slice %11 {offsets = [0, 0], sizes = [8, 16], strides = [1, 1]} : vector<8x128xf32> to vector<8x16xf32>
    %cst_5 = arith.constant dense<0.000000e+00> : vector<8x8xf32>
    %15 = tpu.matmul %12, %13, %cst_5 {dimension_numbers = #tpu.dot_dimension_numbers<[1], [1], [0], [0], [0, 0, 1, 0], [], []>} : vector<8x16xf32>, vector<8x16xf32>, vector<8x8xf32> -> vector<8x8xf32>
    %cst_6 = arith.constant 2.500000e-01 : f32
    %16 = vector.broadcast %cst_6 : f32 to vector<8x8xf32>
    %17 = arith.mulf %15, %16 : vector<8x8xf32>
    %cst_7 = arith.constant dense<0xFF800000> : vector<8xf32>
    %18 = vector.multi_reduction <maximumf>, %17, %cst_7 [1] : vector<8x8xf32> to vector<8xf32>
    %19 = vector.shape_cast %18 : vector<8xf32> to vector<8x1xf32>
    %20 = vector.broadcast %19 : vector<8x1xf32> to vector<8x8xf32>
    %21 = arith.subf %17, %20 : vector<8x8xf32>
    %22 = math.exp %21 : vector<8x8xf32>
    %cst_8 = arith.constant dense<0.000000e+00> : vector<8xf32>
    %23 = vector.multi_reduction <add>, %22, %cst_8 [1] : vector<8x8xf32> to vector<8xf32>
    %24 = vector.shape_cast %23 : vector<8xf32> to vector<8x1xf32>
    %25 = vector.broadcast %24 : vector<8x1xf32> to vector<8x8xf32>
    %26 = arith.divf %22, %25 : vector<8x8xf32>
    %cst_9 = arith.constant dense<0.000000e+00> : vector<8x16xf32>
    %27 = tpu.matmul %26, %14, %cst_9 {dimension_numbers = #tpu.dot_dimension_numbers<[1], [0], [0], [1], [0, 0, 1, 1], [], []>} : vector<8x8xf32>, vector<8x16xf32>, vector<8x16xf32> -> vector<8x16xf32>
    %28 = vector.extract_strided_slice %9 {offsets = [0, 16], sizes = [8, 16], strides = [1, 1]} : vector<8x128xf32> to vector<8x16xf32>
    %29 = vector.extract_strided_slice %10 {offsets = [0, 16], sizes = [8, 16], strides = [1, 1]} : vector<8x128xf32> to vector<8x16xf32>
    %30 = vector.extract_strided_slice %11 {offsets = [0, 16], sizes = [8, 16], strides = [1, 1]} : vector<8x128xf32> to vector<8x16xf32>
    %cst_10 = arith.constant dense<0.000000e+00> : vector<8x8xf32>
    %31 = tpu.matmul %28, %29, %cst_10 {dimension_numbers = #tpu.dot_dimension_numbers<[1], [1], [0], [0], [0, 0, 1, 0], [], []>} : vector<8x16xf32>, vector<8x16xf32>, vector<8x8xf32> -> vector<8x8xf32>
    %cst_11 = arith.constant 2.500000e-01 : f32
    %32 = vector.broadcast %cst_11 : f32 to vector<8x8xf32>
    %33 = arith.mulf %31, %32 : vector<8x8xf32>
    %cst_12 = arith.constant dense<0xFF800000> : vector<8xf32>
    %34 = vector.multi_reduction <maximumf>, %33, %cst_12 [1] : vector<8x8xf32> to vector<8xf32>
    %35 = vector.shape_cast %34 : vector<8xf32> to vector<8x1xf32>
    %36 = vector.broadcast %35 : vector<8x1xf32> to vector<8x8xf32>
    %37 = arith.subf %33, %36 : vector<8x8xf32>
    %38 = math.exp %37 : vector<8x8xf32>
    %cst_13 = arith.constant dense<0.000000e+00> : vector<8xf32>
    %39 = vector.multi_reduction <add>, %38, %cst_13 [1] : vector<8x8xf32> to vector<8xf32>
    %40 = vector.shape_cast %39 : vector<8xf32> to vector<8x1xf32>
    %41 = vector.broadcast %40 : vector<8x1xf32> to vector<8x8xf32>
    %42 = arith.divf %38, %41 : vector<8x8xf32>
    %cst_14 = arith.constant dense<0.000000e+00> : vector<8x16xf32>
    %43 = tpu.matmul %42, %30, %cst_14 {dimension_numbers = #tpu.dot_dimension_numbers<[1], [0], [0], [1], [0, 0, 1, 1], [], []>} : vector<8x8xf32>, vector<8x16xf32>, vector<8x16xf32> -> vector<8x16xf32>
    %44 = vector.extract_strided_slice %9 {offsets = [0, 32], sizes = [8, 16], strides = [1, 1]} : vector<8x128xf32> to vector<8x16xf32>
    %45 = vector.extract_strided_slice %10 {offsets = [0, 32], sizes = [8, 16], strides = [1, 1]} : vector<8x128xf32> to vector<8x16xf32>
    %46 = vector.extract_strided_slice %11 {offsets = [0, 32], sizes = [8, 16], strides = [1, 1]} : vector<8x128xf32> to vector<8x16xf32>
    %cst_15 = arith.constant dense<0.000000e+00> : vector<8x8xf32>
    %47 = tpu.matmul %44, %45, %cst_15 {dimension_numbers = #tpu.dot_dimension_numbers<[1], [1], [0], [0], [0, 0, 1, 0], [], []>} : vector<8x16xf32>, vector<8x16xf32>, vector<8x8xf32> -> vector<8x8xf32>
    %cst_16 = arith.constant 2.500000e-01 : f32
    %48 = vector.broadcast %cst_16 : f32 to vector<8x8xf32>
    %49 = arith.mulf %47, %48 : vector<8x8xf32>
    %cst_17 = arith.constant dense<0xFF800000> : vector<8xf32>
    %50 = vector.multi_reduction <maximumf>, %49, %cst_17 [1] : vector<8x8xf32> to vector<8xf32>
    %51 = vector.shape_cast %50 : vector<8xf32> to vector<8x1xf32>
    %52 = vector.broadcast %51 : vector<8x1xf32> to vector<8x8xf32>
    %53 = arith.subf %49, %52 : vector<8x8xf32>
    %54 = math.exp %53 : vector<8x8xf32>
    %cst_18 = arith.constant dense<0.000000e+00> : vector<8xf32>
    %55 = vector.multi_reduction <add>, %54, %cst_18 [1] : vector<8x8xf32> to vector<8xf32>
    %56 = vector.shape_cast %55 : vector<8xf32> to vector<8x1xf32>
    %57 = vector.broadcast %56 : vector<8x1xf32> to vector<8x8xf32>
    %58 = arith.divf %54, %57 : vector<8x8xf32>
    %cst_19 = arith.constant dense<0.000000e+00> : vector<8x16xf32>
    %59 = tpu.matmul %58, %46, %cst_19 {dimension_numbers = #tpu.dot_dimension_numbers<[1], [0], [0], [1], [0, 0, 1, 1], [], []>} : vector<8x8xf32>, vector<8x16xf32>, vector<8x16xf32> -> vector<8x16xf32>
    %60 = vector.extract_strided_slice %9 {offsets = [0, 48], sizes = [8, 16], strides = [1, 1]} : vector<8x128xf32> to vector<8x16xf32>
    %61 = vector.extract_strided_slice %10 {offsets = [0, 48], sizes = [8, 16], strides = [1, 1]} : vector<8x128xf32> to vector<8x16xf32>
    %62 = vector.extract_strided_slice %11 {offsets = [0, 48], sizes = [8, 16], strides = [1, 1]} : vector<8x128xf32> to vector<8x16xf32>
    %cst_20 = arith.constant dense<0.000000e+00> : vector<8x8xf32>
    %63 = tpu.matmul %60, %61, %cst_20 {dimension_numbers = #tpu.dot_dimension_numbers<[1], [1], [0], [0], [0, 0, 1, 0], [], []>} : vector<8x16xf32>, vector<8x16xf32>, vector<8x8xf32> -> vector<8x8xf32>
    %cst_21 = arith.constant 2.500000e-01 : f32
    %64 = vector.broadcast %cst_21 : f32 to vector<8x8xf32>
    %65 = arith.mulf %63, %64 : vector<8x8xf32>
    %cst_22 = arith.constant dense<0xFF800000> : vector<8xf32>
    %66 = vector.multi_reduction <maximumf>, %65, %cst_22 [1] : vector<8x8xf32> to vector<8xf32>
    %67 = vector.shape_cast %66 : vector<8xf32> to vector<8x1xf32>
    %68 = vector.broadcast %67 : vector<8x1xf32> to vector<8x8xf32>
    %69 = arith.subf %65, %68 : vector<8x8xf32>
    %70 = math.exp %69 : vector<8x8xf32>
    %cst_23 = arith.constant dense<0.000000e+00> : vector<8xf32>
    %71 = vector.multi_reduction <add>, %70, %cst_23 [1] : vector<8x8xf32> to vector<8xf32>
    %72 = vector.shape_cast %71 : vector<8xf32> to vector<8x1xf32>
    %73 = vector.broadcast %72 : vector<8x1xf32> to vector<8x8xf32>
    %74 = arith.divf %70, %73 : vector<8x8xf32>
    %cst_24 = arith.constant dense<0.000000e+00> : vector<8x16xf32>
    %75 = tpu.matmul %74, %62, %cst_24 {dimension_numbers = #tpu.dot_dimension_numbers<[1], [0], [0], [1], [0, 0, 1, 1], [], []>} : vector<8x8xf32>, vector<8x16xf32>, vector<8x16xf32> -> vector<8x16xf32>
    %76 = vector.extract_strided_slice %9 {offsets = [0, 64], sizes = [8, 16], strides = [1, 1]} : vector<8x128xf32> to vector<8x16xf32>
    %77 = vector.extract_strided_slice %10 {offsets = [0, 64], sizes = [8, 16], strides = [1, 1]} : vector<8x128xf32> to vector<8x16xf32>
    %78 = vector.extract_strided_slice %11 {offsets = [0, 64], sizes = [8, 16], strides = [1, 1]} : vector<8x128xf32> to vector<8x16xf32>
    %cst_25 = arith.constant dense<0.000000e+00> : vector<8x8xf32>
    %79 = tpu.matmul %76, %77, %cst_25 {dimension_numbers = #tpu.dot_dimension_numbers<[1], [1], [0], [0], [0, 0, 1, 0], [], []>} : vector<8x16xf32>, vector<8x16xf32>, vector<8x8xf32> -> vector<8x8xf32>
    %cst_26 = arith.constant 2.500000e-01 : f32
    %80 = vector.broadcast %cst_26 : f32 to vector<8x8xf32>
    %81 = arith.mulf %79, %80 : vector<8x8xf32>
    %cst_27 = arith.constant dense<0xFF800000> : vector<8xf32>
    %82 = vector.multi_reduction <maximumf>, %81, %cst_27 [1] : vector<8x8xf32> to vector<8xf32>
    %83 = vector.shape_cast %82 : vector<8xf32> to vector<8x1xf32>
    %84 = vector.broadcast %83 : vector<8x1xf32> to vector<8x8xf32>
    %85 = arith.subf %81, %84 : vector<8x8xf32>
    %86 = math.exp %85 : vector<8x8xf32>
    %cst_28 = arith.constant dense<0.000000e+00> : vector<8xf32>
    %87 = vector.multi_reduction <add>, %86, %cst_28 [1] : vector<8x8xf32> to vector<8xf32>
    %88 = vector.shape_cast %87 : vector<8xf32> to vector<8x1xf32>
    %89 = vector.broadcast %88 : vector<8x1xf32> to vector<8x8xf32>
    %90 = arith.divf %86, %89 : vector<8x8xf32>
    %cst_29 = arith.constant dense<0.000000e+00> : vector<8x16xf32>
    %91 = tpu.matmul %90, %78, %cst_29 {dimension_numbers = #tpu.dot_dimension_numbers<[1], [0], [0], [1], [0, 0, 1, 1], [], []>} : vector<8x8xf32>, vector<8x16xf32>, vector<8x16xf32> -> vector<8x16xf32>
    %92 = vector.extract_strided_slice %9 {offsets = [0, 80], sizes = [8, 16], strides = [1, 1]} : vector<8x128xf32> to vector<8x16xf32>
    %93 = vector.extract_strided_slice %10 {offsets = [0, 80], sizes = [8, 16], strides = [1, 1]} : vector<8x128xf32> to vector<8x16xf32>
    %94 = vector.extract_strided_slice %11 {offsets = [0, 80], sizes = [8, 16], strides = [1, 1]} : vector<8x128xf32> to vector<8x16xf32>
    %cst_30 = arith.constant dense<0.000000e+00> : vector<8x8xf32>
    %95 = tpu.matmul %92, %93, %cst_30 {dimension_numbers = #tpu.dot_dimension_numbers<[1], [1], [0], [0], [0, 0, 1, 0], [], []>} : vector<8x16xf32>, vector<8x16xf32>, vector<8x8xf32> -> vector<8x8xf32>
    %cst_31 = arith.constant 2.500000e-01 : f32
    %96 = vector.broadcast %cst_31 : f32 to vector<8x8xf32>
    %97 = arith.mulf %95, %96 : vector<8x8xf32>
    %cst_32 = arith.constant dense<0xFF800000> : vector<8xf32>
    %98 = vector.multi_reduction <maximumf>, %97, %cst_32 [1] : vector<8x8xf32> to vector<8xf32>
    %99 = vector.shape_cast %98 : vector<8xf32> to vector<8x1xf32>
    %100 = vector.broadcast %99 : vector<8x1xf32> to vector<8x8xf32>
    %101 = arith.subf %97, %100 : vector<8x8xf32>
    %102 = math.exp %101 : vector<8x8xf32>
    %cst_33 = arith.constant dense<0.000000e+00> : vector<8xf32>
    %103 = vector.multi_reduction <add>, %102, %cst_33 [1] : vector<8x8xf32> to vector<8xf32>
    %104 = vector.shape_cast %103 : vector<8xf32> to vector<8x1xf32>
    %105 = vector.broadcast %104 : vector<8x1xf32> to vector<8x8xf32>
    %106 = arith.divf %102, %105 : vector<8x8xf32>
    %cst_34 = arith.constant dense<0.000000e+00> : vector<8x16xf32>
    %107 = tpu.matmul %106, %94, %cst_34 {dimension_numbers = #tpu.dot_dimension_numbers<[1], [0], [0], [1], [0, 0, 1, 1], [], []>} : vector<8x8xf32>, vector<8x16xf32>, vector<8x16xf32> -> vector<8x16xf32>
    %108 = vector.extract_strided_slice %9 {offsets = [0, 96], sizes = [8, 16], strides = [1, 1]} : vector<8x128xf32> to vector<8x16xf32>
    %109 = vector.extract_strided_slice %10 {offsets = [0, 96], sizes = [8, 16], strides = [1, 1]} : vector<8x128xf32> to vector<8x16xf32>
    %110 = vector.extract_strided_slice %11 {offsets = [0, 96], sizes = [8, 16], strides = [1, 1]} : vector<8x128xf32> to vector<8x16xf32>
    %cst_35 = arith.constant dense<0.000000e+00> : vector<8x8xf32>
    %111 = tpu.matmul %108, %109, %cst_35 {dimension_numbers = #tpu.dot_dimension_numbers<[1], [1], [0], [0], [0, 0, 1, 0], [], []>} : vector<8x16xf32>, vector<8x16xf32>, vector<8x8xf32> -> vector<8x8xf32>
    %cst_36 = arith.constant 2.500000e-01 : f32
    %112 = vector.broadcast %cst_36 : f32 to vector<8x8xf32>
    %113 = arith.mulf %111, %112 : vector<8x8xf32>
    %cst_37 = arith.constant dense<0xFF800000> : vector<8xf32>
    %114 = vector.multi_reduction <maximumf>, %113, %cst_37 [1] : vector<8x8xf32> to vector<8xf32>
    %115 = vector.shape_cast %114 : vector<8xf32> to vector<8x1xf32>
    %116 = vector.broadcast %115 : vector<8x1xf32> to vector<8x8xf32>
    %117 = arith.subf %113, %116 : vector<8x8xf32>
    %118 = math.exp %117 : vector<8x8xf32>
    %cst_38 = arith.constant dense<0.000000e+00> : vector<8xf32>
    %119 = vector.multi_reduction <add>, %118, %cst_38 [1] : vector<8x8xf32> to vector<8xf32>
    %120 = vector.shape_cast %119 : vector<8xf32> to vector<8x1xf32>
    %121 = vector.broadcast %120 : vector<8x1xf32> to vector<8x8xf32>
    %122 = arith.divf %118, %121 : vector<8x8xf32>
    %cst_39 = arith.constant dense<0.000000e+00> : vector<8x16xf32>
    %123 = tpu.matmul %122, %110, %cst_39 {dimension_numbers = #tpu.dot_dimension_numbers<[1], [0], [0], [1], [0, 0, 1, 1], [], []>} : vector<8x8xf32>, vector<8x16xf32>, vector<8x16xf32> -> vector<8x16xf32>
    %124 = vector.extract_strided_slice %9 {offsets = [0, 112], sizes = [8, 16], strides = [1, 1]} : vector<8x128xf32> to vector<8x16xf32>
    %125 = vector.extract_strided_slice %10 {offsets = [0, 112], sizes = [8, 16], strides = [1, 1]} : vector<8x128xf32> to vector<8x16xf32>
    %126 = vector.extract_strided_slice %11 {offsets = [0, 112], sizes = [8, 16], strides = [1, 1]} : vector<8x128xf32> to vector<8x16xf32>
    %cst_40 = arith.constant dense<0.000000e+00> : vector<8x8xf32>
    %127 = tpu.matmul %124, %125, %cst_40 {dimension_numbers = #tpu.dot_dimension_numbers<[1], [1], [0], [0], [0, 0, 1, 0], [], []>} : vector<8x16xf32>, vector<8x16xf32>, vector<8x8xf32> -> vector<8x8xf32>
    %cst_41 = arith.constant 2.500000e-01 : f32
    %128 = vector.broadcast %cst_41 : f32 to vector<8x8xf32>
    %129 = arith.mulf %127, %128 : vector<8x8xf32>
    %cst_42 = arith.constant dense<0xFF800000> : vector<8xf32>
    %130 = vector.multi_reduction <maximumf>, %129, %cst_42 [1] : vector<8x8xf32> to vector<8xf32>
    %131 = vector.shape_cast %130 : vector<8xf32> to vector<8x1xf32>
    %132 = vector.broadcast %131 : vector<8x1xf32> to vector<8x8xf32>
    %133 = arith.subf %129, %132 : vector<8x8xf32>
    %134 = math.exp %133 : vector<8x8xf32>
    %cst_43 = arith.constant dense<0.000000e+00> : vector<8xf32>
    %135 = vector.multi_reduction <add>, %134, %cst_43 [1] : vector<8x8xf32> to vector<8xf32>
    %136 = vector.shape_cast %135 : vector<8xf32> to vector<8x1xf32>
    %137 = vector.broadcast %136 : vector<8x1xf32> to vector<8x8xf32>
    %138 = arith.divf %134, %137 : vector<8x8xf32>
    %cst_44 = arith.constant dense<0.000000e+00> : vector<8x16xf32>
    %139 = tpu.matmul %138, %126, %cst_44 {dimension_numbers = #tpu.dot_dimension_numbers<[1], [0], [0], [1], [0, 0, 1, 1], [], []>} : vector<8x8xf32>, vector<8x16xf32>, vector<8x16xf32> -> vector<8x16xf32>
    %140 = tpu.concatenate %27, %43, %59, %75, %91, %107, %123, %139 in 1 : vector<8x16xf32>, vector<8x16xf32>, vector<8x16xf32>, vector<8x16xf32>, vector<8x16xf32>, vector<8x16xf32>, vector<8x16xf32>, vector<8x16xf32> -> vector<8x128xf32>
    %141 = vector.extract_strided_slice %6 {offsets = [8, 0], sizes = [8, 128], strides = [1, 1]} : vector<16x128xf32> to vector<8x128xf32>
    %142 = vector.extract_strided_slice %7 {offsets = [8, 0], sizes = [8, 128], strides = [1, 1]} : vector<16x128xf32> to vector<8x128xf32>
    %143 = vector.extract_strided_slice %8 {offsets = [8, 0], sizes = [8, 128], strides = [1, 1]} : vector<16x128xf32> to vector<8x128xf32>
    %144 = vector.extract_strided_slice %141 {offsets = [0, 0], sizes = [8, 16], strides = [1, 1]} : vector<8x128xf32> to vector<8x16xf32>
    %145 = vector.extract_strided_slice %142 {offsets = [0, 0], sizes = [8, 16], strides = [1, 1]} : vector<8x128xf32> to vector<8x16xf32>
    %146 = vector.extract_strided_slice %143 {offsets = [0, 0], sizes = [8, 16], strides = [1, 1]} : vector<8x128xf32> to vector<8x16xf32>
    %cst_45 = arith.constant dense<0.000000e+00> : vector<8x8xf32>
    %147 = tpu.matmul %144, %145, %cst_45 {dimension_numbers = #tpu.dot_dimension_numbers<[1], [1], [0], [0], [0, 0, 1, 0], [], []>} : vector<8x16xf32>, vector<8x16xf32>, vector<8x8xf32> -> vector<8x8xf32>
    %cst_46 = arith.constant 2.500000e-01 : f32
    %148 = vector.broadcast %cst_46 : f32 to vector<8x8xf32>
    %149 = arith.mulf %147, %148 : vector<8x8xf32>
    %cst_47 = arith.constant dense<0xFF800000> : vector<8xf32>
    %150 = vector.multi_reduction <maximumf>, %149, %cst_47 [1] : vector<8x8xf32> to vector<8xf32>
    %151 = vector.shape_cast %150 : vector<8xf32> to vector<8x1xf32>
    %152 = vector.broadcast %151 : vector<8x1xf32> to vector<8x8xf32>
    %153 = arith.subf %149, %152 : vector<8x8xf32>
    %154 = math.exp %153 : vector<8x8xf32>
    %cst_48 = arith.constant dense<0.000000e+00> : vector<8xf32>
    %155 = vector.multi_reduction <add>, %154, %cst_48 [1] : vector<8x8xf32> to vector<8xf32>
    %156 = vector.shape_cast %155 : vector<8xf32> to vector<8x1xf32>
    %157 = vector.broadcast %156 : vector<8x1xf32> to vector<8x8xf32>
    %158 = arith.divf %154, %157 : vector<8x8xf32>
    %cst_49 = arith.constant dense<0.000000e+00> : vector<8x16xf32>
    %159 = tpu.matmul %158, %146, %cst_49 {dimension_numbers = #tpu.dot_dimension_numbers<[1], [0], [0], [1], [0, 0, 1, 1], [], []>} : vector<8x8xf32>, vector<8x16xf32>, vector<8x16xf32> -> vector<8x16xf32>
    %160 = vector.extract_strided_slice %141 {offsets = [0, 16], sizes = [8, 16], strides = [1, 1]} : vector<8x128xf32> to vector<8x16xf32>
    %161 = vector.extract_strided_slice %142 {offsets = [0, 16], sizes = [8, 16], strides = [1, 1]} : vector<8x128xf32> to vector<8x16xf32>
    %162 = vector.extract_strided_slice %143 {offsets = [0, 16], sizes = [8, 16], strides = [1, 1]} : vector<8x128xf32> to vector<8x16xf32>
    %cst_50 = arith.constant dense<0.000000e+00> : vector<8x8xf32>
    %163 = tpu.matmul %160, %161, %cst_50 {dimension_numbers = #tpu.dot_dimension_numbers<[1], [1], [0], [0], [0, 0, 1, 0], [], []>} : vector<8x16xf32>, vector<8x16xf32>, vector<8x8xf32> -> vector<8x8xf32>
    %cst_51 = arith.constant 2.500000e-01 : f32
    %164 = vector.broadcast %cst_51 : f32 to vector<8x8xf32>
    %165 = arith.mulf %163, %164 : vector<8x8xf32>
    %cst_52 = arith.constant dense<0xFF800000> : vector<8xf32>
    %166 = vector.multi_reduction <maximumf>, %165, %cst_52 [1] : vector<8x8xf32> to vector<8xf32>
    %167 = vector.shape_cast %166 : vector<8xf32> to vector<8x1xf32>
    %168 = vector.broadcast %167 : vector<8x1xf32> to vector<8x8xf32>
    %169 = arith.subf %165, %168 : vector<8x8xf32>
    %170 = math.exp %169 : vector<8x8xf32>
    %cst_53 = arith.constant dense<0.000000e+00> : vector<8xf32>
    %171 = vector.multi_reduction <add>, %170, %cst_53 [1] : vector<8x8xf32> to vector<8xf32>
    %172 = vector.shape_cast %171 : vector<8xf32> to vector<8x1xf32>
    %173 = vector.broadcast %172 : vector<8x1xf32> to vector<8x8xf32>
    %174 = arith.divf %170, %173 : vector<8x8xf32>
    %cst_54 = arith.constant dense<0.000000e+00> : vector<8x16xf32>
    %175 = tpu.matmul %174, %162, %cst_54 {dimension_numbers = #tpu.dot_dimension_numbers<[1], [0], [0], [1], [0, 0, 1, 1], [], []>} : vector<8x8xf32>, vector<8x16xf32>, vector<8x16xf32> -> vector<8x16xf32>
    %176 = vector.extract_strided_slice %141 {offsets = [0, 32], sizes = [8, 16], strides = [1, 1]} : vector<8x128xf32> to vector<8x16xf32>
    %177 = vector.extract_strided_slice %142 {offsets = [0, 32], sizes = [8, 16], strides = [1, 1]} : vector<8x128xf32> to vector<8x16xf32>
    %178 = vector.extract_strided_slice %143 {offsets = [0, 32], sizes = [8, 16], strides = [1, 1]} : vector<8x128xf32> to vector<8x16xf32>
    %cst_55 = arith.constant dense<0.000000e+00> : vector<8x8xf32>
    %179 = tpu.matmul %176, %177, %cst_55 {dimension_numbers = #tpu.dot_dimension_numbers<[1], [1], [0], [0], [0, 0, 1, 0], [], []>} : vector<8x16xf32>, vector<8x16xf32>, vector<8x8xf32> -> vector<8x8xf32>
    %cst_56 = arith.constant 2.500000e-01 : f32
    %180 = vector.broadcast %cst_56 : f32 to vector<8x8xf32>
    %181 = arith.mulf %179, %180 : vector<8x8xf32>
    %cst_57 = arith.constant dense<0xFF800000> : vector<8xf32>
    %182 = vector.multi_reduction <maximumf>, %181, %cst_57 [1] : vector<8x8xf32> to vector<8xf32>
    %183 = vector.shape_cast %182 : vector<8xf32> to vector<8x1xf32>
    %184 = vector.broadcast %183 : vector<8x1xf32> to vector<8x8xf32>
    %185 = arith.subf %181, %184 : vector<8x8xf32>
    %186 = math.exp %185 : vector<8x8xf32>
    %cst_58 = arith.constant dense<0.000000e+00> : vector<8xf32>
    %187 = vector.multi_reduction <add>, %186, %cst_58 [1] : vector<8x8xf32> to vector<8xf32>
    %188 = vector.shape_cast %187 : vector<8xf32> to vector<8x1xf32>
    %189 = vector.broadcast %188 : vector<8x1xf32> to vector<8x8xf32>
    %190 = arith.divf %186, %189 : vector<8x8xf32>
    %cst_59 = arith.constant dense<0.000000e+00> : vector<8x16xf32>
    %191 = tpu.matmul %190, %178, %cst_59 {dimension_numbers = #tpu.dot_dimension_numbers<[1], [0], [0], [1], [0, 0, 1, 1], [], []>} : vector<8x8xf32>, vector<8x16xf32>, vector<8x16xf32> -> vector<8x16xf32>
    %192 = vector.extract_strided_slice %141 {offsets = [0, 48], sizes = [8, 16], strides = [1, 1]} : vector<8x128xf32> to vector<8x16xf32>
    %193 = vector.extract_strided_slice %142 {offsets = [0, 48], sizes = [8, 16], strides = [1, 1]} : vector<8x128xf32> to vector<8x16xf32>
    %194 = vector.extract_strided_slice %143 {offsets = [0, 48], sizes = [8, 16], strides = [1, 1]} : vector<8x128xf32> to vector<8x16xf32>
    %cst_60 = arith.constant dense<0.000000e+00> : vector<8x8xf32>
    %195 = tpu.matmul %192, %193, %cst_60 {dimension_numbers = #tpu.dot_dimension_numbers<[1], [1], [0], [0], [0, 0, 1, 0], [], []>} : vector<8x16xf32>, vector<8x16xf32>, vector<8x8xf32> -> vector<8x8xf32>
    %cst_61 = arith.constant 2.500000e-01 : f32
    %196 = vector.broadcast %cst_61 : f32 to vector<8x8xf32>
    %197 = arith.mulf %195, %196 : vector<8x8xf32>
    %cst_62 = arith.constant dense<0xFF800000> : vector<8xf32>
    %198 = vector.multi_reduction <maximumf>, %197, %cst_62 [1] : vector<8x8xf32> to vector<8xf32>
    %199 = vector.shape_cast %198 : vector<8xf32> to vector<8x1xf32>
    %200 = vector.broadcast %199 : vector<8x1xf32> to vector<8x8xf32>
    %201 = arith.subf %197, %200 : vector<8x8xf32>
    %202 = math.exp %201 : vector<8x8xf32>
    %cst_63 = arith.constant dense<0.000000e+00> : vector<8xf32>
    %203 = vector.multi_reduction <add>, %202, %cst_63 [1] : vector<8x8xf32> to vector<8xf32>
    %204 = vector.shape_cast %203 : vector<8xf32> to vector<8x1xf32>
    %205 = vector.broadcast %204 : vector<8x1xf32> to vector<8x8xf32>
    %206 = arith.divf %202, %205 : vector<8x8xf32>
    %cst_64 = arith.constant dense<0.000000e+00> : vector<8x16xf32>
    %207 = tpu.matmul %206, %194, %cst_64 {dimension_numbers = #tpu.dot_dimension_numbers<[1], [0], [0], [1], [0, 0, 1, 1], [], []>} : vector<8x8xf32>, vector<8x16xf32>, vector<8x16xf32> -> vector<8x16xf32>
    %208 = vector.extract_strided_slice %141 {offsets = [0, 64], sizes = [8, 16], strides = [1, 1]} : vector<8x128xf32> to vector<8x16xf32>
    %209 = vector.extract_strided_slice %142 {offsets = [0, 64], sizes = [8, 16], strides = [1, 1]} : vector<8x128xf32> to vector<8x16xf32>
    %210 = vector.extract_strided_slice %143 {offsets = [0, 64], sizes = [8, 16], strides = [1, 1]} : vector<8x128xf32> to vector<8x16xf32>
    %cst_65 = arith.constant dense<0.000000e+00> : vector<8x8xf32>
    %211 = tpu.matmul %208, %209, %cst_65 {dimension_numbers = #tpu.dot_dimension_numbers<[1], [1], [0], [0], [0, 0, 1, 0], [], []>} : vector<8x16xf32>, vector<8x16xf32>, vector<8x8xf32> -> vector<8x8xf32>
    %cst_66 = arith.constant 2.500000e-01 : f32
    %212 = vector.broadcast %cst_66 : f32 to vector<8x8xf32>
    %213 = arith.mulf %211, %212 : vector<8x8xf32>
    %cst_67 = arith.constant dense<0xFF800000> : vector<8xf32>
    %214 = vector.multi_reduction <maximumf>, %213, %cst_67 [1] : vector<8x8xf32> to vector<8xf32>
    %215 = vector.shape_cast %214 : vector<8xf32> to vector<8x1xf32>
    %216 = vector.broadcast %215 : vector<8x1xf32> to vector<8x8xf32>
    %217 = arith.subf %213, %216 : vector<8x8xf32>
    %218 = math.exp %217 : vector<8x8xf32>
    %cst_68 = arith.constant dense<0.000000e+00> : vector<8xf32>
    %219 = vector.multi_reduction <add>, %218, %cst_68 [1] : vector<8x8xf32> to vector<8xf32>
    %220 = vector.shape_cast %219 : vector<8xf32> to vector<8x1xf32>
    %221 = vector.broadcast %220 : vector<8x1xf32> to vector<8x8xf32>
    %222 = arith.divf %218, %221 : vector<8x8xf32>
    %cst_69 = arith.constant dense<0.000000e+00> : vector<8x16xf32>
    %223 = tpu.matmul %222, %210, %cst_69 {dimension_numbers = #tpu.dot_dimension_numbers<[1], [0], [0], [1], [0, 0, 1, 1], [], []>} : vector<8x8xf32>, vector<8x16xf32>, vector<8x16xf32> -> vector<8x16xf32>
    %224 = vector.extract_strided_slice %141 {offsets = [0, 80], sizes = [8, 16], strides = [1, 1]} : vector<8x128xf32> to vector<8x16xf32>
    %225 = vector.extract_strided_slice %142 {offsets = [0, 80], sizes = [8, 16], strides = [1, 1]} : vector<8x128xf32> to vector<8x16xf32>
    %226 = vector.extract_strided_slice %143 {offsets = [0, 80], sizes = [8, 16], strides = [1, 1]} : vector<8x128xf32> to vector<8x16xf32>
    %cst_70 = arith.constant dense<0.000000e+00> : vector<8x8xf32>
    %227 = tpu.matmul %224, %225, %cst_70 {dimension_numbers = #tpu.dot_dimension_numbers<[1], [1], [0], [0], [0, 0, 1, 0], [], []>} : vector<8x16xf32>, vector<8x16xf32>, vector<8x8xf32> -> vector<8x8xf32>
    %cst_71 = arith.constant 2.500000e-01 : f32
    %228 = vector.broadcast %cst_71 : f32 to vector<8x8xf32>
    %229 = arith.mulf %227, %228 : vector<8x8xf32>
    %cst_72 = arith.constant dense<0xFF800000> : vector<8xf32>
    %230 = vector.multi_reduction <maximumf>, %229, %cst_72 [1] : vector<8x8xf32> to vector<8xf32>
    %231 = vector.shape_cast %230 : vector<8xf32> to vector<8x1xf32>
    %232 = vector.broadcast %231 : vector<8x1xf32> to vector<8x8xf32>
    %233 = arith.subf %229, %232 : vector<8x8xf32>
    %234 = math.exp %233 : vector<8x8xf32>
    %cst_73 = arith.constant dense<0.000000e+00> : vector<8xf32>
    %235 = vector.multi_reduction <add>, %234, %cst_73 [1] : vector<8x8xf32> to vector<8xf32>
    %236 = vector.shape_cast %235 : vector<8xf32> to vector<8x1xf32>
    %237 = vector.broadcast %236 : vector<8x1xf32> to vector<8x8xf32>
    %238 = arith.divf %234, %237 : vector<8x8xf32>
    %cst_74 = arith.constant dense<0.000000e+00> : vector<8x16xf32>
    %239 = tpu.matmul %238, %226, %cst_74 {dimension_numbers = #tpu.dot_dimension_numbers<[1], [0], [0], [1], [0, 0, 1, 1], [], []>} : vector<8x8xf32>, vector<8x16xf32>, vector<8x16xf32> -> vector<8x16xf32>
    %240 = vector.extract_strided_slice %141 {offsets = [0, 96], sizes = [8, 16], strides = [1, 1]} : vector<8x128xf32> to vector<8x16xf32>
    %241 = vector.extract_strided_slice %142 {offsets = [0, 96], sizes = [8, 16], strides = [1, 1]} : vector<8x128xf32> to vector<8x16xf32>
    %242 = vector.extract_strided_slice %143 {offsets = [0, 96], sizes = [8, 16], strides = [1, 1]} : vector<8x128xf32> to vector<8x16xf32>
    %cst_75 = arith.constant dense<0.000000e+00> : vector<8x8xf32>
    %243 = tpu.matmul %240, %241, %cst_75 {dimension_numbers = #tpu.dot_dimension_numbers<[1], [1], [0], [0], [0, 0, 1, 0], [], []>} : vector<8x16xf32>, vector<8x16xf32>, vector<8x8xf32> -> vector<8x8xf32>
    %cst_76 = arith.constant 2.500000e-01 : f32
    %244 = vector.broadcast %cst_76 : f32 to vector<8x8xf32>
    %245 = arith.mulf %243, %244 : vector<8x8xf32>
    %cst_77 = arith.constant dense<0xFF800000> : vector<8xf32>
    %246 = vector.multi_reduction <maximumf>, %245, %cst_77 [1] : vector<8x8xf32> to vector<8xf32>
    %247 = vector.shape_cast %246 : vector<8xf32> to vector<8x1xf32>
    %248 = vector.broadcast %247 : vector<8x1xf32> to vector<8x8xf32>
    %249 = arith.subf %245, %248 : vector<8x8xf32>
    %250 = math.exp %249 : vector<8x8xf32>
    %cst_78 = arith.constant dense<0.000000e+00> : vector<8xf32>
    %251 = vector.multi_reduction <add>, %250, %cst_78 [1] : vector<8x8xf32> to vector<8xf32>
    %252 = vector.shape_cast %251 : vector<8xf32> to vector<8x1xf32>
    %253 = vector.broadcast %252 : vector<8x1xf32> to vector<8x8xf32>
    %254 = arith.divf %250, %253 : vector<8x8xf32>
    %cst_79 = arith.constant dense<0.000000e+00> : vector<8x16xf32>
    %255 = tpu.matmul %254, %242, %cst_79 {dimension_numbers = #tpu.dot_dimension_numbers<[1], [0], [0], [1], [0, 0, 1, 1], [], []>} : vector<8x8xf32>, vector<8x16xf32>, vector<8x16xf32> -> vector<8x16xf32>
    %256 = vector.extract_strided_slice %141 {offsets = [0, 112], sizes = [8, 16], strides = [1, 1]} : vector<8x128xf32> to vector<8x16xf32>
    %257 = vector.extract_strided_slice %142 {offsets = [0, 112], sizes = [8, 16], strides = [1, 1]} : vector<8x128xf32> to vector<8x16xf32>
    %258 = vector.extract_strided_slice %143 {offsets = [0, 112], sizes = [8, 16], strides = [1, 1]} : vector<8x128xf32> to vector<8x16xf32>
    %cst_80 = arith.constant dense<0.000000e+00> : vector<8x8xf32>
    %259 = tpu.matmul %256, %257, %cst_80 {dimension_numbers = #tpu.dot_dimension_numbers<[1], [1], [0], [0], [0, 0, 1, 0], [], []>} : vector<8x16xf32>, vector<8x16xf32>, vector<8x8xf32> -> vector<8x8xf32>
    %cst_81 = arith.constant 2.500000e-01 : f32
    %260 = vector.broadcast %cst_81 : f32 to vector<8x8xf32>
    %261 = arith.mulf %259, %260 : vector<8x8xf32>
    %cst_82 = arith.constant dense<0xFF800000> : vector<8xf32>
    %262 = vector.multi_reduction <maximumf>, %261, %cst_82 [1] : vector<8x8xf32> to vector<8xf32>
    %263 = vector.shape_cast %262 : vector<8xf32> to vector<8x1xf32>
    %264 = vector.broadcast %263 : vector<8x1xf32> to vector<8x8xf32>
    %265 = arith.subf %261, %264 : vector<8x8xf32>
    %266 = math.exp %265 : vector<8x8xf32>
    %cst_83 = arith.constant dense<0.000000e+00> : vector<8xf32>
    %267 = vector.multi_reduction <add>, %266, %cst_83 [1] : vector<8x8xf32> to vector<8xf32>
    %268 = vector.shape_cast %267 : vector<8xf32> to vector<8x1xf32>
    %269 = vector.broadcast %268 : vector<8x1xf32> to vector<8x8xf32>
    %270 = arith.divf %266, %269 : vector<8x8xf32>
    %cst_84 = arith.constant dense<0.000000e+00> : vector<8x16xf32>
    %271 = tpu.matmul %270, %258, %cst_84 {dimension_numbers = #tpu.dot_dimension_numbers<[1], [0], [0], [1], [0, 0, 1, 1], [], []>} : vector<8x8xf32>, vector<8x16xf32>, vector<8x16xf32> -> vector<8x16xf32>
    %272 = tpu.concatenate %159, %175, %191, %207, %223, %239, %255, %271 in 1 : vector<8x16xf32>, vector<8x16xf32>, vector<8x16xf32>, vector<8x16xf32>, vector<8x16xf32>, vector<8x16xf32>, vector<8x16xf32>, vector<8x16xf32> -> vector<8x128xf32>
    %273 = tpu.concatenate %140, %272 in 0 : vector<8x128xf32>, vector<8x128xf32> -> vector<16x128xf32>
    %c0_85 = arith.constant 0 : index
    %c0_86 = arith.constant 0 : index
    %274 = vector.load %arg3[%c0_85, %c0_86] : memref<128x128xf32, #tpu.memory_space<vmem>>, vector<128x128xf32>
    %cst_87 = arith.constant dense<0.000000e+00> : vector<16x128xf32>
    %275 = tpu.matmul %273, %274, %cst_87 {dimension_numbers = #tpu.dot_dimension_numbers<[1], [0], [0], [1], [0, 0, 1, 1], [], []>} : vector<16x128xf32>, vector<128x128xf32>, vector<16x128xf32> -> vector<16x128xf32>
    %c0_88 = arith.constant 0 : index
    %c0_89 = arith.constant 0 : index
    %276 = vector.load %arg4[%c0_88, %c0_89] : memref<1x128xf32, #tpu.memory_space<vmem>>, vector<1x128xf32>
    %277 = vector.broadcast %276 : vector<1x128xf32> to vector<16x128xf32>
    %278 = arith.addf %275, %277 : vector<16x128xf32>
    %279 = arith.addf %278, %0 : vector<16x128xf32>
    %cst_90 = arith.constant dense<0.000000e+00> : vector<16xf32>
    %280 = vector.multi_reduction <add>, %279, %cst_90 [1] : vector<16x128xf32> to vector<16xf32>
    %281 = vector.shape_cast %280 : vector<16xf32> to vector<16x1xf32>
    %cst_91 = arith.constant 1.280000e+02 : f32
    %282 = vector.broadcast %cst_91 : f32 to vector<16x1xf32>
    %283 = arith.divf %281, %282 : vector<16x1xf32>
    %284 = vector.broadcast %283 : vector<16x1xf32> to vector<16x128xf32>
    %285 = arith.subf %279, %284 : vector<16x128xf32>
    %286 = arith.mulf %285, %285 : vector<16x128xf32>
    %cst_92 = arith.constant dense<0.000000e+00> : vector<16xf32>
    %287 = vector.multi_reduction <add>, %286, %cst_92 [1] : vector<16x128xf32> to vector<16xf32>
    %288 = vector.shape_cast %287 : vector<16xf32> to vector<16x1xf32>
    %cst_93 = arith.constant 1.280000e+02 : f32
    %289 = vector.broadcast %cst_93 : f32 to vector<16x1xf32>
    %290 = arith.divf %288, %289 : vector<16x1xf32>
    %291 = vector.broadcast %283 : vector<16x1xf32> to vector<16x128xf32>
    %292 = arith.subf %279, %291 : vector<16x128xf32>
    %cst_94 = arith.constant 9.99999974E-6 : f32
    %293 = vector.broadcast %cst_94 : f32 to vector<16x1xf32>
    %294 = arith.addf %290, %293 : vector<16x1xf32>
    %295 = math.rsqrt %294 : vector<16x1xf32>
    %296 = vector.broadcast %295 : vector<16x1xf32> to vector<16x128xf32>
    %297 = arith.mulf %292, %296 : vector<16x128xf32>
    %c0_95 = arith.constant 0 : index
    %c0_96 = arith.constant 0 : index
    %298 = vector.load %arg5[%c0_95, %c0_96] : memref<1x128xf32, #tpu.memory_space<vmem>>, vector<1x128xf32>
    %299 = vector.broadcast %298 : vector<1x128xf32> to vector<16x128xf32>
    %300 = arith.mulf %297, %299 : vector<16x128xf32>
    %c0_97 = arith.constant 0 : index
    %c0_98 = arith.constant 0 : index
    %301 = vector.load %arg6[%c0_97, %c0_98] : memref<1x128xf32, #tpu.memory_space<vmem>>, vector<1x128xf32>
    %302 = vector.broadcast %301 : vector<1x128xf32> to vector<16x128xf32>
    %303 = arith.addf %300, %302 : vector<16x128xf32>
    %c0_99 = arith.constant 0 : index
    %c0_100 = arith.constant 0 : index
    %304 = vector.load %arg7[%c0_99, %c0_100] : memref<128x80xf32, #tpu.memory_space<vmem>>, vector<128x80xf32>
    %cst_101 = arith.constant dense<0.000000e+00> : vector<16x80xf32>
    %305 = tpu.matmul %303, %304, %cst_101 {dimension_numbers = #tpu.dot_dimension_numbers<[1], [0], [0], [1], [0, 0, 1, 1], [], []>} : vector<16x128xf32>, vector<128x80xf32>, vector<16x80xf32> -> vector<16x80xf32>
    %c0_102 = arith.constant 0 : index
    %c0_103 = arith.constant 0 : index
    %306 = vector.load %arg8[%c0_102, %c0_103] : memref<1x80xf32, #tpu.memory_space<vmem>>, vector<1x80xf32>
    %307 = vector.broadcast %306 : vector<1x80xf32> to vector<16x80xf32>
    %308 = arith.addf %305, %307 : vector<16x80xf32>
    %cst_104 = arith.constant 0.000000e+00 : f32
    %309 = vector.broadcast %cst_104 : f32 to vector<16x80xf32>
    %310 = arith.maximumf %308, %309 : vector<16x80xf32>
    %c0_105 = arith.constant 0 : index
    %c0_106 = arith.constant 0 : index
    %311 = vector.load %arg9[%c0_105, %c0_106] : memref<80x128xf32, #tpu.memory_space<vmem>>, vector<80x128xf32>
    %cst_107 = arith.constant dense<0.000000e+00> : vector<16x128xf32>
    %312 = tpu.matmul %310, %311, %cst_107 {dimension_numbers = #tpu.dot_dimension_numbers<[1], [0], [0], [1], [0, 0, 1, 1], [], []>} : vector<16x80xf32>, vector<80x128xf32>, vector<16x128xf32> -> vector<16x128xf32>
    %c0_108 = arith.constant 0 : index
    %c0_109 = arith.constant 0 : index
    %313 = vector.load %arg10[%c0_108, %c0_109] : memref<1x128xf32, #tpu.memory_space<vmem>>, vector<1x128xf32>
    %314 = vector.broadcast %313 : vector<1x128xf32> to vector<16x128xf32>
    %315 = arith.addf %312, %314 : vector<16x128xf32>
    %316 = arith.addf %315, %303 : vector<16x128xf32>
    %cst_110 = arith.constant dense<0.000000e+00> : vector<16xf32>
    %317 = vector.multi_reduction <add>, %316, %cst_110 [1] : vector<16x128xf32> to vector<16xf32>
    %318 = vector.shape_cast %317 : vector<16xf32> to vector<16x1xf32>
    %cst_111 = arith.constant 1.280000e+02 : f32
    %319 = vector.broadcast %cst_111 : f32 to vector<16x1xf32>
    %320 = arith.divf %318, %319 : vector<16x1xf32>
    %321 = vector.broadcast %320 : vector<16x1xf32> to vector<16x128xf32>
    %322 = arith.subf %316, %321 : vector<16x128xf32>
    %323 = arith.mulf %322, %322 : vector<16x128xf32>
    %cst_112 = arith.constant dense<0.000000e+00> : vector<16xf32>
    %324 = vector.multi_reduction <add>, %323, %cst_112 [1] : vector<16x128xf32> to vector<16xf32>
    %325 = vector.shape_cast %324 : vector<16xf32> to vector<16x1xf32>
    %cst_113 = arith.constant 1.280000e+02 : f32
    %326 = vector.broadcast %cst_113 : f32 to vector<16x1xf32>
    %327 = arith.divf %325, %326 : vector<16x1xf32>
    %328 = vector.broadcast %320 : vector<16x1xf32> to vector<16x128xf32>
    %329 = arith.subf %316, %328 : vector<16x128xf32>
    %cst_114 = arith.constant 9.99999974E-6 : f32
    %330 = vector.broadcast %cst_114 : f32 to vector<16x1xf32>
    %331 = arith.addf %327, %330 : vector<16x1xf32>
    %332 = math.rsqrt %331 : vector<16x1xf32>
    %333 = vector.broadcast %332 : vector<16x1xf32> to vector<16x128xf32>
    %334 = arith.mulf %329, %333 : vector<16x128xf32>
    %c0_115 = arith.constant 0 : index
    %c0_116 = arith.constant 0 : index
    %335 = vector.load %arg5[%c0_115, %c0_116] : memref<1x128xf32, #tpu.memory_space<vmem>>, vector<1x128xf32>
    %336 = vector.broadcast %335 : vector<1x128xf32> to vector<16x128xf32>
    %337 = arith.mulf %334, %336 : vector<16x128xf32>
    %c0_117 = arith.constant 0 : index
    %c0_118 = arith.constant 0 : index
    %338 = vector.load %arg6[%c0_117, %c0_118] : memref<1x128xf32, #tpu.memory_space<vmem>>, vector<1x128xf32>
    %339 = vector.broadcast %338 : vector<1x128xf32> to vector<16x128xf32>
    %340 = arith.addf %337, %339 : vector<16x128xf32>
    %c0_119 = arith.constant 0 : index
    %c0_120 = arith.constant 0 : index
    %341 = vector.load %arg11[%c0_119, %c0_120] : memref<16x128xf32, #tpu.memory_space<vmem>>, vector<16x128xf32>
    tpu.vector_store %arg11[%c0_119, %c0_120], %340 {strides = array<i32>} : memref<16x128xf32, #tpu.memory_space<vmem>>, vector<16x128xf32>,
    return
  }
}

</mosaic_0001>

<llo_original>
// kernel: tpu_custom_call.1
$region0: #{tpu_custom_call.1}
  #allocation0 [shape = 'u32[]', space=smem, size = 0x4, offset = 0x4, fixed_abs, tag = 'smem constant byte address 0x4 - core index']
  #allocation1 [shape = 'u32[144,128]{1,0:T(1,128)}', space=vmem, size = 0x12000, scoped, tag = 'internal scratch']
  %s0 = inlined_call_operand.hbm [shape: f32[16,128], index: 0, kind: input, shape index: {}]
  %s1 = inlined_call_operand.hbm [shape: f32[128,384], index: 1, kind: input, shape index: {}]
  %s2 = inlined_call_operand.vmem [shape: f32[1,384], index: 2, kind: input, shape index: {}]
  %s3 = inlined_call_operand.vmem [shape: f32[128,128], index: 3, kind: input, shape index: {}]
  %s4 = inlined_call_operand.vmem [shape: f32[1,128], index: 4, kind: input, shape index: {}]
  %s5 = inlined_call_operand.vmem [shape: f32[1,128], index: 5, kind: input, shape index: {}]
  %s6 = inlined_call_operand.vmem [shape: f32[1,128], index: 6, kind: input, shape index: {}]
  %s7 = inlined_call_operand.vmem [shape: f32[128,80], index: 7, kind: input, shape index: {}]
  %s8 = inlined_call_operand.vmem [shape: f32[1,80], index: 8, kind: input, shape index: {}]
  %s9 = inlined_call_operand.vmem [shape: f32[80,128], index: 9, kind: input, shape index: {}]
  %s10 = inlined_call_operand.vmem [shape: f32[1,128], index: 10, kind: input, shape index: {}]
  %s11 = inlined_call_operand.hbm [shape: f32[16,128], index: 11, kind: output, shape index: {}]
  %s12 = sld [smem:[#allocation0]]
  $region62: #{tpu_custom_call.1} parent=0
    _
  %s14 = ssub.s32 1, %s12
  %s15 = scalar_select 0, %s14, %s12
  $region1: #{tpu_custom_call.1} parent=0
    #allocation2 [shape = 'u8[8192]{0}', space=vmem, size = 0x2000, scoped, tag = 'input window, operand 0, single buffered']
    #allocation3 [shape = 's32[1]{0}', space=sflag, size = 0x4, scoped, tag = 'scoped memory for tpu_custom_call.1']
    #allocation4 [shape = 's32[1]{0}', space=sflag, size = 0x4, scoped, tag = 'scoped memory for tpu_custom_call.1']
    #allocation5 [shape = 'u8[196608]{0}', space=vmem, size = 0x30000, scoped, tag = 'input window, operand 1, single buffered']
    #allocation6 [shape = 's32[1]{0}', space=sflag, size = 0x4, scoped, tag = 'scoped memory for tpu_custom_call.1']
    #allocation7 [shape = 'u8[8192]{0}', space=vmem, size = 0x2000, scoped, tag = 'output window, operand 0, single buffered']
    %16 = vsyncpa [#allocation3], 0
    %17 = vsyncpa [#allocation6], 0
    %18 = vsyncpa [#allocation4], 0
    // Predicated region
    $region2: #{tpu_custom_call.1} parent=1 // pred_check
      _
    $region3: #{tpu_custom_call.1} parent=1 // pred_check_branch
      %20 = sbr.rel (0) target = $region5
    $region4: #{tpu_custom_call.1} parent=1 // pred_region
      %s22 = ssub.s32 256, 256
      %23 = vsyncadd [#allocation3], %s22
      %s24 = sshll.u32 [#allocation2], 4
      %s25 = int_to_ptr.vmem [resolvable:$true] %s24
      %30 = dma.hbm_to_vmem [thread:$0]  %s0, 256, %s25, [#allocation3], 128, 128, 8
    $region5: #{tpu_custom_call.1} parent=1 // pred_fallthru
      _
    // Predicated region
    $region6: #{tpu_custom_call.1} parent=1 // pred_check
      _
    $region7: #{tpu_custom_call.1} parent=1 // pred_check_branch
      %32 = sbr.rel (0) target = $region9
    $region8: #{tpu_custom_call.1} parent=1 // pred_region
      %s34 = ssub.s32 6144, 6144
      %35 = vsyncadd [#allocation6], %s34
      %s36 = sshll.u32 [#allocation5], 4
      %s37 = int_to_ptr.vmem [resolvable:$true] %s36
      %42 = dma.hbm_to_vmem [thread:$0]  %s1, 6144, %s37, [#allocation6], 384, 384, 24
    $region9: #{tpu_custom_call.1} parent=1 // pred_fallthru
      _
    // Predicated region
    $region10: #{tpu_custom_call.1} parent=1 // pred_check
      _
    $region11: #{tpu_custom_call.1} parent=1 // pred_check_branch
      %44 = sbr.rel (0) target = $region13
    $region12: #{tpu_custom_call.1} parent=1 // pred_region
      _
    $region13: #{tpu_custom_call.1} parent=1 // pred_fallthru
      _
    // Predicated region
    $region14: #{tpu_custom_call.1} parent=1 // pred_check
      _
    $region15: #{tpu_custom_call.1} parent=1 // pred_check_branch
      %46 = sbr.rel (0) target = $region17
    $region16: #{tpu_custom_call.1} parent=1 // pred_region
      _
    $region17: #{tpu_custom_call.1} parent=1 // pred_fallthru
      _
    // Predicated region
    $region18: #{tpu_custom_call.1} parent=1 // pred_check
      _
    $region19: #{tpu_custom_call.1} parent=1 // pred_check_branch
      %48 = sbr.rel (0) target = $region21
    $region20: #{tpu_custom_call.1} parent=1 // pred_region
      _
    $region21: #{tpu_custom_call.1} parent=1 // pred_fallthru
      _
    // Predicated region
    $region22: #{tpu_custom_call.1} parent=1 // pred_check
      _
    $region23: #{tpu_custom_call.1} parent=1 // pred_check_branch
      %50 = sbr.rel (0) target = $region25
    $region24: #{tpu_custom_call.1} parent=1 // pred_region
      _
    $region25: #{tpu_custom_call.1} parent=1 // pred_fallthru
      _
    // Predicated region
    $region26: #{tpu_custom_call.1} parent=1 // pred_check
      _
    $region27: #{tpu_custom_call.1} parent=1 // pred_check_branch
      %52 = sbr.rel (0) target = $region29
    $region28: #{tpu_custom_call.1} parent=1 // pred_region
      _
    $region29: #{tpu_custom_call.1} parent=1 // pred_fallthru
      _
    // Predicated region
    $region30: #{tpu_custom_call.1} parent=1 // pred_check
      _
    $region31: #{tpu_custom_call.1} parent=1 // pred_check_branch
      %54 = sbr.rel (0) target = $region33
    $region32: #{tpu_custom_call.1} parent=1 // pred_region
      _
    $region33: #{tpu_custom_call.1} parent=1 // pred_fallthru
      _
    // Predicated region
    $region34: #{tpu_custom_call.1} parent=1 // pred_check
      _
    $region35: #{tpu_custom_call.1} parent=1 // pred_check_branch
      %56 = sbr.rel (0) target = $region37
    $region36: #{tpu_custom_call.1} parent=1 // pred_region
      _
    $region37: #{tpu_custom_call.1} parent=1 // pred_fallthru
      _
    // Predicated region
    $region38: #{tpu_custom_call.1} parent=1 // pred_check
      _
    $region39: #{tpu_custom_call.1} parent=1 // pred_check_branch
      %58 = sbr.rel (0) target = $region41
    $region40: #{tpu_custom_call.1} parent=1 // pred_region
      _
    $region41: #{tpu_custom_call.1} parent=1 // pred_fallthru
      _
    // Predicated region
    $region42: #{tpu_custom_call.1} parent=1 // pred_check
      _
    $region43: #{tpu_custom_call.1} parent=1 // pred_check_branch
      %60 = sbr.rel (0) target = $region45
    $region44: #{tpu_custom_call.1} parent=1 // pred_region
      _
    $region45: #{tpu_custom_call.1} parent=1 // pred_fallthru
      _
    // Predicated region
    $region46: #{tpu_custom_call.1} parent=1 // pred_check
      _
    $region47: #{tpu_custom_call.1} parent=1 // pred_check_branch
      %62 = sbr.rel (0) target = $region49
    $region48: #{tpu_custom_call.1} parent=1 // pred_region
      %63 = dma.done [#allocation3], 256
    $region49: #{tpu_custom_call.1} parent=1 // pred_fallthru
      _
    // Predicated region
    $region50: #{tpu_custom_call.1} parent=1 // pred_check
      _
    $region51: #{tpu_custom_call.1} parent=1 // pred_check_branch
      %65 = sbr.rel (0) target = $region53
    $region52: #{tpu_custom_call.1} parent=1 // pred_region
      %66 = dma.done [#allocation6], 6144
    $region53: #{tpu_custom_call.1} parent=1 // pred_fallthru
      _
    %v67 = vld [vmem:[#allocation2] sm:$0xff]
    %v68 = vld [vmem:[#allocation2 + $0x8] sm:$0xff]
    %v69 = vld [vmem:[#allocation5] sm:$0xff]
    %v70 = vld [vmem:[#allocation5 + $0x8] sm:$0xff]
    %v71 = vld [vmem:[#allocation5 + $0x10] sm:$0xff]
    %v72 = vld [vmem:[#allocation5 + $0x18] sm:$0xff]
    %v73 = vld [vmem:[#allocation5 + $0x20] sm:$0xff]
    %v74 = vld [vmem:[#allocation5 + $0x28] sm:$0xff]
    %v75 = vld [vmem:[#allocation5 + $0x30] sm:$0xff]
    %v76 = vld [vmem:[#allocation5 + $0x38] sm:$0xff]
    %v77 = vld [vmem:[#allocation5 + $0x40] sm:$0xff]
    %v78 = vld [vmem:[#allocation5 + $0x48] sm:$0xff]
    %v79 = vld [vmem:[#allocation5 + $0x50] sm:$0xff]
    %v80 = vld [vmem:[#allocation5 + $0x58] sm:$0xff]
    %v81 = vld [vmem:[#allocation5 + $0x60] sm:$0xff]
    %v82 = vld [vmem:[#allocation5 + $0x68] sm:$0xff]
    %v83 = vld [vmem:[#allocation5 + $0x70] sm:$0xff]
    %v84 = vld [vmem:[#allocation5 + $0x78] sm:$0xff]
    %v85 = vld [vmem:[#allocation5 + $0x80] sm:$0xff]
    %v86 = vld [vmem:[#allocation5 + $0x88] sm:$0xff]
    %v87 = vld [vmem:[#allocation5 + $0x90] sm:$0xff]
    %v88 = vld [vmem:[#allocation5 + $0x98] sm:$0xff]
    %v89 = vld [vmem:[#allocation5 + $0xa0] sm:$0xff]
    %v90 = vld [vmem:[#allocation5 + $0xa8] sm:$0xff]
    %v91 = vld [vmem:[#allocation5 + $0xb0] sm:$0xff]
    %v92 = vld [vmem:[#allocation5 + $0xb8] sm:$0xff]
    %v93 = vld [vmem:[#allocation5 + $0xc0] sm:$0xff]
    %v94 = vld [vmem:[#allocation5 + $0xc8] sm:$0xff]
    %v95 = vld [vmem:[#allocation5 + $0xd0] sm:$0xff]
    %v96 = vld [vmem:[#allocation5 + $0xd8] sm:$0xff]
    %v97 = vld [vmem:[#allocation5 + $0xe0] sm:$0xff]
    %v98 = vld [vmem:[#allocation5 + $0xe8] sm:$0xff]
    %v99 = vld [vmem:[#allocation5 + $0xf0] sm:$0xff]
    %v100 = vld [vmem:[#allocation5 + $0xf8] sm:$0xff]
    %v101 = vld [vmem:[#allocation5 + $0x100] sm:$0xff]
    %v102 = vld [vmem:[#allocation5 + $0x108] sm:$0xff]
    %v103 = vld [vmem:[#allocation5 + $0x110] sm:$0xff]
    %v104 = vld [vmem:[#allocation5 + $0x118] sm:$0xff]
    %v105 = vld [vmem:[#allocation5 + $0x120] sm:$0xff]
    %v106 = vld [vmem:[#allocation5 + $0x128] sm:$0xff]
    %v107 = vld [vmem:[#allocation5 + $0x130] sm:$0xff]
    %v108 = vld [vmem:[#allocation5 + $0x138] sm:$0xff]
    %v109 = vld [vmem:[#allocation5 + $0x140] sm:$0xff]
    %v110 = vld [vmem:[#allocation5 + $0x148] sm:$0xff]
    %v111 = vld [vmem:[#allocation5 + $0x150] sm:$0xff]
    %v112 = vld [vmem:[#allocation5 + $0x158] sm:$0xff]
    %v113 = vld [vmem:[#allocation5 + $0x160] sm:$0xff]
    %v114 = vld [vmem:[#allocation5 + $0x168] sm:$0xff]
    %v115 = vld [vmem:[#allocation5 + $0x170] sm:$0xff]
    %v116 = vld [vmem:[#allocation5 + $0x178] sm:$0xff]
    %v117 = vld [vmem:[%s2] sm:$0x7]
    %v119 = vlaneseq
    %v120 = vshrl.u32 %v119, 7
    %v121 = vsub.s32 0, %v120
    %v122 = vrot.slane %v117, %v121
    %v123 = vlaneseq
    %v124 = vshrl.u32 %v123, 7
    %v125 = vsub.s32 1, %v124
    %v126 = vrot.slane %v117, %v125
    %v127 = vlaneseq
    %v128 = vshrl.u32 %v127, 7
    %v129 = vsub.s32 2, %v128
    %v130 = vrot.slane %v117, %v129
    %134 = vmatprep.subr.mxu0 %v115
    %135 = vmatpush1.msra.mxu0 %v114
    %136 = vmatprep.subr.mxu0 %v112
    %137 = vmatpush1.msra.mxu0 %v111
    %138 = vmatprep.subr.mxu0 %v109
    %139 = vmatpush1.msra.mxu0 %v108
    %140 = vmatprep.subr.mxu0 %v106
    %141 = vmatpush1.msra.mxu0 %v105
    %142 = vmatprep.subr.mxu0 %v103
    %143 = vmatpush1.msra.mxu0 %v102
    %144 = vmatprep.subr.mxu0 %v100
    %145 = vmatpush1.msra.mxu0 %v99
    %146 = vmatprep.subr.mxu0 %v97
    %147 = vmatpush1.msra.mxu0 %v96
    %148 = vmatprep.subr.mxu0 %v94
    %149 = vmatpush1.msra.mxu0 %v93
    %150 = vmatprep.subr.mxu0 %v91
    %151 = vmatpush1.msra.mxu0 %v90
    %152 = vmatprep.subr.mxu0 %v88
    %153 = vmatpush1.msra.mxu0 %v87
    %154 = vmatprep.subr.mxu0 %v85
    %155 = vmatpush1.msra.mxu0 %v84
    %156 = vmatprep.subr.mxu0 %v82
    %157 = vmatpush1.msra.mxu0 %v81
    %158 = vmatprep.subr.mxu0 %v79
    %159 = vmatpush1.msra.mxu0 %v78
    %160 = vmatprep.subr.mxu0 %v76
    %161 = vmatpush1.msra.mxu0 %v75
    %162 = vmatprep.subr.mxu0 %v73
    %163 = vmatpush1.msra.mxu0 %v72
    %164 = vmatprep.subr.mxu0 %v70
    %165 = vmatpush1.msra.mxu0 %v69
    %166 = vmatprep.subr.mxu0 0.0
    %167 = vmatpush2.msra.mxu0 0.0
    %168 = vmatprep.subr.mxu0 0.0
    %169 = vmatpush2.msra.mxu0 0.0
    %170 = vmatprep.subr.mxu0 0.0
    %171 = vmatpush2.msra.mxu0 0.0
    %172 = vmatprep.subr.mxu0 0.0
    %173 = vmatpush2.msra.mxu0 0.0
    %174 = vmatprep.subr.mxu0 0.0
    %175 = vmatpush2.msra.mxu0 0.0
    %176 = vmatprep.subr.mxu0 0.0
    %177 = vmatpush2.msra.mxu0 0.0
    %178 = vmatprep.subr.mxu0 0.0
    %179 = vmatpush2.msra.mxu0 0.0
    %180 = vmatprep.subr.mxu0 0.0
    %181 = vmatpush2.msra.mxu0 0.0
    %182 = vmatprep.subr.mxu0 0.0
    %183 = vmatpush2.msra.mxu0 0.0
    %184 = vmatprep.subr.mxu0 0.0
    %185 = vmatpush2.msra.mxu0 0.0
    %186 = vmatprep.subr.mxu0 0.0
    %187 = vmatpush2.msra.mxu0 0.0
    %188 = vmatprep.subr.mxu0 0.0
    %189 = vmatpush2.msra.mxu0 0.0
    %190 = vmatprep.subr.mxu0 0.0
    %191 = vmatpush2.msra.mxu0 0.0
    %192 = vmatprep.subr.mxu0 0.0
    %193 = vmatpush2.msra.mxu0 0.0
    %194 = vmatprep.subr.mxu0 0.0
    %195 = vmatpush2.msra.mxu0 0.0
    %196 = vmatprep.subr.mxu0 0.0
    %197 = vmatpush2.msra.mxu0 0.0
    %198 = vmatprep.mubr.f32.mxu0 0.0
    %199 = vmatmul.mubr.f32.gmra.mxu0 %v67
    %v200 = vpop.f32.mrf.mxu0
    %v201 = vadd.f32 %v122, %v200
    %v202 = vpop.f32.mrf.mxu0
    %v203 = vadd.f32 %v126, %v202
    %204 = vmatprep.mubr.f32.mxu0 0.0
    %205 = vmatmul.mubr.f32.gmra.mxu0 %v68
    %v206 = vpop.f32.mrf.mxu0
    %v207 = vadd.f32 %v122, %v206
    %v208 = vpop.f32.mrf.mxu0
    %v209 = vadd.f32 %v126, %v208
    %210 = vdwg.mxu0
    %211 = vmatprep.subr.mxu0 0.0
    %212 = vmatpush1.msra.mxu0 %v116
    %213 = vmatprep.subr.mxu0 0.0
    %214 = vmatpush1.msra.mxu0 %v113
    %215 = vmatprep.subr.mxu0 0.0
    %216 = vmatpush1.msra.mxu0 %v110
    %217 = vmatprep.subr.mxu0 0.0
    %218 = vmatpush1.msra.mxu0 %v107
    %219 = vmatprep.subr.mxu0 0.0
    %220 = vmatpush1.msra.mxu0 %v104
    %221 = vmatprep.subr.mxu0 0.0
    %222 = vmatpush1.msra.mxu0 %v101
    %223 = vmatprep.subr.mxu0 0.0
    %224 = vmatpush1.msra.mxu0 %v98
    %225 = vmatprep.subr.mxu0 0.0
    %226 = vmatpush1.msra.mxu0 %v95
    %227 = vmatprep.subr.mxu0 0.0
    %228 = vmatpush1.msra.mxu0 %v92
    %229 = vmatprep.subr.mxu0 0.0
    %230 = vmatpush1.msra.mxu0 %v89
    %231 = vmatprep.subr.mxu0 0.0
    %232 = vmatpush1.msra.mxu0 %v86
    %233 = vmatprep.subr.mxu0 0.0
    %234 = vmatpush1.msra.mxu0 %v83
    %235 = vmatprep.subr.mxu0 0.0
    %236 = vmatpush1.msra.mxu0 %v80
    %237 = vmatprep.subr.mxu0 0.0
    %238 = vmatpush1.msra.mxu0 %v77
    %239 = vmatprep.subr.mxu0 0.0
    %240 = vmatpush1.msra.mxu0 %v74
    %241 = vmatprep.subr.mxu0 0.0
    %242 = vmatpush1.msra.mxu0 %v71
    %243 = vmatprep.subr.mxu0 0.0
    %244 = vmatpush2.msra.mxu0 0.0
    %245 = vmatprep.subr.mxu0 0.0
    %246 = vmatpush2.msra.mxu0 0.0
    %247 = vmatprep.subr.mxu0 0.0
    %248 = vmatpush2.msra.mxu0 0.0
    %249 = vmatprep.subr.mxu0 0.0
    %250 = vmatpush2.msra.mxu0 0.0
    %251 = vmatprep.subr.mxu0 0.0
    %252 = vmatpush2.msra.mxu0 0.0
    %253 = vmatprep.subr.mxu0 0.0
    %254 = vmatpush2.msra.mxu0 0.0
    %255 = vmatprep.subr.mxu0 0.0
    %256 = vmatpush2.msra.mxu0 0.0
    %257 = vmatprep.subr.mxu0 0.0
    %258 = vmatpush2.msra.mxu0 0.0
    %259 = vmatprep.subr.mxu0 0.0
    %260 = vmatpush2.msra.mxu0 0.0
    %261 = vmatprep.subr.mxu0 0.0
    %262 = vmatpush2.msra.mxu0 0.0
    %263 = vmatprep.subr.mxu0 0.0
    %264 = vmatpush2.msra.mxu0 0.0
    %265 = vmatprep.subr.mxu0 0.0
    %266 = vmatpush2.msra.mxu0 0.0
    %267 = vmatprep.subr.mxu0 0.0
    %268 = vmatpush2.msra.mxu0 0.0
    %269 = vmatprep.subr.mxu0 0.0
    %270 = vmatpush2.msra.mxu0 0.0
    %271 = vmatprep.subr.mxu0 0.0
    %272 = vmatpush2.msra.mxu0 0.0
    %273 = vmatprep.subr.mxu0 0.0
    %274 = vmatpush2.msra.mxu0 0.0
    %275 = vmatprep.mubr.f32.mxu0 0.0
    %276 = vmatmul.mubr.f32.gmra.mxu0 %v67
    %v277 = vpop.f32.mrf.mxu0
    %v278 = vadd.f32 %v130, %v277
    %v279 = vpop.f32.mrf.mxu0
    %280 = vmatprep.mubr.f32.mxu0 0.0
    %281 = vmatmul.mubr.f32.gmra.mxu0 %v68
    %v282 = vpop.f32.mrf.mxu0
    %v283 = vadd.f32 %v130, %v282
    %v284 = vpop.f32.mrf.mxu0
    %285 = vdwg.mxu0
    %vm286 = vcmask 130048
    %v288 = vsel %vm286, %v201, 0
    %v291 = vsel %vm286, %v203, 0
    %293 = vmatprep.subr.mxu0 0.0
    %294 = vmatpush1.xpose.msra.mxu0 0.0
    %295 = vmatprep.subr.mxu0 0.0
    %296 = vmatpush1.xpose.msra.mxu0 0.0
    %297 = vmatprep.subr.mxu0 0.0
    %298 = vmatpush1.xpose.msra.mxu0 0.0
    %299 = vmatprep.subr.mxu0 0.0
    %300 = vmatpush1.xpose.msra.mxu0 0.0
    %301 = vmatprep.subr.mxu0 0.0
    %302 = vmatpush1.xpose.msra.mxu0 0.0
    %303 = vmatprep.subr.mxu0 0.0
    %304 = vmatpush1.xpose.msra.mxu0 0.0
    %305 = vmatprep.subr.mxu0 0.0
    %306 = vmatpush1.xpose.msra.mxu0 0.0
    %307 = vmatprep.subr.mxu0 0.0
    %308 = vmatpush1.xpose.msra.mxu0 0.0
    %309 = vmatprep.subr.mxu0 0.0
    %310 = vmatpush1.xpose.msra.mxu0 0.0
    %311 = vmatprep.subr.mxu0 0.0
    %312 = vmatpush1.xpose.msra.mxu0 0.0
    %313 = vmatprep.subr.mxu0 0.0
    %314 = vmatpush1.xpose.msra.mxu0 0.0
    %315 = vmatprep.subr.mxu0 0.0
    %316 = vmatpush1.xpose.msra.mxu0 0.0
    %317 = vmatprep.subr.mxu0 0.0
    %318 = vmatpush1.xpose.msra.mxu0 0.0
    %319 = vmatprep.subr.mxu0 0.0
    %320 = vmatpush1.xpose.msra.mxu0 0.0
    %321 = vmatprep.subr.mxu0 0.0
    %322 = vmatpush1.xpose.msra.mxu0 0.0
    %323 = vmatprep.subr.mxu0 0.0
    %324 = vmatpush1.xpose.msra.mxu0 %v291
    %325 = vmatprep.subr.mxu0 0.0
    %326 = vmatpush2.xpose.msra.mxu0 0.0
    %327 = vmatprep.subr.mxu0 0.0
    %328 = vmatpush2.xpose.msra.mxu0 0.0
    %329 = vmatprep.subr.mxu0 0.0
    %330 = vmatpush2.xpose.msra.mxu0 0.0
    %331 = vmatprep.subr.mxu0 0.0
    %332 = vmatpush2.xpose.msra.mxu0 0.0
    %333 = vmatprep.subr.mxu0 0.0
    %334 = vmatpush2.xpose.msra.mxu0 0.0
    %335 = vmatprep.subr.mxu0 0.0
    %336 = vmatpush2.xpose.msra.mxu0 0.0
    %337 = vmatprep.subr.mxu0 0.0
    %338 = vmatpush2.xpose.msra.mxu0 0.0
    %339 = vmatprep.subr.mxu0 0.0
    %340 = vmatpush2.xpose.msra.mxu0 0.0
    %341 = vmatprep.subr.mxu0 0.0
    %342 = vmatpush2.xpose.msra.mxu0 0.0
    %343 = vmatprep.subr.mxu0 0.0
    %344 = vmatpush2.xpose.msra.mxu0 0.0
    %345 = vmatprep.subr.mxu0 0.0
    %346 = vmatpush2.xpose.msra.mxu0 0.0
    %347 = vmatprep.subr.mxu0 0.0
    %348 = vmatpush2.xpose.msra.mxu0 0.0
    %349 = vmatprep.subr.mxu0 0.0
    %350 = vmatpush2.xpose.msra.mxu0 0.0
    %351 = vmatprep.subr.mxu0 0.0
    %352 = vmatpush2.xpose.msra.mxu0 0.0
    %353 = vmatprep.subr.mxu0 0.0
    %354 = vmatpush2.xpose.msra.mxu0 0.0
    %355 = vmatprep.subr.mxu0 0.0
    %356 = vmatpush2.xpose.msra.mxu0 0.0
    %357 = vmatprep.mubr.f32.mxu0 0.0
    %358 = vmatmul.mubr.f32.gmra.mxu0 %v288
    %v359 = vpop.f32.mrf.mxu0
    %v360 = vadd.f32 0.0, %v359
    %v361 = vpop.f32.mrf.mxu0
    %362 = vdwg.mxu0
    %v363 = vmul.f32 %v360, 0.25
    %vm364 = vcmask 64512
    %v365 = vsel %vm364, %v363, -inf
    %366 = vmax.xlane.f32.xlu0 %v365
    %v367 = vpop.xlane.xlu0 %366
    %v368 = vsub.f32 %v363, %v367
    %v369 = vmul.f32 %v368, 1.442695
    %v370 = vpow.pop %v369
    %v371 = vsel %vm364, %v370, 0.0
    %372 = vadd.xlane.f32.xlu0 %v371
    %v373 = vpop.xlane.xlu0 %372
    %v374 = vrcp.pop %v373
    %v375 = vmul.f32 %v370, %v374
    %v377 = vsel %vm364, %v375, 0
    %379 = vmatprep.subr.mxu0 0.0
    %380 = vmatpush1.msra.mxu0 0.0
    %381 = vmatprep.subr.mxu0 0.0
    %382 = vmatpush1.msra.mxu0 0.0
    %383 = vmatprep.subr.mxu0 0.0
    %384 = vmatpush1.msra.mxu0 0.0
    %385 = vmatprep.subr.mxu0 0.0
    %386 = vmatpush1.msra.mxu0 0.0
    %387 = vmatprep.subr.mxu0 0.0
    %388 = vmatpush1.msra.mxu0 0.0
    %389 = vmatprep.subr.mxu0 0.0
    %390 = vmatpush1.msra.mxu0 0.0
    %391 = vmatprep.subr.mxu0 0.0
    %392 = vmatpush1.msra.mxu0 0.0
    %393 = vmatprep.subr.mxu0 0.0
    %394 = vmatpush1.msra.mxu0 0.0
    %395 = vmatprep.subr.mxu0 0.0
    %396 = vmatpush1.msra.mxu0 0.0
    %397 = vmatprep.subr.mxu0 0.0
    %398 = vmatpush1.msra.mxu0 0.0
    %399 = vmatprep.subr.mxu0 0.0
    %400 = vmatpush1.msra.mxu0 0.0
    %401 = vmatprep.subr.mxu0 0.0
    %402 = vmatpush1.msra.mxu0 0.0
    %403 = vmatprep.subr.mxu0 0.0
    %404 = vmatpush1.msra.mxu0 0.0
    %405 = vmatprep.subr.mxu0 0.0
    %406 = vmatpush1.msra.mxu0 0.0
    %407 = vmatprep.subr.mxu0 0.0
    %408 = vmatpush1.msra.mxu0 0.0
    %409 = vmatprep.subr.mxu0 0.0
    %410 = vmatpush1.msra.mxu0 %v278
    %411 = vmatprep.subr.mxu0 0.0
    %412 = vmatpush2.msra.mxu0 0.0
    %413 = vmatprep.subr.mxu0 0.0
    %414 = vmatpush2.msra.mxu0 0.0
    %415 = vmatprep.subr.mxu0 0.0
    %416 = vmatpush2.msra.mxu0 0.0
    %417 = vmatprep.subr.mxu0 0.0
    %418 = vmatpush2.msra.mxu0 0.0
    %419 = vmatprep.subr.mxu0 0.0
    %420 = vmatpush2.msra.mxu0 0.0
    %421 = vmatprep.subr.mxu0 0.0
    %422 = vmatpush2.msra.mxu0 0.0
    %423 = vmatprep.subr.mxu0 0.0
    %424 = vmatpush2.msra.mxu0 0.0
    %425 = vmatprep.subr.mxu0 0.0
    %426 = vmatpush2.msra.mxu0 0.0
    %427 = vmatprep.subr.mxu0 0.0
    %428 = vmatpush2.msra.mxu0 0.0
    %429 = vmatprep.subr.mxu0 0.0
    %430 = vmatpush2.msra.mxu0 0.0
    %431 = vmatprep.subr.mxu0 0.0
    %432 = vmatpush2.msra.mxu0 0.0
    %433 = vmatprep.subr.mxu0 0.0
    %434 = vmatpush2.msra.mxu0 0.0
    %435 = vmatprep.subr.mxu0 0.0
    %436 = vmatpush2.msra.mxu0 0.0
    %437 = vmatprep.subr.mxu0 0.0
    %438 = vmatpush2.msra.mxu0 0.0
    %439 = vmatprep.subr.mxu0 0.0
    %440 = vmatpush2.msra.mxu0 0.0
    %441 = vmatprep.subr.mxu0 0.0
    %442 = vmatpush2.msra.mxu0 0.0
    %443 = vmatprep.mubr.f32.mxu0 0.0
    %444 = vmatmul.mubr.f32.gmra.mxu0 %v377
    %v445 = vpop.f32.mrf.mxu0
    %v446 = vadd.f32 0.0, %v445
    %v447 = vpop.f32.mrf.mxu0
    %448 = vdwg.mxu0
    %449 = vrot.lane.b32.xlu0 %v201, 112
    %v450 = vpop.permute.xlu0 %449
    %451 = vrot.lane.b32.xlu0 %v203, 112
    %v452 = vpop.permute.xlu0 %451
    %v453 = vsel %vm286, %v450, 0
    %v455 = vsel %vm286, %v452, 0
    %457 = vmatprep.subr.mxu0 0.0
    %458 = vmatpush1.xpose.msra.mxu0 0.0
    %459 = vmatprep.subr.mxu0 0.0
    %460 = vmatpush1.xpose.msra.mxu0 0.0
    %461 = vmatprep.subr.mxu0 0.0
    %462 = vmatpush1.xpose.msra.mxu0 0.0
    %463 = vmatprep.subr.mxu0 0.0
    %464 = vmatpush1.xpose.msra.mxu0 0.0
    %465 = vmatprep.subr.mxu0 0.0
    %466 = vmatpush1.xpose.msra.mxu0 0.0
    %467 = vmatprep.subr.mxu0 0.0
    %468 = vmatpush1.xpose.msra.mxu0 0.0
    %469 = vmatprep.subr.mxu0 0.0
    %470 = vmatpush1.xpose.msra.mxu0 0.0
    %471 = vmatprep.subr.mxu0 0.0
    %472 = vmatpush1.xpose.msra.mxu0 0.0
    %473 = vmatprep.subr.mxu0 0.0
    %474 = vmatpush1.xpose.msra.mxu0 0.0
    %475 = vmatprep.subr.mxu0 0.0
    %476 = vmatpush1.xpose.msra.mxu0 0.0
    %477 = vmatprep.subr.mxu0 0.0
    %478 = vmatpush1.xpose.msra.mxu0 0.0
    %479 = vmatprep.subr.mxu0 0.0
    %480 = vmatpush1.xpose.msra.mxu0 0.0
    %481 = vmatprep.subr.mxu0 0.0
    %482 = vmatpush1.xpose.msra.mxu0 0.0
    %483 = vmatprep.subr.mxu0 0.0
    %484 = vmatpush1.xpose.msra.mxu0 0.0
    %485 = vmatprep.subr.mxu0 0.0
    %486 = vmatpush1.xpose.msra.mxu0 0.0
    %487 = vmatprep.subr.mxu0 0.0
    %488 = vmatpush1.xpose.msra.mxu0 %v455
    %489 = vmatprep.subr.mxu0 0.0
    %490 = vmatpush2.xpose.msra.mxu0 0.0
    %491 = vmatprep.subr.mxu0 0.0
    %492 = vmatpush2.xpose.msra.mxu0 0.0
    %493 = vmatprep.subr.mxu0 0.0
    %494 = vmatpush2.xpose.msra.mxu0 0.0
    %495 = vmatprep.subr.mxu0 0.0
    %496 = vmatpush2.xpose.msra.mxu0 0.0
    %497 = vmatprep.subr.mxu0 0.0
    %498 = vmatpush2.xpose.msra.mxu0 0.0
    %499 = vmatprep.subr.mxu0 0.0
    %500 = vmatpush2.xpose.msra.mxu0 0.0
    %501 = vmatprep.subr.mxu0 0.0
    %502 = vmatpush2.xpose.msra.mxu0 0.0
    %503 = vmatprep.subr.mxu0 0.0
    %504 = vmatpush2.xpose.msra.mxu0 0.0
    %505 = vmatprep.subr.mxu0 0.0
    %506 = vmatpush2.xpose.msra.mxu0 0.0
    %507 = vmatprep.subr.mxu0 0.0
    %508 = vmatpush2.xpose.msra.mxu0 0.0
    %509 = vmatprep.subr.mxu0 0.0
    %510 = vmatpush2.xpose.msra.mxu0 0.0
    %511 = vmatprep.subr.mxu0 0.0
    %512 = vmatpush2.xpose.msra.mxu0 0.0
    %513 = vmatprep.subr.mxu0 0.0
    %514 = vmatpush2.xpose.msra.mxu0 0.0
    %515 = vmatprep.subr.mxu0 0.0
    %516 = vmatpush2.xpose.msra.mxu0 0.0
    %517 = vmatprep.subr.mxu0 0.0
    %518 = vmatpush2.xpose.msra.mxu0 0.0
    %519 = vmatprep.subr.mxu0 0.0
    %520 = vmatpush2.xpose.msra.mxu0 0.0
    %521 = vmatprep.mubr.f32.mxu0 0.0
    %522 = vmatmul.mubr.f32.gmra.mxu0 %v453
    %v523 = vpop.f32.mrf.mxu0
    %v524 = vadd.f32 0.0, %v523
    %v525 = vpop.f32.mrf.mxu0
    %526 = vdwg.mxu0
    %v527 = vmul.f32 %v524, 0.25
    %v528 = vsel %vm364, %v527, -inf
    %529 = vmax.xlane.f32.xlu0 %v528
    %v530 = vpop.xlane.xlu0 %529
    %v531 = vsub.f32 %v527, %v530
    %v532 = vmul.f32 %v531, 1.442695
    %v533 = vpow.pop %v532
    %v534 = vsel %vm364, %v533, 0.0
    %535 = vadd.xlane.f32.xlu0 %v534
    %v536 = vpop.xlane.xlu0 %535
    %v537 = vrcp.pop %v536
    %v538 = vmul.f32 %v533, %v537
    %540 = vrot.lane.b32.xlu0 %v278, 112
    %v541 = vpop.permute.xlu0 %540
    %v544 = vsel %vm364, %v538, 0
    %546 = vmatprep.subr.mxu0 0.0
    %547 = vmatpush1.msra.mxu0 0.0
    %548 = vmatprep.subr.mxu0 0.0
    %549 = vmatpush1.msra.mxu0 0.0
    %550 = vmatprep.subr.mxu0 0.0
    %551 = vmatpush1.msra.mxu0 0.0
    %552 = vmatprep.subr.mxu0 0.0
    %553 = vmatpush1.msra.mxu0 0.0
    %554 = vmatprep.subr.mxu0 0.0
    %555 = vmatpush1.msra.mxu0 0.0
    %556 = vmatprep.subr.mxu0 0.0
    %557 = vmatpush1.msra.mxu0 0.0
    %558 = vmatprep.subr.mxu0 0.0
    %559 = vmatpush1.msra.mxu0 0.0
    %560 = vmatprep.subr.mxu0 0.0
    %561 = vmatpush1.msra.mxu0 0.0
    %562 = vmatprep.subr.mxu0 0.0
    %563 = vmatpush1.msra.mxu0 0.0
    %564 = vmatprep.subr.mxu0 0.0
    %565 = vmatpush1.msra.mxu0 0.0
    %566 = vmatprep.subr.mxu0 0.0
    %567 = vmatpush1.msra.mxu0 0.0
    %568 = vmatprep.subr.mxu0 0.0
    %569 = vmatpush1.msra.mxu0 0.0
    %570 = vmatprep.subr.mxu0 0.0
    %571 = vmatpush1.msra.mxu0 0.0
    %572 = vmatprep.subr.mxu0 0.0
    %573 = vmatpush1.msra.mxu0 0.0
    %574 = vmatprep.subr.mxu0 0.0
    %575 = vmatpush1.msra.mxu0 0.0
    %576 = vmatprep.subr.mxu0 0.0
    %577 = vmatpush1.msra.mxu0 %v541
    %578 = vmatprep.subr.mxu0 0.0
    %579 = vmatpush2.msra.mxu0 0.0
    %580 = vmatprep.subr.mxu0 0.0
    %581 = vmatpush2.msra.mxu0 0.0
    %582 = vmatprep.subr.mxu0 0.0
    %583 = vmatpush2.msra.mxu0 0.0
    %584 = vmatprep.subr.mxu0 0.0
    %585 = vmatpush2.msra.mxu0 0.0
    %586 = vmatprep.subr.mxu0 0.0
    %587 = vmatpush2.msra.mxu0 0.0
    %588 = vmatprep.subr.mxu0 0.0
    %589 = vmatpush2.msra.mxu0 0.0
    %590 = vmatprep.subr.mxu0 0.0
    %591 = vmatpush2.msra.mxu0 0.0
    %592 = vmatprep.subr.mxu0 0.0
    %593 = vmatpush2.msra.mxu0 0.0
    %594 = vmatprep.subr.mxu0 0.0
    %595 = vmatpush2.msra.mxu0 0.0
    %596 = vmatprep.subr.mxu0 0.0
    %597 = vmatpush2.msra.mxu0 0.0
    %598 = vmatprep.subr.mxu0 0.0
    %599 = vmatpush2.msra.mxu0 0.0
    %600 = vmatprep.subr.mxu0 0.0
    %601 = vmatpush2.msra.mxu0 0.0
    %602 = vmatprep.subr.mxu0 0.0
    %603 = vmatpush2.msra.mxu0 0.0
    %604 = vmatprep.subr.mxu0 0.0
    %605 = vmatpush2.msra.mxu0 0.0
    %606 = vmatprep.subr.mxu0 0.0
    %607 = vmatpush2.msra.mxu0 0.0
    %608 = vmatprep.subr.mxu0 0.0
    %609 = vmatpush2.msra.mxu0 0.0
    %610 = vmatprep.mubr.f32.mxu0 0.0
    %611 = vmatmul.mubr.f32.gmra.mxu0 %v544
    %v612 = vpop.f32.mrf.mxu0
    %v613 = vadd.f32 0.0, %v612
    %v614 = vpop.f32.mrf.mxu0
    %615 = vdwg.mxu0
    %616 = vrot.lane.b32.xlu0 %v201, 96
    %v617 = vpop.permute.xlu0 %616
    %618 = vrot.lane.b32.xlu0 %v203, 96
    %v619 = vpop.permute.xlu0 %618
    %v620 = vsel %vm286, %v617, 0
    %v622 = vsel %vm286, %v619, 0
    %624 = vmatprep.subr.mxu0 0.0
    %625 = vmatpush1.xpose.msra.mxu0 0.0
    %626 = vmatprep.subr.mxu0 0.0
    %627 = vmatpush1.xpose.msra.mxu0 0.0
    %628 = vmatprep.subr.mxu0 0.0
    %629 = vmatpush1.xpose.msra.mxu0 0.0
    %630 = vmatprep.subr.mxu0 0.0
    %631 = vmatpush1.xpose.msra.mxu0 0.0
    %632 = vmatprep.subr.mxu0 0.0
    %633 = vmatpush1.xpose.msra.mxu0 0.0
    %634 = vmatprep.subr.mxu0 0.0
    %635 = vmatpush1.xpose.msra.mxu0 0.0
    %636 = vmatprep.subr.mxu0 0.0
    %637 = vmatpush1.xpose.msra.mxu0 0.0
    %638 = vmatprep.subr.mxu0 0.0
    %639 = vmatpush1.xpose.msra.mxu0 0.0
    %640 = vmatprep.subr.mxu0 0.0
    %641 = vmatpush1.xpose.msra.mxu0 0.0
    %642 = vmatprep.subr.mxu0 0.0
    %643 = vmatpush1.xpose.msra.mxu0 0.0
    %644 = vmatprep.subr.mxu0 0.0
    %645 = vmatpush1.xpose.msra.mxu0 0.0
    %646 = vmatprep.subr.mxu0 0.0
    %647 = vmatpush1.xpose.msra.mxu0 0.0
    %648 = vmatprep.subr.mxu0 0.0
    %649 = vmatpush1.xpose.msra.mxu0 0.0
    %650 = vmatprep.subr.mxu0 0.0
    %651 = vmatpush1.xpose.msra.mxu0 0.0
    %652 = vmatprep.subr.mxu0 0.0
    %653 = vmatpush1.xpose.msra.mxu0 0.0
    %654 = vmatprep.subr.mxu0 0.0
    %655 = vmatpush1.xpose.msra.mxu0 %v622
    %656 = vmatprep.subr.mxu0 0.0
    %657 = vmatpush2.xpose.msra.mxu0 0.0
    %658 = vmatprep.subr.mxu0 0.0
    %659 = vmatpush2.xpose.msra.mxu0 0.0
    %660 = vmatprep.subr.mxu0 0.0
    %661 = vmatpush2.xpose.msra.mxu0 0.0
    %662 = vmatprep.subr.mxu0 0.0
    %663 = vmatpush2.xpose.msra.mxu0 0.0
    %664 = vmatprep.subr.mxu0 0.0
    %665 = vmatpush2.xpose.msra.mxu0 0.0
    %666 = vmatprep.subr.mxu0 0.0
    %667 = vmatpush2.xpose.msra.mxu0 0.0
    %668 = vmatprep.subr.mxu0 0.0
    %669 = vmatpush2.xpose.msra.mxu0 0.0
    %670 = vmatprep.subr.mxu0 0.0
    %671 = vmatpush2.xpose.msra.mxu0 0.0
    %672 = vmatprep.subr.mxu0 0.0
    %673 = vmatpush2.xpose.msra.mxu0 0.0
    %674 = vmatprep.subr.mxu0 0.0
    %675 = vmatpush2.xpose.msra.mxu0 0.0
    %676 = vmatprep.subr.mxu0 0.0
    %677 = vmatpush2.xpose.msra.mxu0 0.0
    %678 = vmatprep.subr.mxu0 0.0
    %679 = vmatpush2.xpose.msra.mxu0 0.0
    %680 = vmatprep.subr.mxu0 0.0
    %681 = vmatpush2.xpose.msra.mxu0 0.0
    %682 = vmatprep.subr.mxu0 0.0
    %683 = vmatpush2.xpose.msra.mxu0 0.0
    %684 = vmatprep.subr.mxu0 0.0
    %685 = vmatpush2.xpose.msra.mxu0 0.0
    %686 = vmatprep.subr.mxu0 0.0
    %687 = vmatpush2.xpose.msra.mxu0 0.0
    %688 = vmatprep.mubr.f32.mxu0 0.0
    %689 = vmatmul.mubr.f32.gmra.mxu0 %v620
    %v690 = vpop.f32.mrf.mxu0
    %v691 = vadd.f32 0.0, %v690
    %v692 = vpop.f32.mrf.mxu0
    %693 = vdwg.mxu0
    %v694 = vmul.f32 %v691, 0.25
    %v695 = vsel %vm364, %v694, -inf
    %696 = vmax.xlane.f32.xlu0 %v695
    %v697 = vpop.xlane.xlu0 %696
    %v698 = vsub.f32 %v694, %v697
    %v699 = vmul.f32 %v698, 1.442695
    %v700 = vpow.pop %v699
    %v701 = vsel %vm364, %v700, 0.0
    %702 = vadd.xlane.f32.xlu0 %v701
    %v703 = vpop.xlane.xlu0 %702
    %v704 = vrcp.pop %v703
    %v705 = vmul.f32 %v700, %v704
    %706 = vrot.lane.b32.xlu0 %v278, 96
    %v707 = vpop.permute.xlu0 %706
    %v710 = vsel %vm364, %v705, 0
    %712 = vmatprep.subr.mxu0 0.0
    %713 = vmatpush1.msra.mxu0 0.0
    %714 = vmatprep.subr.mxu0 0.0
    %715 = vmatpush1.msra.mxu0 0.0
    %716 = vmatprep.subr.mxu0 0.0
    %717 = vmatpush1.msra.mxu0 0.0
    %718 = vmatprep.subr.mxu0 0.0
    %719 = vmatpush1.msra.mxu0 0.0
    %720 = vmatprep.subr.mxu0 0.0
    %721 = vmatpush1.msra.mxu0 0.0
    %722 = vmatprep.subr.mxu0 0.0
    %723 = vmatpush1.msra.mxu0 0.0
    %724 = vmatprep.subr.mxu0 0.0
    %725 = vmatpush1.msra.mxu0 0.0
    %726 = vmatprep.subr.mxu0 0.0
    %727 = vmatpush1.msra.mxu0 0.0
    %728 = vmatprep.subr.mxu0 0.0
    %729 = vmatpush1.msra.mxu0 0.0
    %730 = vmatprep.subr.mxu0 0.0
    %731 = vmatpush1.msra.mxu0 0.0
    %732 = vmatprep.subr.mxu0 0.0
    %733 = vmatpush1.msra.mxu0 0.0
    %734 = vmatprep.subr.mxu0 0.0
    %735 = vmatpush1.msra.mxu0 0.0
    %736 = vmatprep.subr.mxu0 0.0
    %737 = vmatpush1.msra.mxu0 0.0
    %738 = vmatprep.subr.mxu0 0.0
    %739 = vmatpush1.msra.mxu0 0.0
    %740 = vmatprep.subr.mxu0 0.0
    %741 = vmatpush1.msra.mxu0 0.0
    %742 = vmatprep.subr.mxu0 0.0
    %743 = vmatpush1.msra.mxu0 %v707
    %744 = vmatprep.subr.mxu0 0.0
    %745 = vmatpush2.msra.mxu0 0.0
    %746 = vmatprep.subr.mxu0 0.0
    %747 = vmatpush2.msra.mxu0 0.0
    %748 = vmatprep.subr.mxu0 0.0
    %749 = vmatpush2.msra.mxu0 0.0
    %750 = vmatprep.subr.mxu0 0.0
    %751 = vmatpush2.msra.mxu0 0.0
    %752 = vmatprep.subr.mxu0 0.0
    %753 = vmatpush2.msra.mxu0 0.0
    %754 = vmatprep.subr.mxu0 0.0
    %755 = vmatpush2.msra.mxu0 0.0
    %756 = vmatprep.subr.mxu0 0.0
    %757 = vmatpush2.msra.mxu0 0.0
    %758 = vmatprep.subr.mxu0 0.0
    %759 = vmatpush2.msra.mxu0 0.0
    %760 = vmatprep.subr.mxu0 0.0
    %761 = vmatpush2.msra.mxu0 0.0
    %762 = vmatprep.subr.mxu0 0.0
    %763 = vmatpush2.msra.mxu0 0.0
    %764 = vmatprep.subr.mxu0 0.0
    %765 = vmatpush2.msra.mxu0 0.0
    %766 = vmatprep.subr.mxu0 0.0
    %767 = vmatpush2.msra.mxu0 0.0
    %768 = vmatprep.subr.mxu0 0.0
    %769 = vmatpush2.msra.mxu0 0.0
    %770 = vmatprep.subr.mxu0 0.0
    %771 = vmatpush2.msra.mxu0 0.0
    %772 = vmatprep.subr.mxu0 0.0
    %773 = vmatpush2.msra.mxu0 0.0
    %774 = vmatprep.subr.mxu0 0.0
    %775 = vmatpush2.msra.mxu0 0.0
    %776 = vmatprep.mubr.f32.mxu0 0.0
    %777 = vmatmul.mubr.f32.gmra.mxu0 %v710
    %v778 = vpop.f32.mrf.mxu0
    %v779 = vadd.f32 0.0, %v778
    %v780 = vpop.f32.mrf.mxu0
    %781 = vdwg.mxu0
    %782 = vrot.lane.b32.xlu0 %v201, 80
    %v783 = vpop.permute.xlu0 %782
    %784 = vrot.lane.b32.xlu0 %v203, 80
    %v785 = vpop.permute.xlu0 %784
    %v786 = vsel %vm286, %v783, 0
    %v788 = vsel %vm286, %v785, 0
    %790 = vmatprep.subr.mxu0 0.0
    %791 = vmatpush1.xpose.msra.mxu0 0.0
    %792 = vmatprep.subr.mxu0 0.0
    %793 = vmatpush1.xpose.msra.mxu0 0.0
    %794 = vmatprep.subr.mxu0 0.0
    %795 = vmatpush1.xpose.msra.mxu0 0.0
    %796 = vmatprep.subr.mxu0 0.0
    %797 = vmatpush1.xpose.msra.mxu0 0.0
    %798 = vmatprep.subr.mxu0 0.0
    %799 = vmatpush1.xpose.msra.mxu0 0.0
    %800 = vmatprep.subr.mxu0 0.0
    %801 = vmatpush1.xpose.msra.mxu0 0.0
    %802 = vmatprep.subr.mxu0 0.0
    %803 = vmatpush1.xpose.msra.mxu0 0.0
    %804 = vmatprep.subr.mxu0 0.0
    %805 = vmatpush1.xpose.msra.mxu0 0.0
    %806 = vmatprep.subr.mxu0 0.0
    %807 = vmatpush1.xpose.msra.mxu0 0.0
    %808 = vmatprep.subr.mxu0 0.0
    %809 = vmatpush1.xpose.msra.mxu0 0.0
    %810 = vmatprep.subr.mxu0 0.0
    %811 = vmatpush1.xpose.msra.mxu0 0.0
    %812 = vmatprep.subr.mxu0 0.0
    %813 = vmatpush1.xpose.msra.mxu0 0.0
    %814 = vmatprep.subr.mxu0 0.0
    %815 = vmatpush1.xpose.msra.mxu0 0.0
    %816 = vmatprep.subr.mxu0 0.0
    %817 = vmatpush1.xpose.msra.mxu0 0.0
    %818 = vmatprep.subr.mxu0 0.0
    %819 = vmatpush1.xpose.msra.mxu0 0.0
    %820 = vmatprep.subr.mxu0 0.0
    %821 = vmatpush1.xpose.msra.mxu0 %v788
    %822 = vmatprep.subr.mxu0 0.0
    %823 = vmatpush2.xpose.msra.mxu0 0.0
    %824 = vmatprep.subr.mxu0 0.0
    %825 = vmatpush2.xpose.msra.mxu0 0.0
    %826 = vmatprep.subr.mxu0 0.0
    %827 = vmatpush2.xpose.msra.mxu0 0.0
    %828 = vmatprep.subr.mxu0 0.0
    %829 = vmatpush2.xpose.msra.mxu0 0.0
    %830 = vmatprep.subr.mxu0 0.0
    %831 = vmatpush2.xpose.msra.mxu0 0.0
    %832 = vmatprep.subr.mxu0 0.0
    %833 = vmatpush2.xpose.msra.mxu0 0.0
    %834 = vmatprep.subr.mxu0 0.0
    %835 = vmatpush2.xpose.msra.mxu0 0.0
    %836 = vmatprep.subr.mxu0 0.0
    %837 = vmatpush2.xpose.msra.mxu0 0.0
    %838 = vmatprep.subr.mxu0 0.0
    %839 = vmatpush2.xpose.msra.mxu0 0.0
    %840 = vmatprep.subr.mxu0 0.0
    %841 = vmatpush2.xpose.msra.mxu0 0.0
    %842 = vmatprep.subr.mxu0 0.0
    %843 = vmatpush2.xpose.msra.mxu0 0.0
    %844 = vmatprep.subr.mxu0 0.0
    %845 = vmatpush2.xpose.msra.mxu0 0.0
    %846 = vmatprep.subr.mxu0 0.0
    %847 = vmatpush2.xpose.msra.mxu0 0.0
    %848 = vmatprep.subr.mxu0 0.0
    %849 = vmatpush2.xpose.msra.mxu0 0.0
    %850 = vmatprep.subr.mxu0 0.0
    %851 = vmatpush2.xpose.msra.mxu0 0.0
    %852 = vmatprep.subr.mxu0 0.0
    %853 = vmatpush2.xpose.msra.mxu0 0.0
    %854 = vmatprep.mubr.f32.mxu0 0.0
    %855 = vmatmul.mubr.f32.gmra.mxu0 %v786
    %v856 = vpop.f32.mrf.mxu0
    %v857 = vadd.f32 0.0, %v856
    %v858 = vpop.f32.mrf.mxu0
    %859 = vdwg.mxu0
    %v860 = vmul.f32 %v857, 0.25
    %v861 = vsel %vm364, %v860, -inf
    %862 = vmax.xlane.f32.xlu0 %v861
    %v863 = vpop.xlane.xlu0 %862
    %v864 = vsub.f32 %v860, %v863
    %v865 = vmul.f32 %v864, 1.442695
    %v866 = vpow.pop %v865
    %v867 = vsel %vm364, %v866, 0.0
    %868 = vadd.xlane.f32.xlu0 %v867
    %v869 = vpop.xlane.xlu0 %868
    %v870 = vrcp.pop %v869
    %v871 = vmul.f32 %v866, %v870
    %872 = vrot.lane.b32.xlu0 %v278, 80
    %v873 = vpop.permute.xlu0 %872
    %v876 = vsel %vm364, %v871, 0
    %878 = vmatprep.subr.mxu0 0.0
    %879 = vmatpush1.msra.mxu0 0.0
    %880 = vmatprep.subr.mxu0 0.0
    %881 = vmatpush1.msra.mxu0 0.0
    %882 = vmatprep.subr.mxu0 0.0
    %883 = vmatpush1.msra.mxu0 0.0
    %884 = vmatprep.subr.mxu0 0.0
    %885 = vmatpush1.msra.mxu0 0.0
    %886 = vmatprep.subr.mxu0 0.0
    %887 = vmatpush1.msra.mxu0 0.0
    %888 = vmatprep.subr.mxu0 0.0
    %889 = vmatpush1.msra.mxu0 0.0
    %890 = vmatprep.subr.mxu0 0.0
    %891 = vmatpush1.msra.mxu0 0.0
    %892 = vmatprep.subr.mxu0 0.0
    %893 = vmatpush1.msra.mxu0 0.0
    %894 = vmatprep.subr.mxu0 0.0
    %895 = vmatpush1.msra.mxu0 0.0
    %896 = vmatprep.subr.mxu0 0.0
    %897 = vmatpush1.msra.mxu0 0.0
    %898 = vmatprep.subr.mxu0 0.0
    %899 = vmatpush1.msra.mxu0 0.0
    %900 = vmatprep.subr.mxu0 0.0
    %901 = vmatpush1.msra.mxu0 0.0
    %902 = vmatprep.subr.mxu0 0.0
    %903 = vmatpush1.msra.mxu0 0.0
    %904 = vmatprep.subr.mxu0 0.0
    %905 = vmatpush1.msra.mxu0 0.0
    %906 = vmatprep.subr.mxu0 0.0
    %907 = vmatpush1.msra.mxu0 0.0
    %908 = vmatprep.subr.mxu0 0.0
    %909 = vmatpush1.msra.mxu0 %v873
    %910 = vmatprep.subr.mxu0 0.0
    %911 = vmatpush2.msra.mxu0 0.0
    %912 = vmatprep.subr.mxu0 0.0
    %913 = vmatpush2.msra.mxu0 0.0
    %914 = vmatprep.subr.mxu0 0.0
    %915 = vmatpush2.msra.mxu0 0.0
    %916 = vmatprep.subr.mxu0 0.0
    %917 = vmatpush2.msra.mxu0 0.0
    %918 = vmatprep.subr.mxu0 0.0
    %919 = vmatpush2.msra.mxu0 0.0
    %920 = vmatprep.subr.mxu0 0.0
    %921 = vmatpush2.msra.mxu0 0.0
    %922 = vmatprep.subr.mxu0 0.0
    %923 = vmatpush2.msra.mxu0 0.0
    %924 = vmatprep.subr.mxu0 0.0
    %925 = vmatpush2.msra.mxu0 0.0
    %926 = vmatprep.subr.mxu0 0.0
    %927 = vmatpush2.msra.mxu0 0.0
    %928 = vmatprep.subr.mxu0 0.0
    %929 = vmatpush2.msra.mxu0 0.0
    %930 = vmatprep.subr.mxu0 0.0
    %931 = vmatpush2.msra.mxu0 0.0
    %932 = vmatprep.subr.mxu0 0.0
    %933 = vmatpush2.msra.mxu0 0.0
    %934 = vmatprep.subr.mxu0 0.0
    %935 = vmatpush2.msra.mxu0 0.0
    %936 = vmatprep.subr.mxu0 0.0
    %937 = vmatpush2.msra.mxu0 0.0
    %938 = vmatprep.subr.mxu0 0.0
    %939 = vmatpush2.msra.mxu0 0.0
    %940 = vmatprep.subr.mxu0 0.0
    %941 = vmatpush2.msra.mxu0 0.0
    %942 = vmatprep.mubr.f32.mxu0 0.0
    %943 = vmatmul.mubr.f32.gmra.mxu0 %v876
    %v944 = vpop.f32.mrf.mxu0
    %v945 = vadd.f32 0.0, %v944
    %v946 = vpop.f32.mrf.mxu0
    %947 = vdwg.mxu0
    %948 = vrot.lane.b32.xlu0 %v201, 64
    %v949 = vpop.permute.xlu0 %948
    %950 = vrot.lane.b32.xlu0 %v203, 64
    %v951 = vpop.permute.xlu0 %950
    %v952 = vsel %vm286, %v949, 0
    %v954 = vsel %vm286, %v951, 0
    %956 = vmatprep.subr.mxu0 0.0
    %957 = vmatpush1.xpose.msra.mxu0 0.0
    %958 = vmatprep.subr.mxu0 0.0
    %959 = vmatpush1.xpose.msra.mxu0 0.0
    %960 = vmatprep.subr.mxu0 0.0
    %961 = vmatpush1.xpose.msra.mxu0 0.0
    %962 = vmatprep.subr.mxu0 0.0
    %963 = vmatpush1.xpose.msra.mxu0 0.0
    %964 = vmatprep.subr.mxu0 0.0
    %965 = vmatpush1.xpose.msra.mxu0 0.0
    %966 = vmatprep.subr.mxu0 0.0
    %967 = vmatpush1.xpose.msra.mxu0 0.0
    %968 = vmatprep.subr.mxu0 0.0
    %969 = vmatpush1.xpose.msra.mxu0 0.0
    %970 = vmatprep.subr.mxu0 0.0
    %971 = vmatpush1.xpose.msra.mxu0 0.0
    %972 = vmatprep.subr.mxu0 0.0
    %973 = vmatpush1.xpose.msra.mxu0 0.0
    %974 = vmatprep.subr.mxu0 0.0
    %975 = vmatpush1.xpose.msra.mxu0 0.0
    %976 = vmatprep.subr.mxu0 0.0
    %977 = vmatpush1.xpose.msra.mxu0 0.0
    %978 = vmatprep.subr.mxu0 0.0
    %979 = vmatpush1.xpose.msra.mxu0 0.0
    %980 = vmatprep.subr.mxu0 0.0
    %981 = vmatpush1.xpose.msra.mxu0 0.0
    %982 = vmatprep.subr.mxu0 0.0
    %983 = vmatpush1.xpose.msra.mxu0 0.0
    %984 = vmatprep.subr.mxu0 0.0
    %985 = vmatpush1.xpose.msra.mxu0 0.0
    %986 = vmatprep.subr.mxu0 0.0
    %987 = vmatpush1.xpose.msra.mxu0 %v954
    %988 = vmatprep.subr.mxu0 0.0
    %989 = vmatpush2.xpose.msra.mxu0 0.0
    %990 = vmatprep.subr.mxu0 0.0
    %991 = vmatpush2.xpose.msra.mxu0 0.0
    %992 = vmatprep.subr.mxu0 0.0
    %993 = vmatpush2.xpose.msra.mxu0 0.0
    %994 = vmatprep.subr.mxu0 0.0
    %995 = vmatpush2.xpose.msra.mxu0 0.0
    %996 = vmatprep.subr.mxu0 0.0
    %997 = vmatpush2.xpose.msra.mxu0 0.0
    %998 = vmatprep.subr.mxu0 0.0
    %999 = vmatpush2.xpose.msra.mxu0 0.0
    %1000 = vmatprep.subr.mxu0 0.0
    %1001 = vmatpush2.xpose.msra.mxu0 0.0
    %1002 = vmatprep.subr.mxu0 0.0
    %1003 = vmatpush2.xpose.msra.mxu0 0.0
    %1004 = vmatprep.subr.mxu0 0.0
    %1005 = vmatpush2.xpose.msra.mxu0 0.0
    %1006 = vmatprep.subr.mxu0 0.0
    %1007 = vmatpush2.xpose.msra.mxu0 0.0
    %1008 = vmatprep.subr.mxu0 0.0
    %1009 = vmatpush2.xpose.msra.mxu0 0.0
    %1010 = vmatprep.subr.mxu0 0.0
    %1011 = vmatpush2.xpose.msra.mxu0 0.0
    %1012 = vmatprep.subr.mxu0 0.0
    %1013 = vmatpush2.xpose.msra.mxu0 0.0
    %1014 = vmatprep.subr.mxu0 0.0
    %1015 = vmatpush2.xpose.msra.mxu0 0.0
    %1016 = vmatprep.subr.mxu0 0.0
    %1017 = vmatpush2.xpose.msra.mxu0 0.0
    %1018 = vmatprep.subr.mxu0 0.0
    %1019 = vmatpush2.xpose.msra.mxu0 0.0
    %1020 = vmatprep.mubr.f32.mxu0 0.0
    %1021 = vmatmul.mubr.f32.gmra.mxu0 %v952
    %v1022 = vpop.f32.mrf.mxu0
    %v1023 = vadd.f32 0.0, %v1022
    %v1024 = vpop.f32.mrf.mxu0
    %1025 = vdwg.mxu0
    %v1026 = vmul.f32 %v1023, 0.25
    %v1027 = vsel %vm364, %v1026, -inf
    %1028 = vmax.xlane.f32.xlu0 %v1027
    %v1029 = vpop.xlane.xlu0 %1028
    %v1030 = vsub.f32 %v1026, %v1029
    %v1031 = vmul.f32 %v1030, 1.442695
    %v1032 = vpow.pop %v1031
    %v1033 = vsel %vm364, %v1032, 0.0
    %1034 = vadd.xlane.f32.xlu0 %v1033
    %v1035 = vpop.xlane.xlu0 %1034
    %v1036 = vrcp.pop %v1035
    %v1037 = vmul.f32 %v1032, %v1036
    %1038 = vrot.lane.b32.xlu0 %v278, 64
    %v1039 = vpop.permute.xlu0 %1038
    %v1042 = vsel %vm364, %v1037, 0
    %1044 = vmatprep.subr.mxu0 0.0
    %1045 = vmatpush1.msra.mxu0 0.0
    %1046 = vmatprep.subr.mxu0 0.0
    %1047 = vmatpush1.msra.mxu0 0.0
    %1048 = vmatprep.subr.mxu0 0.0
    %1049 = vmatpush1.msra.mxu0 0.0
    %1050 = vmatprep.subr.mxu0 0.0
    %1051 = vmatpush1.msra.mxu0 0.0
    %1052 = vmatprep.subr.mxu0 0.0
    %1053 = vmatpush1.msra.mxu0 0.0
    %1054 = vmatprep.subr.mxu0 0.0
    %1055 = vmatpush1.msra.mxu0 0.0
    %1056 = vmatprep.subr.mxu0 0.0
    %1057 = vmatpush1.msra.mxu0 0.0
    %1058 = vmatprep.subr.mxu0 0.0
    %1059 = vmatpush1.msra.mxu0 0.0
    %1060 = vmatprep.subr.mxu0 0.0
    %1061 = vmatpush1.msra.mxu0 0.0
    %1062 = vmatprep.subr.mxu0 0.0
    %1063 = vmatpush1.msra.mxu0 0.0
    %1064 = vmatprep.subr.mxu0 0.0
    %1065 = vmatpush1.msra.mxu0 0.0
    %1066 = vmatprep.subr.mxu0 0.0
    %1067 = vmatpush1.msra.mxu0 0.0
    %1068 = vmatprep.subr.mxu0 0.0
    %1069 = vmatpush1.msra.mxu0 0.0
    %1070 = vmatprep.subr.mxu0 0.0
    %1071 = vmatpush1.msra.mxu0 0.0
    %1072 = vmatprep.subr.mxu0 0.0
    %1073 = vmatpush1.msra.mxu0 0.0
    %1074 = vmatprep.subr.mxu0 0.0
    %1075 = vmatpush1.msra.mxu0 %v1039
    %1076 = vmatprep.subr.mxu0 0.0
    %1077 = vmatpush2.msra.mxu0 0.0
    %1078 = vmatprep.subr.mxu0 0.0
    %1079 = vmatpush2.msra.mxu0 0.0
    %1080 = vmatprep.subr.mxu0 0.0
    %1081 = vmatpush2.msra.mxu0 0.0
    %1082 = vmatprep.subr.mxu0 0.0
    %1083 = vmatpush2.msra.mxu0 0.0
    %1084 = vmatprep.subr.mxu0 0.0
    %1085 = vmatpush2.msra.mxu0 0.0
    %1086 = vmatprep.subr.mxu0 0.0
    %1087 = vmatpush2.msra.mxu0 0.0
    %1088 = vmatprep.subr.mxu0 0.0
    %1089 = vmatpush2.msra.mxu0 0.0
    %1090 = vmatprep.subr.mxu0 0.0
    %1091 = vmatpush2.msra.mxu0 0.0
    %1092 = vmatprep.subr.mxu0 0.0
    %1093 = vmatpush2.msra.mxu0 0.0
    %1094 = vmatprep.subr.mxu0 0.0
    %1095 = vmatpush2.msra.mxu0 0.0
    %1096 = vmatprep.subr.mxu0 0.0
    %1097 = vmatpush2.msra.mxu0 0.0
    %1098 = vmatprep.subr.mxu0 0.0
    %1099 = vmatpush2.msra.mxu0 0.0
    %1100 = vmatprep.subr.mxu0 0.0
    %1101 = vmatpush2.msra.mxu0 0.0
    %1102 = vmatprep.subr.mxu0 0.0
    %1103 = vmatpush2.msra.mxu0 0.0
    %1104 = vmatprep.subr.mxu0 0.0
    %1105 = vmatpush2.msra.mxu0 0.0
    %1106 = vmatprep.subr.mxu0 0.0
    %1107 = vmatpush2.msra.mxu0 0.0
    %1108 = vmatprep.mubr.f32.mxu0 0.0
    %1109 = vmatmul.mubr.f32.gmra.mxu0 %v1042
    %v1110 = vpop.f32.mrf.mxu0
    %v1111 = vadd.f32 0.0, %v1110
    %v1112 = vpop.f32.mrf.mxu0
    %1113 = vdwg.mxu0
    %1114 = vrot.lane.b32.xlu0 %v201, 48
    %v1115 = vpop.permute.xlu0 %1114
    %1116 = vrot.lane.b32.xlu0 %v203, 48
    %v1117 = vpop.permute.xlu0 %1116
    %v1118 = vsel %vm286, %v1115, 0
    %v1120 = vsel %vm286, %v1117, 0
    %1122 = vmatprep.subr.mxu0 0.0
    %1123 = vmatpush1.xpose.msra.mxu0 0.0
    %1124 = vmatprep.subr.mxu0 0.0
    %1125 = vmatpush1.xpose.msra.mxu0 0.0
    %1126 = vmatprep.subr.mxu0 0.0
    %1127 = vmatpush1.xpose.msra.mxu0 0.0
    %1128 = vmatprep.subr.mxu0 0.0
    %1129 = vmatpush1.xpose.msra.mxu0 0.0
    %1130 = vmatprep.subr.mxu0 0.0
    %1131 = vmatpush1.xpose.msra.mxu0 0.0
    %1132 = vmatprep.subr.mxu0 0.0
    %1133 = vmatpush1.xpose.msra.mxu0 0.0
    %1134 = vmatprep.subr.mxu0 0.0
    %1135 = vmatpush1.xpose.msra.mxu0 0.0
    %1136 = vmatprep.subr.mxu0 0.0
    %1137 = vmatpush1.xpose.msra.mxu0 0.0
    %1138 = vmatprep.subr.mxu0 0.0
    %1139 = vmatpush1.xpose.msra.mxu0 0.0
    %1140 = vmatprep.subr.mxu0 0.0
    %1141 = vmatpush1.xpose.msra.mxu0 0.0
    %1142 = vmatprep.subr.mxu0 0.0
    %1143 = vmatpush1.xpose.msra.mxu0 0.0
    %1144 = vmatprep.subr.mxu0 0.0
    %1145 = vmatpush1.xpose.msra.mxu0 0.0
    %1146 = vmatprep.subr.mxu0 0.0
    %1147 = vmatpush1.xpose.msra.mxu0 0.0
    %1148 = vmatprep.subr.mxu0 0.0
    %1149 = vmatpush1.xpose.msra.mxu0 0.0
    %1150 = vmatprep.subr.mxu0 0.0
    %1151 = vmatpush1.xpose.msra.mxu0 0.0
    %1152 = vmatprep.subr.mxu0 0.0
    %1153 = vmatpush1.xpose.msra.mxu0 %v1120
    %1154 = vmatprep.subr.mxu0 0.0
    %1155 = vmatpush2.xpose.msra.mxu0 0.0
    %1156 = vmatprep.subr.mxu0 0.0
    %1157 = vmatpush2.xpose.msra.mxu0 0.0
    %1158 = vmatprep.subr.mxu0 0.0
    %1159 = vmatpush2.xpose.msra.mxu0 0.0
    %1160 = vmatprep.subr.mxu0 0.0
    %1161 = vmatpush2.xpose.msra.mxu0 0.0
    %1162 = vmatprep.subr.mxu0 0.0
    %1163 = vmatpush2.xpose.msra.mxu0 0.0
    %1164 = vmatprep.subr.mxu0 0.0
    %1165 = vmatpush2.xpose.msra.mxu0 0.0
    %1166 = vmatprep.subr.mxu0 0.0
    %1167 = vmatpush2.xpose.msra.mxu0 0.0
    %1168 = vmatprep.subr.mxu0 0.0
    %1169 = vmatpush2.xpose.msra.mxu0 0.0
    %1170 = vmatprep.subr.mxu0 0.0
    %1171 = vmatpush2.xpose.msra.mxu0 0.0
    %1172 = vmatprep.subr.mxu0 0.0
    %1173 = vmatpush2.xpose.msra.mxu0 0.0
    %1174 = vmatprep.subr.mxu0 0.0
    %1175 = vmatpush2.xpose.msra.mxu0 0.0
    %1176 = vmatprep.subr.mxu0 0.0
    %1177 = vmatpush2.xpose.msra.mxu0 0.0
    %1178 = vmatprep.subr.mxu0 0.0
    %1179 = vmatpush2.xpose.msra.mxu0 0.0
    %1180 = vmatprep.subr.mxu0 0.0
    %1181 = vmatpush2.xpose.msra.mxu0 0.0
    %1182 = vmatprep.subr.mxu0 0.0
    %1183 = vmatpush2.xpose.msra.mxu0 0.0
    %1184 = vmatprep.subr.mxu0 0.0
    %1185 = vmatpush2.xpose.msra.mxu0 0.0
    %1186 = vmatprep.mubr.f32.mxu0 0.0
    %1187 = vmatmul.mubr.f32.gmra.mxu0 %v1118
    %v1188 = vpop.f32.mrf.mxu0
    %v1189 = vadd.f32 0.0, %v1188
    %v1190 = vpop.f32.mrf.mxu0
    %1191 = vdwg.mxu0
    %v1192 = vmul.f32 %v1189, 0.25
    %v1193 = vsel %vm364, %v1192, -inf
    %1194 = vmax.xlane.f32.xlu0 %v1193
    %v1195 = vpop.xlane.xlu0 %1194
    %v1196 = vsub.f32 %v1192, %v1195
    %v1197 = vmul.f32 %v1196, 1.442695
    %v1198 = vpow.pop %v1197
    %v1199 = vsel %vm364, %v1198, 0.0
    %1200 = vadd.xlane.f32.xlu0 %v1199
    %v1201 = vpop.xlane.xlu0 %1200
    %v1202 = vrcp.pop %v1201
    %v1203 = vmul.f32 %v1198, %v1202
    %1204 = vrot.lane.b32.xlu0 %v278, 48
    %v1205 = vpop.permute.xlu0 %1204
    %v1208 = vsel %vm364, %v1203, 0
    %1210 = vmatprep.subr.mxu0 0.0
    %1211 = vmatpush1.msra.mxu0 0.0
    %1212 = vmatprep.subr.mxu0 0.0
    %1213 = vmatpush1.msra.mxu0 0.0
    %1214 = vmatprep.subr.mxu0 0.0
    %1215 = vmatpush1.msra.mxu0 0.0
    %1216 = vmatprep.subr.mxu0 0.0
    %1217 = vmatpush1.msra.mxu0 0.0
    %1218 = vmatprep.subr.mxu0 0.0
    %1219 = vmatpush1.msra.mxu0 0.0
    %1220 = vmatprep.subr.mxu0 0.0
    %1221 = vmatpush1.msra.mxu0 0.0
    %1222 = vmatprep.subr.mxu0 0.0
    %1223 = vmatpush1.msra.mxu0 0.0
    %1224 = vmatprep.subr.mxu0 0.0
    %1225 = vmatpush1.msra.mxu0 0.0
    %1226 = vmatprep.subr.mxu0 0.0
    %1227 = vmatpush1.msra.mxu0 0.0
    %1228 = vmatprep.subr.mxu0 0.0
    %1229 = vmatpush1.msra.mxu0 0.0
    %1230 = vmatprep.subr.mxu0 0.0
    %1231 = vmatpush1.msra.mxu0 0.0
    %1232 = vmatprep.subr.mxu0 0.0
    %1233 = vmatpush1.msra.mxu0 0.0
    %1234 = vmatprep.subr.mxu0 0.0
    %1235 = vmatpush1.msra.mxu0 0.0
    %1236 = vmatprep.subr.mxu0 0.0
    %1237 = vmatpush1.msra.mxu0 0.0
    %1238 = vmatprep.subr.mxu0 0.0
    %1239 = vmatpush1.msra.mxu0 0.0
    %1240 = vmatprep.subr.mxu0 0.0
    %1241 = vmatpush1.msra.mxu0 %v1205
    %1242 = vmatprep.subr.mxu0 0.0
    %1243 = vmatpush2.msra.mxu0 0.0
    %1244 = vmatprep.subr.mxu0 0.0
    %1245 = vmatpush2.msra.mxu0 0.0
    %1246 = vmatprep.subr.mxu0 0.0
    %1247 = vmatpush2.msra.mxu0 0.0
    %1248 = vmatprep.subr.mxu0 0.0
    %1249 = vmatpush2.msra.mxu0 0.0
    %1250 = vmatprep.subr.mxu0 0.0
    %1251 = vmatpush2.msra.mxu0 0.0
    %1252 = vmatprep.subr.mxu0 0.0
    %1253 = vmatpush2.msra.mxu0 0.0
    %1254 = vmatprep.subr.mxu0 0.0
    %1255 = vmatpush2.msra.mxu0 0.0
    %1256 = vmatprep.subr.mxu0 0.0
    %1257 = vmatpush2.msra.mxu0 0.0
    %1258 = vmatprep.subr.mxu0 0.0
    %1259 = vmatpush2.msra.mxu0 0.0
    %1260 = vmatprep.subr.mxu0 0.0
    %1261 = vmatpush2.msra.mxu0 0.0
    %1262 = vmatprep.subr.mxu0 0.0
    %1263 = vmatpush2.msra.mxu0 0.0
    %1264 = vmatprep.subr.mxu0 0.0
    %1265 = vmatpush2.msra.mxu0 0.0
    %1266 = vmatprep.subr.mxu0 0.0
    %1267 = vmatpush2.msra.mxu0 0.0
    %1268 = vmatprep.subr.mxu0 0.0
    %1269 = vmatpush2.msra.mxu0 0.0
    %1270 = vmatprep.subr.mxu0 0.0
    %1271 = vmatpush2.msra.mxu0 0.0
    %1272 = vmatprep.subr.mxu0 0.0
    %1273 = vmatpush2.msra.mxu0 0.0
    %1274 = vmatprep.mubr.f32.mxu0 0.0
    %1275 = vmatmul.mubr.f32.gmra.mxu0 %v1208
    %v1276 = vpop.f32.mrf.mxu0
    %v1277 = vadd.f32 0.0, %v1276
    %v1278 = vpop.f32.mrf.mxu0
    %1279 = vdwg.mxu0
    %1280 = vrot.lane.b32.xlu0 %v201, 32
    %v1281 = vpop.permute.xlu0 %1280
    %1282 = vrot.lane.b32.xlu0 %v203, 32
    %v1283 = vpop.permute.xlu0 %1282
    %v1284 = vsel %vm286, %v1281, 0
    %v1286 = vsel %vm286, %v1283, 0
    %1288 = vmatprep.subr.mxu0 0.0
    %1289 = vmatpush1.xpose.msra.mxu0 0.0
    %1290 = vmatprep.subr.mxu0 0.0
    %1291 = vmatpush1.xpose.msra.mxu0 0.0
    %1292 = vmatprep.subr.mxu0 0.0
    %1293 = vmatpush1.xpose.msra.mxu0 0.0
    %1294 = vmatprep.subr.mxu0 0.0
    %1295 = vmatpush1.xpose.msra.mxu0 0.0
    %1296 = vmatprep.subr.mxu0 0.0
    %1297 = vmatpush1.xpose.msra.mxu0 0.0
    %1298 = vmatprep.subr.mxu0 0.0
    %1299 = vmatpush1.xpose.msra.mxu0 0.0
    %1300 = vmatprep.subr.mxu0 0.0
    %1301 = vmatpush1.xpose.msra.mxu0 0.0
    %1302 = vmatprep.subr.mxu0 0.0
    %1303 = vmatpush1.xpose.msra.mxu0 0.0
    %1304 = vmatprep.subr.mxu0 0.0
    %1305 = vmatpush1.xpose.msra.mxu0 0.0
    %1306 = vmatprep.subr.mxu0 0.0
    %1307 = vmatpush1.xpose.msra.mxu0 0.0
    %1308 = vmatprep.subr.mxu0 0.0
    %1309 = vmatpush1.xpose.msra.mxu0 0.0
    %1310 = vmatprep.subr.mxu0 0.0
    %1311 = vmatpush1.xpose.msra.mxu0 0.0
    %1312 = vmatprep.subr.mxu0 0.0
    %1313 = vmatpush1.xpose.msra.mxu0 0.0
    %1314 = vmatprep.subr.mxu0 0.0
    %1315 = vmatpush1.xpose.msra.mxu0 0.0
    %1316 = vmatprep.subr.mxu0 0.0
    %1317 = vmatpush1.xpose.msra.mxu0 0.0
    %1318 = vmatprep.subr.mxu0 0.0
    %1319 = vmatpush1.xpose.msra.mxu0 %v1286
    %1320 = vmatprep.subr.mxu0 0.0
    %1321 = vmatpush2.xpose.msra.mxu0 0.0
    %1322 = vmatprep.subr.mxu0 0.0
    %1323 = vmatpush2.xpose.msra.mxu0 0.0
    %1324 = vmatprep.subr.mxu0 0.0
    %1325 = vmatpush2.xpose.msra.mxu0 0.0
    %1326 = vmatprep.subr.mxu0 0.0
    %1327 = vmatpush2.xpose.msra.mxu0 0.0
    %1328 = vmatprep.subr.mxu0 0.0
    %1329 = vmatpush2.xpose.msra.mxu0 0.0
    %1330 = vmatprep.subr.mxu0 0.0
    %1331 = vmatpush2.xpose.msra.mxu0 0.0
    %1332 = vmatprep.subr.mxu0 0.0
    %1333 = vmatpush2.xpose.msra.mxu0 0.0
    %1334 = vmatprep.subr.mxu0 0.0
    %1335 = vmatpush2.xpose.msra.mxu0 0.0
    %1336 = vmatprep.subr.mxu0 0.0
    %1337 = vmatpush2.xpose.msra.mxu0 0.0
    %1338 = vmatprep.subr.mxu0 0.0
    %1339 = vmatpush2.xpose.msra.mxu0 0.0
    %1340 = vmatprep.subr.mxu0 0.0
    %1341 = vmatpush2.xpose.msra.mxu0 0.0
    %1342 = vmatprep.subr.mxu0 0.0
    %1343 = vmatpush2.xpose.msra.mxu0 0.0
    %1344 = vmatprep.subr.mxu0 0.0
    %1345 = vmatpush2.xpose.msra.mxu0 0.0
    %1346 = vmatprep.subr.mxu0 0.0
    %1347 = vmatpush2.xpose.msra.mxu0 0.0
    %1348 = vmatprep.subr.mxu0 0.0
    %1349 = vmatpush2.xpose.msra.mxu0 0.0
    %1350 = vmatprep.subr.mxu0 0.0
    %1351 = vmatpush2.xpose.msra.mxu0 0.0
    %1352 = vmatprep.mubr.f32.mxu0 0.0
    %1353 = vmatmul.mubr.f32.gmra.mxu0 %v1284
    %v1354 = vpop.f32.mrf.mxu0
    %v1355 = vadd.f32 0.0, %v1354
    %v1356 = vpop.f32.mrf.mxu0
    %1357 = vdwg.mxu0
    %v1358 = vmul.f32 %v1355, 0.25
    %v1359 = vsel %vm364, %v1358, -inf
    %1360 = vmax.xlane.f32.xlu0 %v1359
    %v1361 = vpop.xlane.xlu0 %1360
    %v1362 = vsub.f32 %v1358, %v1361
    %v1363 = vmul.f32 %v1362, 1.442695
    %v1364 = vpow.pop %v1363
    %v1365 = vsel %vm364, %v1364, 0.0
    %1366 = vadd.xlane.f32.xlu0 %v1365
    %v1367 = vpop.xlane.xlu0 %1366
    %v1368 = vrcp.pop %v1367
    %v1369 = vmul.f32 %v1364, %v1368
    %1370 = vrot.lane.b32.xlu0 %v278, 32
    %v1371 = vpop.permute.xlu0 %1370
    %v1374 = vsel %vm364, %v1369, 0
    %1376 = vmatprep.subr.mxu0 0.0
    %1377 = vmatpush1.msra.mxu0 0.0
    %1378 = vmatprep.subr.mxu0 0.0
    %1379 = vmatpush1.msra.mxu0 0.0
    %1380 = vmatprep.subr.mxu0 0.0
    %1381 = vmatpush1.msra.mxu0 0.0
    %1382 = vmatprep.subr.mxu0 0.0
    %1383 = vmatpush1.msra.mxu0 0.0
    %1384 = vmatprep.subr.mxu0 0.0
    %1385 = vmatpush1.msra.mxu0 0.0
    %1386 = vmatprep.subr.mxu0 0.0
    %1387 = vmatpush1.msra.mxu0 0.0
    %1388 = vmatprep.subr.mxu0 0.0
    %1389 = vmatpush1.msra.mxu0 0.0
    %1390 = vmatprep.subr.mxu0 0.0
    %1391 = vmatpush1.msra.mxu0 0.0
    %1392 = vmatprep.subr.mxu0 0.0
    %1393 = vmatpush1.msra.mxu0 0.0
    %1394 = vmatprep.subr.mxu0 0.0
    %1395 = vmatpush1.msra.mxu0 0.0
    %1396 = vmatprep.subr.mxu0 0.0
    %1397 = vmatpush1.msra.mxu0 0.0
    %1398 = vmatprep.subr.mxu0 0.0
    %1399 = vmatpush1.msra.mxu0 0.0
    %1400 = vmatprep.subr.mxu0 0.0
    %1401 = vmatpush1.msra.mxu0 0.0
    %1402 = vmatprep.subr.mxu0 0.0
    %1403 = vmatpush1.msra.mxu0 0.0
    %1404 = vmatprep.subr.mxu0 0.0
    %1405 = vmatpush1.msra.mxu0 0.0
    %1406 = vmatprep.subr.mxu0 0.0
    %1407 = vmatpush1.msra.mxu0 %v1371
    %1408 = vmatprep.subr.mxu0 0.0
    %1409 = vmatpush2.msra.mxu0 0.0
    %1410 = vmatprep.subr.mxu0 0.0
    %1411 = vmatpush2.msra.mxu0 0.0
    %1412 = vmatprep.subr.mxu0 0.0
    %1413 = vmatpush2.msra.mxu0 0.0
    %1414 = vmatprep.subr.mxu0 0.0
    %1415 = vmatpush2.msra.mxu0 0.0
    %1416 = vmatprep.subr.mxu0 0.0
    %1417 = vmatpush2.msra.mxu0 0.0
    %1418 = vmatprep.subr.mxu0 0.0
    %1419 = vmatpush2.msra.mxu0 0.0
    %1420 = vmatprep.subr.mxu0 0.0
    %1421 = vmatpush2.msra.mxu0 0.0
    %1422 = vmatprep.subr.mxu0 0.0
    %1423 = vmatpush2.msra.mxu0 0.0
    %1424 = vmatprep.subr.mxu0 0.0
    %1425 = vmatpush2.msra.mxu0 0.0
    %1426 = vmatprep.subr.mxu0 0.0
    %1427 = vmatpush2.msra.mxu0 0.0
    %1428 = vmatprep.subr.mxu0 0.0
    %1429 = vmatpush2.msra.mxu0 0.0
    %1430 = vmatprep.subr.mxu0 0.0
    %1431 = vmatpush2.msra.mxu0 0.0
    %1432 = vmatprep.subr.mxu0 0.0
    %1433 = vmatpush2.msra.mxu0 0.0
    %1434 = vmatprep.subr.mxu0 0.0
    %1435 = vmatpush2.msra.mxu0 0.0
    %1436 = vmatprep.subr.mxu0 0.0
    %1437 = vmatpush2.msra.mxu0 0.0
    %1438 = vmatprep.subr.mxu0 0.0
    %1439 = vmatpush2.msra.mxu0 0.0
    %1440 = vmatprep.mubr.f32.mxu0 0.0
    %1441 = vmatmul.mubr.f32.gmra.mxu0 %v1374
    %v1442 = vpop.f32.mrf.mxu0
    %v1443 = vadd.f32 0.0, %v1442
    %v1444 = vpop.f32.mrf.mxu0
    %1445 = vdwg.mxu0
    %1446 = vrot.lane.b32.xlu0 %v201, 16
    %v1447 = vpop.permute.xlu0 %1446
    %1448 = vrot.lane.b32.xlu0 %v203, 16
    %v1449 = vpop.permute.xlu0 %1448
    %v1450 = vsel %vm286, %v1447, 0
    %v1452 = vsel %vm286, %v1449, 0
    %1454 = vmatprep.subr.mxu0 0.0
    %1455 = vmatpush1.xpose.msra.mxu0 0.0
    %1456 = vmatprep.subr.mxu0 0.0
    %1457 = vmatpush1.xpose.msra.mxu0 0.0
    %1458 = vmatprep.subr.mxu0 0.0
    %1459 = vmatpush1.xpose.msra.mxu0 0.0
    %1460 = vmatprep.subr.mxu0 0.0
    %1461 = vmatpush1.xpose.msra.mxu0 0.0
    %1462 = vmatprep.subr.mxu0 0.0
    %1463 = vmatpush1.xpose.msra.mxu0 0.0
    %1464 = vmatprep.subr.mxu0 0.0
    %1465 = vmatpush1.xpose.msra.mxu0 0.0
    %1466 = vmatprep.subr.mxu0 0.0
    %1467 = vmatpush1.xpose.msra.mxu0 0.0
    %1468 = vmatprep.subr.mxu0 0.0
    %1469 = vmatpush1.xpose.msra.mxu0 0.0
    %1470 = vmatprep.subr.mxu0 0.0
    %1471 = vmatpush1.xpose.msra.mxu0 0.0
    %1472 = vmatprep.subr.mxu0 0.0
    %1473 = vmatpush1.xpose.msra.mxu0 0.0
    %1474 = vmatprep.subr.mxu0 0.0
    %1475 = vmatpush1.xpose.msra.mxu0 0.0
    %1476 = vmatprep.subr.mxu0 0.0
    %1477 = vmatpush1.xpose.msra.mxu0 0.0
    %1478 = vmatprep.subr.mxu0 0.0
    %1479 = vmatpush1.xpose.msra.mxu0 0.0
    %1480 = vmatprep.subr.mxu0 0.0
    %1481 = vmatpush1.xpose.msra.mxu0 0.0
    %1482 = vmatprep.subr.mxu0 0.0
    %1483 = vmatpush1.xpose.msra.mxu0 0.0
    %1484 = vmatprep.subr.mxu0 0.0
    %1485 = vmatpush1.xpose.msra.mxu0 %v1452
    %1486 = vmatprep.subr.mxu0 0.0
    %1487 = vmatpush2.xpose.msra.mxu0 0.0
    %1488 = vmatprep.subr.mxu0 0.0
    %1489 = vmatpush2.xpose.msra.mxu0 0.0
    %1490 = vmatprep.subr.mxu0 0.0
    %1491 = vmatpush2.xpose.msra.mxu0 0.0
    %1492 = vmatprep.subr.mxu0 0.0
    %1493 = vmatpush2.xpose.msra.mxu0 0.0
    %1494 = vmatprep.subr.mxu0 0.0
    %1495 = vmatpush2.xpose.msra.mxu0 0.0
    %1496 = vmatprep.subr.mxu0 0.0
    %1497 = vmatpush2.xpose.msra.mxu0 0.0
    %1498 = vmatprep.subr.mxu0 0.0
    %1499 = vmatpush2.xpose.msra.mxu0 0.0
    %1500 = vmatprep.subr.mxu0 0.0
    %1501 = vmatpush2.xpose.msra.mxu0 0.0
    %1502 = vmatprep.subr.mxu0 0.0
    %1503 = vmatpush2.xpose.msra.mxu0 0.0
    %1504 = vmatprep.subr.mxu0 0.0
    %1505 = vmatpush2.xpose.msra.mxu0 0.0
    %1506 = vmatprep.subr.mxu0 0.0
    %1507 = vmatpush2.xpose.msra.mxu0 0.0
    %1508 = vmatprep.subr.mxu0 0.0
    %1509 = vmatpush2.xpose.msra.mxu0 0.0
    %1510 = vmatprep.subr.mxu0 0.0
    %1511 = vmatpush2.xpose.msra.mxu0 0.0
    %1512 = vmatprep.subr.mxu0 0.0
    %1513 = vmatpush2.xpose.msra.mxu0 0.0
    %1514 = vmatprep.subr.mxu0 0.0
    %1515 = vmatpush2.xpose.msra.mxu0 0.0
    %1516 = vmatprep.subr.mxu0 0.0
    %1517 = vmatpush2.xpose.msra.mxu0 0.0
    %1518 = vmatprep.mubr.f32.mxu0 0.0
    %1519 = vmatmul.mubr.f32.gmra.mxu0 %v1450
    %v1520 = vpop.f32.mrf.mxu0
    %v1521 = vadd.f32 0.0, %v1520
    %v1522 = vpop.f32.mrf.mxu0
    %1523 = vdwg.mxu0
    %v1524 = vmul.f32 %v1521, 0.25
    %v1525 = vsel %vm364, %v1524, -inf
    %1526 = vmax.xlane.f32.xlu0 %v1525
    %v1527 = vpop.xlane.xlu0 %1526
    %v1528 = vsub.f32 %v1524, %v1527
    %v1529 = vmul.f32 %v1528, 1.442695
    %v1530 = vpow.pop %v1529
    %v1531 = vsel %vm364, %v1530, 0.0
    %1532 = vadd.xlane.f32.xlu0 %v1531
    %v1533 = vpop.xlane.xlu0 %1532
    %v1534 = vrcp.pop %v1533
    %v1535 = vmul.f32 %v1530, %v1534
    %1536 = vrot.lane.b32.xlu0 %v278, 16
    %v1537 = vpop.permute.xlu0 %1536
    %v1540 = vsel %vm364, %v1535, 0
    %1542 = vmatprep.subr.mxu0 0.0
    %1543 = vmatpush1.msra.mxu0 0.0
    %1544 = vmatprep.subr.mxu0 0.0
    %1545 = vmatpush1.msra.mxu0 0.0
    %1546 = vmatprep.subr.mxu0 0.0
    %1547 = vmatpush1.msra.mxu0 0.0
    %1548 = vmatprep.subr.mxu0 0.0
    %1549 = vmatpush1.msra.mxu0 0.0
    %1550 = vmatprep.subr.mxu0 0.0
    %1551 = vmatpush1.msra.mxu0 0.0
    %1552 = vmatprep.subr.mxu0 0.0
    %1553 = vmatpush1.msra.mxu0 0.0
    %1554 = vmatprep.subr.mxu0 0.0
    %1555 = vmatpush1.msra.mxu0 0.0
    %1556 = vmatprep.subr.mxu0 0.0
    %1557 = vmatpush1.msra.mxu0 0.0
    %1558 = vmatprep.subr.mxu0 0.0
    %1559 = vmatpush1.msra.mxu0 0.0
    %1560 = vmatprep.subr.mxu0 0.0
    %1561 = vmatpush1.msra.mxu0 0.0
    %1562 = vmatprep.subr.mxu0 0.0
    %1563 = vmatpush1.msra.mxu0 0.0
    %1564 = vmatprep.subr.mxu0 0.0
    %1565 = vmatpush1.msra.mxu0 0.0
    %1566 = vmatprep.subr.mxu0 0.0
    %1567 = vmatpush1.msra.mxu0 0.0
    %1568 = vmatprep.subr.mxu0 0.0
    %1569 = vmatpush1.msra.mxu0 0.0
    %1570 = vmatprep.subr.mxu0 0.0
    %1571 = vmatpush1.msra.mxu0 0.0
    %1572 = vmatprep.subr.mxu0 0.0
    %1573 = vmatpush1.msra.mxu0 %v1537
    %1574 = vmatprep.subr.mxu0 0.0
    %1575 = vmatpush2.msra.mxu0 0.0
    %1576 = vmatprep.subr.mxu0 0.0
    %1577 = vmatpush2.msra.mxu0 0.0
    %1578 = vmatprep.subr.mxu0 0.0
    %1579 = vmatpush2.msra.mxu0 0.0
    %1580 = vmatprep.subr.mxu0 0.0
    %1581 = vmatpush2.msra.mxu0 0.0
    %1582 = vmatprep.subr.mxu0 0.0
    %1583 = vmatpush2.msra.mxu0 0.0
    %1584 = vmatprep.subr.mxu0 0.0
    %1585 = vmatpush2.msra.mxu0 0.0
    %1586 = vmatprep.subr.mxu0 0.0
    %1587 = vmatpush2.msra.mxu0 0.0
    %1588 = vmatprep.subr.mxu0 0.0
    %1589 = vmatpush2.msra.mxu0 0.0
    %1590 = vmatprep.subr.mxu0 0.0
    %1591 = vmatpush2.msra.mxu0 0.0
    %1592 = vmatprep.subr.mxu0 0.0
    %1593 = vmatpush2.msra.mxu0 0.0
    %1594 = vmatprep.subr.mxu0 0.0
    %1595 = vmatpush2.msra.mxu0 0.0
    %1596 = vmatprep.subr.mxu0 0.0
    %1597 = vmatpush2.msra.mxu0 0.0
    %1598 = vmatprep.subr.mxu0 0.0
    %1599 = vmatpush2.msra.mxu0 0.0
    %1600 = vmatprep.subr.mxu0 0.0
    %1601 = vmatpush2.msra.mxu0 0.0
    %1602 = vmatprep.subr.mxu0 0.0
    %1603 = vmatpush2.msra.mxu0 0.0
    %1604 = vmatprep.subr.mxu0 0.0
    %1605 = vmatpush2.msra.mxu0 0.0
    %1606 = vmatprep.mubr.f32.mxu0 0.0
    %1607 = vmatmul.mubr.f32.gmra.mxu0 %v1540
    %v1608 = vpop.f32.mrf.mxu0
    %v1609 = vadd.f32 0.0, %v1608
    %v1610 = vpop.f32.mrf.mxu0
    %1611 = vdwg.mxu0
    %1613 = vrot.lane.b32.xlu0 %v613, 16
    %v1614 = vpop.permute.xlu0 %1613
    %1617 = vrot.lane.b32.xlu0 %v779, 32
    %v1618 = vpop.permute.xlu0 %1617
    %1621 = vrot.lane.b32.xlu0 %v945, 48
    %v1622 = vpop.permute.xlu0 %1621
    %1625 = vrot.lane.b32.xlu0 %v1111, 64
    %v1626 = vpop.permute.xlu0 %1625
    %1629 = vrot.lane.b32.xlu0 %v1277, 80
    %v1630 = vpop.permute.xlu0 %1629
    %1633 = vrot.lane.b32.xlu0 %v1443, 96
    %v1634 = vpop.permute.xlu0 %1633
    %1637 = vrot.lane.b32.xlu0 %v1609, 112
    %v1638 = vpop.permute.xlu0 %1637
    %v1640 = vsel %vm286, %v446, %v1614
    %vm1641 = vcmask 261120
    %v1642 = vsel %vm1641, %v1640, %v1618
    %vm1643 = vcmask 392192
    %v1644 = vsel %vm1643, %v1642, %v1622
    %vm1645 = vcmask 523264
    %v1646 = vsel %vm1645, %v1644, %v1626
    %vm1647 = vcmask 654336
    %v1648 = vsel %vm1647, %v1646, %v1630
    %vm1649 = vcmask 785408
    %v1650 = vsel %vm1649, %v1648, %v1634
    %vm1651 = vcmask 916480
    %v1652 = vsel %vm1651, %v1650, %v1638
    %v1654 = vsel %vm286, %v207, 0
    %v1657 = vsel %vm286, %v209, 0
    %1659 = vmatprep.subr.mxu0 0.0
    %1660 = vmatpush1.xpose.msra.mxu0 0.0
    %1661 = vmatprep.subr.mxu0 0.0
    %1662 = vmatpush1.xpose.msra.mxu0 0.0
    %1663 = vmatprep.subr.mxu0 0.0
    %1664 = vmatpush1.xpose.msra.mxu0 0.0
    %1665 = vmatprep.subr.mxu0 0.0
    %1666 = vmatpush1.xpose.msra.mxu0 0.0
    %1667 = vmatprep.subr.mxu0 0.0
    %1668 = vmatpush1.xpose.msra.mxu0 0.0
    %1669 = vmatprep.subr.mxu0 0.0
    %1670 = vmatpush1.xpose.msra.mxu0 0.0
    %1671 = vmatprep.subr.mxu0 0.0
    %1672 = vmatpush1.xpose.msra.mxu0 0.0
    %1673 = vmatprep.subr.mxu0 0.0
    %1674 = vmatpush1.xpose.msra.mxu0 0.0
    %1675 = vmatprep.subr.mxu0 0.0
    %1676 = vmatpush1.xpose.msra.mxu0 0.0
    %1677 = vmatprep.subr.mxu0 0.0
    %1678 = vmatpush1.xpose.msra.mxu0 0.0
    %1679 = vmatprep.subr.mxu0 0.0
    %1680 = vmatpush1.xpose.msra.mxu0 0.0
    %1681 = vmatprep.subr.mxu0 0.0
    %1682 = vmatpush1.xpose.msra.mxu0 0.0
    %1683 = vmatprep.subr.mxu0 0.0
    %1684 = vmatpush1.xpose.msra.mxu0 0.0
    %1685 = vmatprep.subr.mxu0 0.0
    %1686 = vmatpush1.xpose.msra.mxu0 0.0
    %1687 = vmatprep.subr.mxu0 0.0
    %1688 = vmatpush1.xpose.msra.mxu0 0.0
    %1689 = vmatprep.subr.mxu0 0.0
    %1690 = vmatpush1.xpose.msra.mxu0 %v1657
    %1691 = vmatprep.subr.mxu0 0.0
    %1692 = vmatpush2.xpose.msra.mxu0 0.0
    %1693 = vmatprep.subr.mxu0 0.0
    %1694 = vmatpush2.xpose.msra.mxu0 0.0
    %1695 = vmatprep.subr.mxu0 0.0
    %1696 = vmatpush2.xpose.msra.mxu0 0.0
    %1697 = vmatprep.subr.mxu0 0.0
    %1698 = vmatpush2.xpose.msra.mxu0 0.0
    %1699 = vmatprep.subr.mxu0 0.0
    %1700 = vmatpush2.xpose.msra.mxu0 0.0
    %1701 = vmatprep.subr.mxu0 0.0
    %1702 = vmatpush2.xpose.msra.mxu0 0.0
    %1703 = vmatprep.subr.mxu0 0.0
    %1704 = vmatpush2.xpose.msra.mxu0 0.0
    %1705 = vmatprep.subr.mxu0 0.0
    %1706 = vmatpush2.xpose.msra.mxu0 0.0
    %1707 = vmatprep.subr.mxu0 0.0
    %1708 = vmatpush2.xpose.msra.mxu0 0.0
    %1709 = vmatprep.subr.mxu0 0.0
    %1710 = vmatpush2.xpose.msra.mxu0 0.0
    %1711 = vmatprep.subr.mxu0 0.0
    %1712 = vmatpush2.xpose.msra.mxu0 0.0
    %1713 = vmatprep.subr.mxu0 0.0
    %1714 = vmatpush2.xpose.msra.mxu0 0.0
    %1715 = vmatprep.subr.mxu0 0.0
    %1716 = vmatpush2.xpose.msra.mxu0 0.0
    %1717 = vmatprep.subr.mxu0 0.0
    %1718 = vmatpush2.xpose.msra.mxu0 0.0
    %1719 = vmatprep.subr.mxu0 0.0
    %1720 = vmatpush2.xpose.msra.mxu0 0.0
    %1721 = vmatprep.subr.mxu0 0.0
    %1722 = vmatpush2.xpose.msra.mxu0 0.0
    %1723 = vmatprep.mubr.f32.mxu0 0.0
    %1724 = vmatmul.mubr.f32.gmra.mxu0 %v1654
    %v1725 = vpop.f32.mrf.mxu0
    %v1726 = vadd.f32 0.0, %v1725
    %v1727 = vpop.f32.mrf.mxu0
    %1728 = vdwg.mxu0
    %v1729 = vmul.f32 %v1726, 0.25
    %v1730 = vsel %vm364, %v1729, -inf
    %1731 = vmax.xlane.f32.xlu0 %v1730
    %v1732 = vpop.xlane.xlu0 %1731
    %v1733 = vsub.f32 %v1729, %v1732
    %v1734 = vmul.f32 %v1733, 1.442695
    %v1735 = vpow.pop %v1734
    %v1736 = vsel %vm364, %v1735, 0.0
    %1737 = vadd.xlane.f32.xlu0 %v1736
    %v1738 = vpop.xlane.xlu0 %1737
    %v1739 = vrcp.pop %v1738
    %v1740 = vmul.f32 %v1735, %v1739
    %v1742 = vsel %vm364, %v1740, 0
    %1744 = vmatprep.subr.mxu0 0.0
    %1745 = vmatpush1.msra.mxu0 0.0
    %1746 = vmatprep.subr.mxu0 0.0
    %1747 = vmatpush1.msra.mxu0 0.0
    %1748 = vmatprep.subr.mxu0 0.0
    %1749 = vmatpush1.msra.mxu0 0.0
    %1750 = vmatprep.subr.mxu0 0.0
    %1751 = vmatpush1.msra.mxu0 0.0
    %1752 = vmatprep.subr.mxu0 0.0
    %1753 = vmatpush1.msra.mxu0 0.0
    %1754 = vmatprep.subr.mxu0 0.0
    %1755 = vmatpush1.msra.mxu0 0.0
    %1756 = vmatprep.subr.mxu0 0.0
    %1757 = vmatpush1.msra.mxu0 0.0
    %1758 = vmatprep.subr.mxu0 0.0
    %1759 = vmatpush1.msra.mxu0 0.0
    %1760 = vmatprep.subr.mxu0 0.0
    %1761 = vmatpush1.msra.mxu0 0.0
    %1762 = vmatprep.subr.mxu0 0.0
    %1763 = vmatpush1.msra.mxu0 0.0
    %1764 = vmatprep.subr.mxu0 0.0
    %1765 = vmatpush1.msra.mxu0 0.0
    %1766 = vmatprep.subr.mxu0 0.0
    %1767 = vmatpush1.msra.mxu0 0.0
    %1768 = vmatprep.subr.mxu0 0.0
    %1769 = vmatpush1.msra.mxu0 0.0
    %1770 = vmatprep.subr.mxu0 0.0
    %1771 = vmatpush1.msra.mxu0 0.0
    %1772 = vmatprep.subr.mxu0 0.0
    %1773 = vmatpush1.msra.mxu0 0.0
    %1774 = vmatprep.subr.mxu0 0.0
    %1775 = vmatpush1.msra.mxu0 %v283
    %1776 = vmatprep.subr.mxu0 0.0
    %1777 = vmatpush2.msra.mxu0 0.0
    %1778 = vmatprep.subr.mxu0 0.0
    %1779 = vmatpush2.msra.mxu0 0.0
    %1780 = vmatprep.subr.mxu0 0.0
    %1781 = vmatpush2.msra.mxu0 0.0
    %1782 = vmatprep.subr.mxu0 0.0
    %1783 = vmatpush2.msra.mxu0 0.0
    %1784 = vmatprep.subr.mxu0 0.0
    %1785 = vmatpush2.msra.mxu0 0.0
    %1786 = vmatprep.subr.mxu0 0.0
    %1787 = vmatpush2.msra.mxu0 0.0
    %1788 = vmatprep.subr.mxu0 0.0
    %1789 = vmatpush2.msra.mxu0 0.0
    %1790 = vmatprep.subr.mxu0 0.0
    %1791 = vmatpush2.msra.mxu0 0.0
    %1792 = vmatprep.subr.mxu0 0.0
    %1793 = vmatpush2.msra.mxu0 0.0
    %1794 = vmatprep.subr.mxu0 0.0
    %1795 = vmatpush2.msra.mxu0 0.0
    %1796 = vmatprep.subr.mxu0 0.0
    %1797 = vmatpush2.msra.mxu0 0.0
    %1798 = vmatprep.subr.mxu0 0.0
    %1799 = vmatpush2.msra.mxu0 0.0
    %1800 = vmatprep.subr.mxu0 0.0
    %1801 = vmatpush2.msra.mxu0 0.0
    %1802 = vmatprep.subr.mxu0 0.0
    %1803 = vmatpush2.msra.mxu0 0.0
    %1804 = vmatprep.subr.mxu0 0.0
    %1805 = vmatpush2.msra.mxu0 0.0
    %1806 = vmatprep.subr.mxu0 0.0
    %1807 = vmatpush2.msra.mxu0 0.0
    %1808 = vmatprep.mubr.f32.mxu0 0.0
    %1809 = vmatmul.mubr.f32.gmra.mxu0 %v1742
    %v1810 = vpop.f32.mrf.mxu0
    %v1811 = vadd.f32 0.0, %v1810
    %v1812 = vpop.f32.mrf.mxu0
    %1813 = vdwg.mxu0
    %1814 = vrot.lane.b32.xlu0 %v207, 112
    %v1815 = vpop.permute.xlu0 %1814
    %1816 = vrot.lane.b32.xlu0 %v209, 112
    %v1817 = vpop.permute.xlu0 %1816
    %v1818 = vsel %vm286, %v1815, 0
    %v1820 = vsel %vm286, %v1817, 0
    %1822 = vmatprep.subr.mxu0 0.0
    %1823 = vmatpush1.xpose.msra.mxu0 0.0
    %1824 = vmatprep.subr.mxu0 0.0
    %1825 = vmatpush1.xpose.msra.mxu0 0.0
    %1826 = vmatprep.subr.mxu0 0.0
    %1827 = vmatpush1.xpose.msra.mxu0 0.0
    %1828 = vmatprep.subr.mxu0 0.0
    %1829 = vmatpush1.xpose.msra.mxu0 0.0
    %1830 = vmatprep.subr.mxu0 0.0
    %1831 = vmatpush1.xpose.msra.mxu0 0.0
    %1832 = vmatprep.subr.mxu0 0.0
    %1833 = vmatpush1.xpose.msra.mxu0 0.0
    %1834 = vmatprep.subr.mxu0 0.0
    %1835 = vmatpush1.xpose.msra.mxu0 0.0
    %1836 = vmatprep.subr.mxu0 0.0
    %1837 = vmatpush1.xpose.msra.mxu0 0.0
    %1838 = vmatprep.subr.mxu0 0.0
    %1839 = vmatpush1.xpose.msra.mxu0 0.0
    %1840 = vmatprep.subr.mxu0 0.0
    %1841 = vmatpush1.xpose.msra.mxu0 0.0
    %1842 = vmatprep.subr.mxu0 0.0
    %1843 = vmatpush1.xpose.msra.mxu0 0.0
    %1844 = vmatprep.subr.mxu0 0.0
    %1845 = vmatpush1.xpose.msra.mxu0 0.0
    %1846 = vmatprep.subr.mxu0 0.0
    %1847 = vmatpush1.xpose.msra.mxu0 0.0
    %1848 = vmatprep.subr.mxu0 0.0
    %1849 = vmatpush1.xpose.msra.mxu0 0.0
    %1850 = vmatprep.subr.mxu0 0.0
    %1851 = vmatpush1.xpose.msra.mxu0 0.0
    %1852 = vmatprep.subr.mxu0 0.0
    %1853 = vmatpush1.xpose.msra.mxu0 %v1820
    %1854 = vmatprep.subr.mxu0 0.0
    %1855 = vmatpush2.xpose.msra.mxu0 0.0
    %1856 = vmatprep.subr.mxu0 0.0
    %1857 = vmatpush2.xpose.msra.mxu0 0.0
    %1858 = vmatprep.subr.mxu0 0.0
    %1859 = vmatpush2.xpose.msra.mxu0 0.0
    %1860 = vmatprep.subr.mxu0 0.0
    %1861 = vmatpush2.xpose.msra.mxu0 0.0
    %1862 = vmatprep.subr.mxu0 0.0
    %1863 = vmatpush2.xpose.msra.mxu0 0.0
    %1864 = vmatprep.subr.mxu0 0.0
    %1865 = vmatpush2.xpose.msra.mxu0 0.0
    %1866 = vmatprep.subr.mxu0 0.0
    %1867 = vmatpush2.xpose.msra.mxu0 0.0
    %1868 = vmatprep.subr.mxu0 0.0
    %1869 = vmatpush2.xpose.msra.mxu0 0.0
    %1870 = vmatprep.subr.mxu0 0.0
    %1871 = vmatpush2.xpose.msra.mxu0 0.0
    %1872 = vmatprep.subr.mxu0 0.0
    %1873 = vmatpush2.xpose.msra.mxu0 0.0
    %1874 = vmatprep.subr.mxu0 0.0
    %1875 = vmatpush2.xpose.msra.mxu0 0.0
    %1876 = vmatprep.subr.mxu0 0.0
    %1877 = vmatpush2.xpose.msra.mxu0 0.0
    %1878 = vmatprep.subr.mxu0 0.0
    %1879 = vmatpush2.xpose.msra.mxu0 0.0
    %1880 = vmatprep.subr.mxu0 0.0
    %1881 = vmatpush2.xpose.msra.mxu0 0.0
    %1882 = vmatprep.subr.mxu0 0.0
    %1883 = vmatpush2.xpose.msra.mxu0 0.0
    %1884 = vmatprep.subr.mxu0 0.0
    %1885 = vmatpush2.xpose.msra.mxu0 0.0
    %1886 = vmatprep.mubr.f32.mxu0 0.0
    %1887 = vmatmul.mubr.f32.gmra.mxu0 %v1818
    %v1888 = vpop.f32.mrf.mxu0
    %v1889 = vadd.f32 0.0, %v1888
    %v1890 = vpop.f32.mrf.mxu0
    %1891 = vdwg.mxu0
    %v1892 = vmul.f32 %v1889, 0.25
    %v1893 = vsel %vm364, %v1892, -inf
    %1894 = vmax.xlane.f32.xlu0 %v1893
    %v1895 = vpop.xlane.xlu0 %1894
    %v1896 = vsub.f32 %v1892, %v1895
    %v1897 = vmul.f32 %v1896, 1.442695
    %v1898 = vpow.pop %v1897
    %v1899 = vsel %vm364, %v1898, 0.0
    %1900 = vadd.xlane.f32.xlu0 %v1899
    %v1901 = vpop.xlane.xlu0 %1900
    %v1902 = vrcp.pop %v1901
    %v1903 = vmul.f32 %v1898, %v1902
    %1905 = vrot.lane.b32.xlu0 %v283, 112
    %v1906 = vpop.permute.xlu0 %1905
    %v1909 = vsel %vm364, %v1903, 0
    %1911 = vmatprep.subr.mxu0 0.0
    %1912 = vmatpush1.msra.mxu0 0.0
    %1913 = vmatprep.subr.mxu0 0.0
    %1914 = vmatpush1.msra.mxu0 0.0
    %1915 = vmatprep.subr.mxu0 0.0
    %1916 = vmatpush1.msra.mxu0 0.0
    %1917 = vmatprep.subr.mxu0 0.0
    %1918 = vmatpush1.msra.mxu0 0.0
    %1919 = vmatprep.subr.mxu0 0.0
    %1920 = vmatpush1.msra.mxu0 0.0
    %1921 = vmatprep.subr.mxu0 0.0
    %1922 = vmatpush1.msra.mxu0 0.0
    %1923 = vmatprep.subr.mxu0 0.0
    %1924 = vmatpush1.msra.mxu0 0.0
    %1925 = vmatprep.subr.mxu0 0.0
    %1926 = vmatpush1.msra.mxu0 0.0
    %1927 = vmatprep.subr.mxu0 0.0
    %1928 = vmatpush1.msra.mxu0 0.0
    %1929 = vmatprep.subr.mxu0 0.0
    %1930 = vmatpush1.msra.mxu0 0.0
    %1931 = vmatprep.subr.mxu0 0.0
    %1932 = vmatpush1.msra.mxu0 0.0
    %1933 = vmatprep.subr.mxu0 0.0
    %1934 = vmatpush1.msra.mxu0 0.0
    %1935 = vmatprep.subr.mxu0 0.0
    %1936 = vmatpush1.msra.mxu0 0.0
    %1937 = vmatprep.subr.mxu0 0.0
    %1938 = vmatpush1.msra.mxu0 0.0
    %1939 = vmatprep.subr.mxu0 0.0
    %1940 = vmatpush1.msra.mxu0 0.0
    %1941 = vmatprep.subr.mxu0 0.0
    %1942 = vmatpush1.msra.mxu0 %v1906
    %1943 = vmatprep.subr.mxu0 0.0
    %1944 = vmatpush2.msra.mxu0 0.0
    %1945 = vmatprep.subr.mxu0 0.0
    %1946 = vmatpush2.msra.mxu0 0.0
    %1947 = vmatprep.subr.mxu0 0.0
    %1948 = vmatpush2.msra.mxu0 0.0
    %1949 = vmatprep.subr.mxu0 0.0
    %1950 = vmatpush2.msra.mxu0 0.0
    %1951 = vmatprep.subr.mxu0 0.0
    %1952 = vmatpush2.msra.mxu0 0.0
    %1953 = vmatprep.subr.mxu0 0.0
    %1954 = vmatpush2.msra.mxu0 0.0
    %1955 = vmatprep.subr.mxu0 0.0
    %1956 = vmatpush2.msra.mxu0 0.0
    %1957 = vmatprep.subr.mxu0 0.0
    %1958 = vmatpush2.msra.mxu0 0.0
    %1959 = vmatprep.subr.mxu0 0.0
    %1960 = vmatpush2.msra.mxu0 0.0
    %1961 = vmatprep.subr.mxu0 0.0
    %1962 = vmatpush2.msra.mxu0 0.0
    %1963 = vmatprep.subr.mxu0 0.0
    %1964 = vmatpush2.msra.mxu0 0.0
    %1965 = vmatprep.subr.mxu0 0.0
    %1966 = vmatpush2.msra.mxu0 0.0
    %1967 = vmatprep.subr.mxu0 0.0
    %1968 = vmatpush2.msra.mxu0 0.0
    %1969 = vmatprep.subr.mxu0 0.0
    %1970 = vmatpush2.msra.mxu0 0.0
    %1971 = vmatprep.subr.mxu0 0.0
    %1972 = vmatpush2.msra.mxu0 0.0
    %1973 = vmatprep.subr.mxu0 0.0
    %1974 = vmatpush2.msra.mxu0 0.0
    %1975 = vmatprep.mubr.f32.mxu0 0.0
    %1976 = vmatmul.mubr.f32.gmra.mxu0 %v1909
    %v1977 = vpop.f32.mrf.mxu0
    %v1978 = vadd.f32 0.0, %v1977
    %v1979 = vpop.f32.mrf.mxu0
    %1980 = vdwg.mxu0
    %1981 = vrot.lane.b32.xlu0 %v207, 96
    %v1982 = vpop.permute.xlu0 %1981
    %1983 = vrot.lane.b32.xlu0 %v209, 96
    %v1984 = vpop.permute.xlu0 %1983
    %v1985 = vsel %vm286, %v1982, 0
    %v1987 = vsel %vm286, %v1984, 0
    %1989 = vmatprep.subr.mxu0 0.0
    %1990 = vmatpush1.xpose.msra.mxu0 0.0
    %1991 = vmatprep.subr.mxu0 0.0
    %1992 = vmatpush1.xpose.msra.mxu0 0.0
    %1993 = vmatprep.subr.mxu0 0.0
    %1994 = vmatpush1.xpose.msra.mxu0 0.0
    %1995 = vmatprep.subr.mxu0 0.0
    %1996 = vmatpush1.xpose.msra.mxu0 0.0
    %1997 = vmatprep.subr.mxu0 0.0
    %1998 = vmatpush1.xpose.msra.mxu0 0.0
    %1999 = vmatprep.subr.mxu0 0.0
    %2000 = vmatpush1.xpose.msra.mxu0 0.0
    %2001 = vmatprep.subr.mxu0 0.0
    %2002 = vmatpush1.xpose.msra.mxu0 0.0
    %2003 = vmatprep.subr.mxu0 0.0
    %2004 = vmatpush1.xpose.msra.mxu0 0.0
    %2005 = vmatprep.subr.mxu0 0.0
    %2006 = vmatpush1.xpose.msra.mxu0 0.0
    %2007 = vmatprep.subr.mxu0 0.0
    %2008 = vmatpush1.xpose.msra.mxu0 0.0
    %2009 = vmatprep.subr.mxu0 0.0
    %2010 = vmatpush1.xpose.msra.mxu0 0.0
    %2011 = vmatprep.subr.mxu0 0.0
    %2012 = vmatpush1.xpose.msra.mxu0 0.0
    %2013 = vmatprep.subr.mxu0 0.0
    %2014 = vmatpush1.xpose.msra.mxu0 0.0
    %2015 = vmatprep.subr.mxu0 0.0
    %2016 = vmatpush1.xpose.msra.mxu0 0.0
    %2017 = vmatprep.subr.mxu0 0.0
    %2018 = vmatpush1.xpose.msra.mxu0 0.0
    %2019 = vmatprep.subr.mxu0 0.0
    %2020 = vmatpush1.xpose.msra.mxu0 %v1987
    %2021 = vmatprep.subr.mxu0 0.0
    %2022 = vmatpush2.xpose.msra.mxu0 0.0
    %2023 = vmatprep.subr.mxu0 0.0
    %2024 = vmatpush2.xpose.msra.mxu0 0.0
    %2025 = vmatprep.subr.mxu0 0.0
    %2026 = vmatpush2.xpose.msra.mxu0 0.0
    %2027 = vmatprep.subr.mxu0 0.0
    %2028 = vmatpush2.xpose.msra.mxu0 0.0
    %2029 = vmatprep.subr.mxu0 0.0
    %2030 = vmatpush2.xpose.msra.mxu0 0.0
    %2031 = vmatprep.subr.mxu0 0.0
    %2032 = vmatpush2.xpose.msra.mxu0 0.0
    %2033 = vmatprep.subr.mxu0 0.0
    %2034 = vmatpush2.xpose.msra.mxu0 0.0
    %2035 = vmatprep.subr.mxu0 0.0
    %2036 = vmatpush2.xpose.msra.mxu0 0.0
    %2037 = vmatprep.subr.mxu0 0.0
    %2038 = vmatpush2.xpose.msra.mxu0 0.0
    %2039 = vmatprep.subr.mxu0 0.0
    %2040 = vmatpush2.xpose.msra.mxu0 0.0
    %2041 = vmatprep.subr.mxu0 0.0
    %2042 = vmatpush2.xpose.msra.mxu0 0.0
    %2043 = vmatprep.subr.mxu0 0.0
    %2044 = vmatpush2.xpose.msra.mxu0 0.0
    %2045 = vmatprep.subr.mxu0 0.0
    %2046 = vmatpush2.xpose.msra.mxu0 0.0
    %2047 = vmatprep.subr.mxu0 0.0
    %2048 = vmatpush2.xpose.msra.mxu0 0.0
    %2049 = vmatprep.subr.mxu0 0.0
    %2050 = vmatpush2.xpose.msra.mxu0 0.0
    %2051 = vmatprep.subr.mxu0 0.0
    %2052 = vmatpush2.xpose.msra.mxu0 0.0
    %2053 = vmatprep.mubr.f32.mxu0 0.0
    %2054 = vmatmul.mubr.f32.gmra.mxu0 %v1985
    %v2055 = vpop.f32.mrf.mxu0
    %v2056 = vadd.f32 0.0, %v2055
    %v2057 = vpop.f32.mrf.mxu0
    %2058 = vdwg.mxu0
    %v2059 = vmul.f32 %v2056, 0.25
    %v2060 = vsel %vm364, %v2059, -inf
    %2061 = vmax.xlane.f32.xlu0 %v2060
    %v2062 = vpop.xlane.xlu0 %2061
    %v2063 = vsub.f32 %v2059, %v2062
    %v2064 = vmul.f32 %v2063, 1.442695
    %v2065 = vpow.pop %v2064
    %v2066 = vsel %vm364, %v2065, 0.0
    %2067 = vadd.xlane.f32.xlu0 %v2066
    %v2068 = vpop.xlane.xlu0 %2067
    %v2069 = vrcp.pop %v2068
    %v2070 = vmul.f32 %v2065, %v2069
    %2071 = vrot.lane.b32.xlu0 %v283, 96
    %v2072 = vpop.permute.xlu0 %2071
    %v2075 = vsel %vm364, %v2070, 0
    %2077 = vmatprep.subr.mxu0 0.0
    %2078 = vmatpush1.msra.mxu0 0.0
    %2079 = vmatprep.subr.mxu0 0.0
    %2080 = vmatpush1.msra.mxu0 0.0
    %2081 = vmatprep.subr.mxu0 0.0
    %2082 = vmatpush1.msra.mxu0 0.0
    %2083 = vmatprep.subr.mxu0 0.0
    %2084 = vmatpush1.msra.mxu0 0.0
    %2085 = vmatprep.subr.mxu0 0.0
    %2086 = vmatpush1.msra.mxu0 0.0
    %2087 = vmatprep.subr.mxu0 0.0
    %2088 = vmatpush1.msra.mxu0 0.0
    %2089 = vmatprep.subr.mxu0 0.0
    %2090 = vmatpush1.msra.mxu0 0.0
    %2091 = vmatprep.subr.mxu0 0.0
    %2092 = vmatpush1.msra.mxu0 0.0
    %2093 = vmatprep.subr.mxu0 0.0
    %2094 = vmatpush1.msra.mxu0 0.0
    %2095 = vmatprep.subr.mxu0 0.0
    %2096 = vmatpush1.msra.mxu0 0.0
    %2097 = vmatprep.subr.mxu0 0.0
    %2098 = vmatpush1.msra.mxu0 0.0
    %2099 = vmatprep.subr.mxu0 0.0
    %2100 = vmatpush1.msra.mxu0 0.0
    %2101 = vmatprep.subr.mxu0 0.0
    %2102 = vmatpush1.msra.mxu0 0.0
    %2103 = vmatprep.subr.mxu0 0.0
    %2104 = vmatpush1.msra.mxu0 0.0
    %2105 = vmatprep.subr.mxu0 0.0
    %2106 = vmatpush1.msra.mxu0 0.0
    %2107 = vmatprep.subr.mxu0 0.0
    %2108 = vmatpush1.msra.mxu0 %v2072
    %2109 = vmatprep.subr.mxu0 0.0
    %2110 = vmatpush2.msra.mxu0 0.0
    %2111 = vmatprep.subr.mxu0 0.0
    %2112 = vmatpush2.msra.mxu0 0.0
    %2113 = vmatprep.subr.mxu0 0.0
    %2114 = vmatpush2.msra.mxu0 0.0
    %2115 = vmatprep.subr.mxu0 0.0
    %2116 = vmatpush2.msra.mxu0 0.0
    %2117 = vmatprep.subr.mxu0 0.0
    %2118 = vmatpush2.msra.mxu0 0.0
    %2119 = vmatprep.subr.mxu0 0.0
    %2120 = vmatpush2.msra.mxu0 0.0
    %2121 = vmatprep.subr.mxu0 0.0
    %2122 = vmatpush2.msra.mxu0 0.0
    %2123 = vmatprep.subr.mxu0 0.0
    %2124 = vmatpush2.msra.mxu0 0.0
    %2125 = vmatprep.subr.mxu0 0.0
    %2126 = vmatpush2.msra.mxu0 0.0
    %2127 = vmatprep.subr.mxu0 0.0
    %2128 = vmatpush2.msra.mxu0 0.0
    %2129 = vmatprep.subr.mxu0 0.0
    %2130 = vmatpush2.msra.mxu0 0.0
    %2131 = vmatprep.subr.mxu0 0.0
    %2132 = vmatpush2.msra.mxu0 0.0
    %2133 = vmatprep.subr.mxu0 0.0
    %2134 = vmatpush2.msra.mxu0 0.0
    %2135 = vmatprep.subr.mxu0 0.0
    %2136 = vmatpush2.msra.mxu0 0.0
    %2137 = vmatprep.subr.mxu0 0.0
    %2138 = vmatpush2.msra.mxu0 0.0
    %2139 = vmatprep.subr.mxu0 0.0
    %2140 = vmatpush2.msra.mxu0 0.0
    %2141 = vmatprep.mubr.f32.mxu0 0.0
    %2142 = vmatmul.mubr.f32.gmra.mxu0 %v2075
    %v2143 = vpop.f32.mrf.mxu0
    %v2144 = vadd.f32 0.0, %v2143
    %v2145 = vpop.f32.mrf.mxu0
    %2146 = vdwg.mxu0
    %2147 = vrot.lane.b32.xlu0 %v207, 80
    %v2148 = vpop.permute.xlu0 %2147
    %2149 = vrot.lane.b32.xlu0 %v209, 80
    %v2150 = vpop.permute.xlu0 %2149
    %v2151 = vsel %vm286, %v2148, 0
    %v2153 = vsel %vm286, %v2150, 0
    %2155 = vmatprep.subr.mxu0 0.0
    %2156 = vmatpush1.xpose.msra.mxu0 0.0
    %2157 = vmatprep.subr.mxu0 0.0
    %2158 = vmatpush1.xpose.msra.mxu0 0.0
    %2159 = vmatprep.subr.mxu0 0.0
    %2160 = vmatpush1.xpose.msra.mxu0 0.0
    %2161 = vmatprep.subr.mxu0 0.0
    %2162 = vmatpush1.xpose.msra.mxu0 0.0
    %2163 = vmatprep.subr.mxu0 0.0
    %2164 = vmatpush1.xpose.msra.mxu0 0.0
    %2165 = vmatprep.subr.mxu0 0.0
    %2166 = vmatpush1.xpose.msra.mxu0 0.0
    %2167 = vmatprep.subr.mxu0 0.0
    %2168 = vmatpush1.xpose.msra.mxu0 0.0
    %2169 = vmatprep.subr.mxu0 0.0
    %2170 = vmatpush1.xpose.msra.mxu0 0.0
    %2171 = vmatprep.subr.mxu0 0.0
    %2172 = vmatpush1.xpose.msra.mxu0 0.0
    %2173 = vmatprep.subr.mxu0 0.0
    %2174 = vmatpush1.xpose.msra.mxu0 0.0
    %2175 = vmatprep.subr.mxu0 0.0
    %2176 = vmatpush1.xpose.msra.mxu0 0.0
    %2177 = vmatprep.subr.mxu0 0.0
    %2178 = vmatpush1.xpose.msra.mxu0 0.0
    %2179 = vmatprep.subr.mxu0 0.0
    %2180 = vmatpush1.xpose.msra.mxu0 0.0
    %2181 = vmatprep.subr.mxu0 0.0
    %2182 = vmatpush1.xpose.msra.mxu0 0.0
    %2183 = vmatprep.subr.mxu0 0.0
    %2184 = vmatpush1.xpose.msra.mxu0 0.0
    %2185 = vmatprep.subr.mxu0 0.0
    %2186 = vmatpush1.xpose.msra.mxu0 %v2153
    %2187 = vmatprep.subr.mxu0 0.0
    %2188 = vmatpush2.xpose.msra.mxu0 0.0
    %2189 = vmatprep.subr.mxu0 0.0
    %2190 = vmatpush2.xpose.msra.mxu0 0.0
    %2191 = vmatprep.subr.mxu0 0.0
    %2192 = vmatpush2.xpose.msra.mxu0 0.0
    %2193 = vmatprep.subr.mxu0 0.0
    %2194 = vmatpush2.xpose.msra.mxu0 0.0
    %2195 = vmatprep.subr.mxu0 0.0
    %2196 = vmatpush2.xpose.msra.mxu0 0.0
    %2197 = vmatprep.subr.mxu0 0.0
    %2198 = vmatpush2.xpose.msra.mxu0 0.0
    %2199 = vmatprep.subr.mxu0 0.0
    %2200 = vmatpush2.xpose.msra.mxu0 0.0
    %2201 = vmatprep.subr.mxu0 0.0
    %2202 = vmatpush2.xpose.msra.mxu0 0.0
    %2203 = vmatprep.subr.mxu0 0.0
    %2204 = vmatpush2.xpose.msra.mxu0 0.0
    %2205 = vmatprep.subr.mxu0 0.0
    %2206 = vmatpush2.xpose.msra.mxu0 0.0
    %2207 = vmatprep.subr.mxu0 0.0
    %2208 = vmatpush2.xpose.msra.mxu0 0.0
    %2209 = vmatprep.subr.mxu0 0.0
    %2210 = vmatpush2.xpose.msra.mxu0 0.0
    %2211 = vmatprep.subr.mxu0 0.0
    %2212 = vmatpush2.xpose.msra.mxu0 0.0
    %2213 = vmatprep.subr.mxu0 0.0
    %2214 = vmatpush2.xpose.msra.mxu0 0.0
    %2215 = vmatprep.subr.mxu0 0.0
    %2216 = vmatpush2.xpose.msra.mxu0 0.0
    %2217 = vmatprep.subr.mxu0 0.0
    %2218 = vmatpush2.xpose.msra.mxu0 0.0
    %2219 = vmatprep.mubr.f32.mxu0 0.0
    %2220 = vmatmul.mubr.f32.gmra.mxu0 %v2151
    %v2221 = vpop.f32.mrf.mxu0
    %v2222 = vadd.f32 0.0, %v2221
    %v2223 = vpop.f32.mrf.mxu0
    %2224 = vdwg.mxu0
    %v2225 = vmul.f32 %v2222, 0.25
    %v2226 = vsel %vm364, %v2225, -inf
    %2227 = vmax.xlane.f32.xlu0 %v2226
    %v2228 = vpop.xlane.xlu0 %2227
    %v2229 = vsub.f32 %v2225, %v2228
    %v2230 = vmul.f32 %v2229, 1.442695
    %v2231 = vpow.pop %v2230
    %v2232 = vsel %vm364, %v2231, 0.0
    %2233 = vadd.xlane.f32.xlu0 %v2232
    %v2234 = vpop.xlane.xlu0 %2233
    %v2235 = vrcp.pop %v2234
    %v2236 = vmul.f32 %v2231, %v2235
    %2237 = vrot.lane.b32.xlu0 %v283, 80
    %v2238 = vpop.permute.xlu0 %2237
    %v2241 = vsel %vm364, %v2236, 0
    %2243 = vmatprep.subr.mxu0 0.0
    %2244 = vmatpush1.msra.mxu0 0.0
    %2245 = vmatprep.subr.mxu0 0.0
    %2246 = vmatpush1.msra.mxu0 0.0
    %2247 = vmatprep.subr.mxu0 0.0
    %2248 = vmatpush1.msra.mxu0 0.0
    %2249 = vmatprep.subr.mxu0 0.0
    %2250 = vmatpush1.msra.mxu0 0.0
    %2251 = vmatprep.subr.mxu0 0.0
    %2252 = vmatpush1.msra.mxu0 0.0
    %2253 = vmatprep.subr.mxu0 0.0
    %2254 = vmatpush1.msra.mxu0 0.0
    %2255 = vmatprep.subr.mxu0 0.0
    %2256 = vmatpush1.msra.mxu0 0.0
    %2257 = vmatprep.subr.mxu0 0.0
    %2258 = vmatpush1.msra.mxu0 0.0
    %2259 = vmatprep.subr.mxu0 0.0
    %2260 = vmatpush1.msra.mxu0 0.0
    %2261 = vmatprep.subr.mxu0 0.0
    %2262 = vmatpush1.msra.mxu0 0.0
    %2263 = vmatprep.subr.mxu0 0.0
    %2264 = vmatpush1.msra.mxu0 0.0
    %2265 = vmatprep.subr.mxu0 0.0
    %2266 = vmatpush1.msra.mxu0 0.0
    %2267 = vmatprep.subr.mxu0 0.0
    %2268 = vmatpush1.msra.mxu0 0.0
    %2269 = vmatprep.subr.mxu0 0.0
    %2270 = vmatpush1.msra.mxu0 0.0
    %2271 = vmatprep.subr.mxu0 0.0
    %2272 = vmatpush1.msra.mxu0 0.0
    %2273 = vmatprep.subr.mxu0 0.0
    %2274 = vmatpush1.msra.mxu0 %v2238
    %2275 = vmatprep.subr.mxu0 0.0
    %2276 = vmatpush2.msra.mxu0 0.0
    %2277 = vmatprep.subr.mxu0 0.0
    %2278 = vmatpush2.msra.mxu0 0.0
    %2279 = vmatprep.subr.mxu0 0.0
    %2280 = vmatpush2.msra.mxu0 0.0
    %2281 = vmatprep.subr.mxu0 0.0
    %2282 = vmatpush2.msra.mxu0 0.0
    %2283 = vmatprep.subr.mxu0 0.0
    %2284 = vmatpush2.msra.mxu0 0.0
    %2285 = vmatprep.subr.mxu0 0.0
    %2286 = vmatpush2.msra.mxu0 0.0
    %2287 = vmatprep.subr.mxu0 0.0
    %2288 = vmatpush2.msra.mxu0 0.0
    %2289 = vmatprep.subr.mxu0 0.0
    %2290 = vmatpush2.msra.mxu0 0.0
    %2291 = vmatprep.subr.mxu0 0.0
    %2292 = vmatpush2.msra.mxu0 0.0
    %2293 = vmatprep.subr.mxu0 0.0
    %2294 = vmatpush2.msra.mxu0 0.0
    %2295 = vmatprep.subr.mxu0 0.0
    %2296 = vmatpush2.msra.mxu0 0.0
    %2297 = vmatprep.subr.mxu0 0.0
    %2298 = vmatpush2.msra.mxu0 0.0
    %2299 = vmatprep.subr.mxu0 0.0
    %2300 = vmatpush2.msra.mxu0 0.0
    %2301 = vmatprep.subr.mxu0 0.0
    %2302 = vmatpush2.msra.mxu0 0.0
    %2303 = vmatprep.subr.mxu0 0.0
    %2304 = vmatpush2.msra.mxu0 0.0
    %2305 = vmatprep.subr.mxu0 0.0
    %2306 = vmatpush2.msra.mxu0 0.0
    %2307 = vmatprep.mubr.f32.mxu0 0.0
    %2308 = vmatmul.mubr.f32.gmra.mxu0 %v2241
    %v2309 = vpop.f32.mrf.mxu0
    %v2310 = vadd.f32 0.0, %v2309
    %v2311 = vpop.f32.mrf.mxu0
    %2312 = vdwg.mxu0
    %2313 = vrot.lane.b32.xlu0 %v207, 64
    %v2314 = vpop.permute.xlu0 %2313
    %2315 = vrot.lane.b32.xlu0 %v209, 64
    %v2316 = vpop.permute.xlu0 %2315
    %v2317 = vsel %vm286, %v2314, 0
    %v2319 = vsel %vm286, %v2316, 0
    %2321 = vmatprep.subr.mxu0 0.0
    %2322 = vmatpush1.xpose.msra.mxu0 0.0
    %2323 = vmatprep.subr.mxu0 0.0
    %2324 = vmatpush1.xpose.msra.mxu0 0.0
    %2325 = vmatprep.subr.mxu0 0.0
    %2326 = vmatpush1.xpose.msra.mxu0 0.0
    %2327 = vmatprep.subr.mxu0 0.0
    %2328 = vmatpush1.xpose.msra.mxu0 0.0
    %2329 = vmatprep.subr.mxu0 0.0
    %2330 = vmatpush1.xpose.msra.mxu0 0.0
    %2331 = vmatprep.subr.mxu0 0.0
    %2332 = vmatpush1.xpose.msra.mxu0 0.0
    %2333 = vmatprep.subr.mxu0 0.0
    %2334 = vmatpush1.xpose.msra.mxu0 0.0
    %2335 = vmatprep.subr.mxu0 0.0
    %2336 = vmatpush1.xpose.msra.mxu0 0.0
    %2337 = vmatprep.subr.mxu0 0.0
    %2338 = vmatpush1.xpose.msra.mxu0 0.0
    %2339 = vmatprep.subr.mxu0 0.0
    %2340 = vmatpush1.xpose.msra.mxu0 0.0
    %2341 = vmatprep.subr.mxu0 0.0
    %2342 = vmatpush1.xpose.msra.mxu0 0.0
    %2343 = vmatprep.subr.mxu0 0.0
    %2344 = vmatpush1.xpose.msra.mxu0 0.0
    %2345 = vmatprep.subr.mxu0 0.0
    %2346 = vmatpush1.xpose.msra.mxu0 0.0
    %2347 = vmatprep.subr.mxu0 0.0
    %2348 = vmatpush1.xpose.msra.mxu0 0.0
    %2349 = vmatprep.subr.mxu0 0.0
    %2350 = vmatpush1.xpose.msra.mxu0 0.0
    %2351 = vmatprep.subr.mxu0 0.0
    %2352 = vmatpush1.xpose.msra.mxu0 %v2319
    %2353 = vmatprep.subr.mxu0 0.0
    %2354 = vmatpush2.xpose.msra.mxu0 0.0
    %2355 = vmatprep.subr.mxu0 0.0
    %2356 = vmatpush2.xpose.msra.mxu0 0.0
    %2357 = vmatprep.subr.mxu0 0.0
    %2358 = vmatpush2.xpose.msra.mxu0 0.0
    %2359 = vmatprep.subr.mxu0 0.0
    %2360 = vmatpush2.xpose.msra.mxu0 0.0
    %2361 = vmatprep.subr.mxu0 0.0
    %2362 = vmatpush2.xpose.msra.mxu0 0.0
    %2363 = vmatprep.subr.mxu0 0.0
    %2364 = vmatpush2.xpose.msra.mxu0 0.0
    %2365 = vmatprep.subr.mxu0 0.0
    %2366 = vmatpush2.xpose.msra.mxu0 0.0
    %2367 = vmatprep.subr.mxu0 0.0
    %2368 = vmatpush2.xpose.msra.mxu0 0.0
    %2369 = vmatprep.subr.mxu0 0.0
    %2370 = vmatpush2.xpose.msra.mxu0 0.0
    %2371 = vmatprep.subr.mxu0 0.0
    %2372 = vmatpush2.xpose.msra.mxu0 0.0
    %2373 = vmatprep.subr.mxu0 0.0
    %2374 = vmatpush2.xpose.msra.mxu0 0.0
    %2375 = vmatprep.subr.mxu0 0.0
    %2376 = vmatpush2.xpose.msra.mxu0 0.0
    %2377 = vmatprep.subr.mxu0 0.0
    %2378 = vmatpush2.xpose.msra.mxu0 0.0
    %2379 = vmatprep.subr.mxu0 0.0
    %2380 = vmatpush2.xpose.msra.mxu0 0.0
    %2381 = vmatprep.subr.mxu0 0.0
    %2382 = vmatpush2.xpose.msra.mxu0 0.0
    %2383 = vmatprep.subr.mxu0 0.0
    %2384 = vmatpush2.xpose.msra.mxu0 0.0
    %2385 = vmatprep.mubr.f32.mxu0 0.0
    %2386 = vmatmul.mubr.f32.gmra.mxu0 %v2317
    %v2387 = vpop.f32.mrf.mxu0
    %v2388 = vadd.f32 0.0, %v2387
    %v2389 = vpop.f32.mrf.mxu0
    %2390 = vdwg.mxu0
    %v2391 = vmul.f32 %v2388, 0.25
    %v2392 = vsel %vm364, %v2391, -inf
    %2393 = vmax.xlane.f32.xlu0 %v2392
    %v2394 = vpop.xlane.xlu0 %2393
    %v2395 = vsub.f32 %v2391, %v2394
    %v2396 = vmul.f32 %v2395, 1.442695
    %v2397 = vpow.pop %v2396
    %v2398 = vsel %vm364, %v2397, 0.0
    %2399 = vadd.xlane.f32.xlu0 %v2398
    %v2400 = vpop.xlane.xlu0 %2399
    %v2401 = vrcp.pop %v2400
    %v2402 = vmul.f32 %v2397, %v2401
    %2403 = vrot.lane.b32.xlu0 %v283, 64
    %v2404 = vpop.permute.xlu0 %2403
    %v2407 = vsel %vm364, %v2402, 0
    %2409 = vmatprep.subr.mxu0 0.0
    %2410 = vmatpush1.msra.mxu0 0.0
    %2411 = vmatprep.subr.mxu0 0.0
    %2412 = vmatpush1.msra.mxu0 0.0
    %2413 = vmatprep.subr.mxu0 0.0
    %2414 = vmatpush1.msra.mxu0 0.0
    %2415 = vmatprep.subr.mxu0 0.0
    %2416 = vmatpush1.msra.mxu0 0.0
    %2417 = vmatprep.subr.mxu0 0.0
    %2418 = vmatpush1.msra.mxu0 0.0
    %2419 = vmatprep.subr.mxu0 0.0
    %2420 = vmatpush1.msra.mxu0 0.0
    %2421 = vmatprep.subr.mxu0 0.0
    %2422 = vmatpush1.msra.mxu0 0.0
    %2423 = vmatprep.subr.mxu0 0.0
    %2424 = vmatpush1.msra.mxu0 0.0
    %2425 = vmatprep.subr.mxu0 0.0
    %2426 = vmatpush1.msra.mxu0 0.0
    %2427 = vmatprep.subr.mxu0 0.0
    %2428 = vmatpush1.msra.mxu0 0.0
    %2429 = vmatprep.subr.mxu0 0.0
    %2430 = vmatpush1.msra.mxu0 0.0
    %2431 = vmatprep.subr.mxu0 0.0
    %2432 = vmatpush1.msra.mxu0 0.0
    %2433 = vmatprep.subr.mxu0 0.0
    %2434 = vmatpush1.msra.mxu0 0.0
    %2435 = vmatprep.subr.mxu0 0.0
    %2436 = vmatpush1.msra.mxu0 0.0
    %2437 = vmatprep.subr.mxu0 0.0
    %2438 = vmatpush1.msra.mxu0 0.0
    %2439 = vmatprep.subr.mxu0 0.0
    %2440 = vmatpush1.msra.mxu0 %v2404
    %2441 = vmatprep.subr.mxu0 0.0
    %2442 = vmatpush2.msra.mxu0 0.0
    %2443 = vmatprep.subr.mxu0 0.0
    %2444 = vmatpush2.msra.mxu0 0.0
    %2445 = vmatprep.subr.mxu0 0.0
    %2446 = vmatpush2.msra.mxu0 0.0
    %2447 = vmatprep.subr.mxu0 0.0
    %2448 = vmatpush2.msra.mxu0 0.0
    %2449 = vmatprep.subr.mxu0 0.0
    %2450 = vmatpush2.msra.mxu0 0.0
    %2451 = vmatprep.subr.mxu0 0.0
    %2452 = vmatpush2.msra.mxu0 0.0
    %2453 = vmatprep.subr.mxu0 0.0
    %2454 = vmatpush2.msra.mxu0 0.0
    %2455 = vmatprep.subr.mxu0 0.0
    %2456 = vmatpush2.msra.mxu0 0.0
    %2457 = vmatprep.subr.mxu0 0.0
    %2458 = vmatpush2.msra.mxu0 0.0
    %2459 = vmatprep.subr.mxu0 0.0
    %2460 = vmatpush2.msra.mxu0 0.0
    %2461 = vmatprep.subr.mxu0 0.0
    %2462 = vmatpush2.msra.mxu0 0.0
    %2463 = vmatprep.subr.mxu0 0.0
    %2464 = vmatpush2.msra.mxu0 0.0
    %2465 = vmatprep.subr.mxu0 0.0
    %2466 = vmatpush2.msra.mxu0 0.0
    %2467 = vmatprep.subr.mxu0 0.0
    %2468 = vmatpush2.msra.mxu0 0.0
    %2469 = vmatprep.subr.mxu0 0.0
    %2470 = vmatpush2.msra.mxu0 0.0
    %2471 = vmatprep.subr.mxu0 0.0
    %2472 = vmatpush2.msra.mxu0 0.0
    %2473 = vmatprep.mubr.f32.mxu0 0.0
    %2474 = vmatmul.mubr.f32.gmra.mxu0 %v2407
    %v2475 = vpop.f32.mrf.mxu0
    %v2476 = vadd.f32 0.0, %v2475
    %v2477 = vpop.f32.mrf.mxu0
    %2478 = vdwg.mxu0
    %2479 = vrot.lane.b32.xlu0 %v207, 48
    %v2480 = vpop.permute.xlu0 %2479
    %2481 = vrot.lane.b32.xlu0 %v209, 48
    %v2482 = vpop.permute.xlu0 %2481
    %v2483 = vsel %vm286, %v2480, 0
    %v2485 = vsel %vm286, %v2482, 0
    %2487 = vmatprep.subr.mxu0 0.0
    %2488 = vmatpush1.xpose.msra.mxu0 0.0
    %2489 = vmatprep.subr.mxu0 0.0
    %2490 = vmatpush1.xpose.msra.mxu0 0.0
    %2491 = vmatprep.subr.mxu0 0.0
    %2492 = vmatpush1.xpose.msra.mxu0 0.0
    %2493 = vmatprep.subr.mxu0 0.0
    %2494 = vmatpush1.xpose.msra.mxu0 0.0
    %2495 = vmatprep.subr.mxu0 0.0
    %2496 = vmatpush1.xpose.msra.mxu0 0.0
    %2497 = vmatprep.subr.mxu0 0.0
    %2498 = vmatpush1.xpose.msra.mxu0 0.0
    %2499 = vmatprep.subr.mxu0 0.0
    %2500 = vmatpush1.xpose.msra.mxu0 0.0
    %2501 = vmatprep.subr.mxu0 0.0
    %2502 = vmatpush1.xpose.msra.mxu0 0.0
    %2503 = vmatprep.subr.mxu0 0.0
    %2504 = vmatpush1.xpose.msra.mxu0 0.0
    %2505 = vmatprep.subr.mxu0 0.0
    %2506 = vmatpush1.xpose.msra.mxu0 0.0
    %2507 = vmatprep.subr.mxu0 0.0
    %2508 = vmatpush1.xpose.msra.mxu0 0.0
    %2509 = vmatprep.subr.mxu0 0.0
    %2510 = vmatpush1.xpose.msra.mxu0 0.0
    %2511 = vmatprep.subr.mxu0 0.0
    %2512 = vmatpush1.xpose.msra.mxu0 0.0
    %2513 = vmatprep.subr.mxu0 0.0
    %2514 = vmatpush1.xpose.msra.mxu0 0.0
    %2515 = vmatprep.subr.mxu0 0.0
    %2516 = vmatpush1.xpose.msra.mxu0 0.0
    %2517 = vmatprep.subr.mxu0 0.0
    %2518 = vmatpush1.xpose.msra.mxu0 %v2485
    %2519 = vmatprep.subr.mxu0 0.0
    %2520 = vmatpush2.xpose.msra.mxu0 0.0
    %2521 = vmatprep.subr.mxu0 0.0
    %2522 = vmatpush2.xpose.msra.mxu0 0.0
    %2523 = vmatprep.subr.mxu0 0.0
    %2524 = vmatpush2.xpose.msra.mxu0 0.0
    %2525 = vmatprep.subr.mxu0 0.0
    %2526 = vmatpush2.xpose.msra.mxu0 0.0
    %2527 = vmatprep.subr.mxu0 0.0
    %2528 = vmatpush2.xpose.msra.mxu0 0.0
    %2529 = vmatprep.subr.mxu0 0.0
    %2530 = vmatpush2.xpose.msra.mxu0 0.0
    %2531 = vmatprep.subr.mxu0 0.0
    %2532 = vmatpush2.xpose.msra.mxu0 0.0
    %2533 = vmatprep.subr.mxu0 0.0
    %2534 = vmatpush2.xpose.msra.mxu0 0.0
    %2535 = vmatprep.subr.mxu0 0.0
    %2536 = vmatpush2.xpose.msra.mxu0 0.0
    %2537 = vmatprep.subr.mxu0 0.0
    %2538 = vmatpush2.xpose.msra.mxu0 0.0
    %2539 = vmatprep.subr.mxu0 0.0
    %2540 = vmatpush2.xpose.msra.mxu0 0.0
    %2541 = vmatprep.subr.mxu0 0.0
    %2542 = vmatpush2.xpose.msra.mxu0 0.0
    %2543 = vmatprep.subr.mxu0 0.0
    %2544 = vmatpush2.xpose.msra.mxu0 0.0
    %2545 = vmatprep.subr.mxu0 0.0
    %2546 = vmatpush2.xpose.msra.mxu0 0.0
    %2547 = vmatprep.subr.mxu0 0.0
    %2548 = vmatpush2.xpose.msra.mxu0 0.0
    %2549 = vmatprep.subr.mxu0 0.0
    %2550 = vmatpush2.xpose.msra.mxu0 0.0
    %2551 = vmatprep.mubr.f32.mxu0 0.0
    %2552 = vmatmul.mubr.f32.gmra.mxu0 %v2483
    %v2553 = vpop.f32.mrf.mxu0
    %v2554 = vadd.f32 0.0, %v2553
    %v2555 = vpop.f32.mrf.mxu0
    %2556 = vdwg.mxu0
    %v2557 = vmul.f32 %v2554, 0.25
    %v2558 = vsel %vm364, %v2557, -inf
    %2559 = vmax.xlane.f32.xlu0 %v2558
    %v2560 = vpop.xlane.xlu0 %2559
    %v2561 = vsub.f32 %v2557, %v2560
    %v2562 = vmul.f32 %v2561, 1.442695
    %v2563 = vpow.pop %v2562
    %v2564 = vsel %vm364, %v2563, 0.0
    %2565 = vadd.xlane.f32.xlu0 %v2564
    %v2566 = vpop.xlane.xlu0 %2565
    %v2567 = vrcp.pop %v2566
    %v2568 = vmul.f32 %v2563, %v2567
    %2569 = vrot.lane.b32.xlu0 %v283, 48
    %v2570 = vpop.permute.xlu0 %2569
    %v2573 = vsel %vm364, %v2568, 0
    %2575 = vmatprep.subr.mxu0 0.0
    %2576 = vmatpush1.msra.mxu0 0.0
    %2577 = vmatprep.subr.mxu0 0.0
    %2578 = vmatpush1.msra.mxu0 0.0
    %2579 = vmatprep.subr.mxu0 0.0
    %2580 = vmatpush1.msra.mxu0 0.0
    %2581 = vmatprep.subr.mxu0 0.0
    %2582 = vmatpush1.msra.mxu0 0.0
    %2583 = vmatprep.subr.mxu0 0.0
    %2584 = vmatpush1.msra.mxu0 0.0
    %2585 = vmatprep.subr.mxu0 0.0
    %2586 = vmatpush1.msra.mxu0 0.0
    %2587 = vmatprep.subr.mxu0 0.0
    %2588 = vmatpush1.msra.mxu0 0.0
    %2589 = vmatprep.subr.mxu0 0.0
    %2590 = vmatpush1.msra.mxu0 0.0
    %2591 = vmatprep.subr.mxu0 0.0
    %2592 = vmatpush1.msra.mxu0 0.0
    %2593 = vmatprep.subr.mxu0 0.0
    %2594 = vmatpush1.msra.mxu0 0.0
    %2595 = vmatprep.subr.mxu0 0.0
    %2596 = vmatpush1.msra.mxu0 0.0
    %2597 = vmatprep.subr.mxu0 0.0
    %2598 = vmatpush1.msra.mxu0 0.0
    %2599 = vmatprep.subr.mxu0 0.0
    %2600 = vmatpush1.msra.mxu0 0.0
    %2601 = vmatprep.subr.mxu0 0.0
    %2602 = vmatpush1.msra.mxu0 0.0
    %2603 = vmatprep.subr.mxu0 0.0
    %2604 = vmatpush1.msra.mxu0 0.0
    %2605 = vmatprep.subr.mxu0 0.0
    %2606 = vmatpush1.msra.mxu0 %v2570
    %2607 = vmatprep.subr.mxu0 0.0
    %2608 = vmatpush2.msra.mxu0 0.0
    %2609 = vmatprep.subr.mxu0 0.0
    %2610 = vmatpush2.msra.mxu0 0.0
    %2611 = vmatprep.subr.mxu0 0.0
    %2612 = vmatpush2.msra.mxu0 0.0
    %2613 = vmatprep.subr.mxu0 0.0
    %2614 = vmatpush2.msra.mxu0 0.0
    %2615 = vmatprep.subr.mxu0 0.0
    %2616 = vmatpush2.msra.mxu0 0.0
    %2617 = vmatprep.subr.mxu0 0.0
    %2618 = vmatpush2.msra.mxu0 0.0
    %2619 = vmatprep.subr.mxu0 0.0
    %2620 = vmatpush2.msra.mxu0 0.0
    %2621 = vmatprep.subr.mxu0 0.0
    %2622 = vmatpush2.msra.mxu0 0.0
    %2623 = vmatprep.subr.mxu0 0.0
    %2624 = vmatpush2.msra.mxu0 0.0
    %2625 = vmatprep.subr.mxu0 0.0
    %2626 = vmatpush2.msra.mxu0 0.0
    %2627 = vmatprep.subr.mxu0 0.0
    %2628 = vmatpush2.msra.mxu0 0.0
    %2629 = vmatprep.subr.mxu0 0.0
    %2630 = vmatpush2.msra.mxu0 0.0
    %2631 = vmatprep.subr.mxu0 0.0
    %2632 = vmatpush2.msra.mxu0 0.0
    %2633 = vmatprep.subr.mxu0 0.0
    %2634 = vmatpush2.msra.mxu0 0.0
    %2635 = vmatprep.subr.mxu0 0.0
    %2636 = vmatpush2.msra.mxu0 0.0
    %2637 = vmatprep.subr.mxu0 0.0
    %2638 = vmatpush2.msra.mxu0 0.0
    %2639 = vmatprep.mubr.f32.mxu0 0.0
    %2640 = vmatmul.mubr.f32.gmra.mxu0 %v2573
    %v2641 = vpop.f32.mrf.mxu0
    %v2642 = vadd.f32 0.0, %v2641
    %v2643 = vpop.f32.mrf.mxu0
    %2644 = vdwg.mxu0
    %2645 = vrot.lane.b32.xlu0 %v207, 32
    %v2646 = vpop.permute.xlu0 %2645
    %2647 = vrot.lane.b32.xlu0 %v209, 32
    %v2648 = vpop.permute.xlu0 %2647
    %v2649 = vsel %vm286, %v2646, 0
    %v2651 = vsel %vm286, %v2648, 0
    %2653 = vmatprep.subr.mxu0 0.0
    %2654 = vmatpush1.xpose.msra.mxu0 0.0
    %2655 = vmatprep.subr.mxu0 0.0
    %2656 = vmatpush1.xpose.msra.mxu0 0.0
    %2657 = vmatprep.subr.mxu0 0.0
    %2658 = vmatpush1.xpose.msra.mxu0 0.0
    %2659 = vmatprep.subr.mxu0 0.0
    %2660 = vmatpush1.xpose.msra.mxu0 0.0
    %2661 = vmatprep.subr.mxu0 0.0
    %2662 = vmatpush1.xpose.msra.mxu0 0.0
    %2663 = vmatprep.subr.mxu0 0.0
    %2664 = vmatpush1.xpose.msra.mxu0 0.0
    %2665 = vmatprep.subr.mxu0 0.0
    %2666 = vmatpush1.xpose.msra.mxu0 0.0
    %2667 = vmatprep.subr.mxu0 0.0
    %2668 = vmatpush1.xpose.msra.mxu0 0.0
    %2669 = vmatprep.subr.mxu0 0.0
    %2670 = vmatpush1.xpose.msra.mxu0 0.0
    %2671 = vmatprep.subr.mxu0 0.0
    %2672 = vmatpush1.xpose.msra.mxu0 0.0
    %2673 = vmatprep.subr.mxu0 0.0
    %2674 = vmatpush1.xpose.msra.mxu0 0.0
    %2675 = vmatprep.subr.mxu0 0.0
    %2676 = vmatpush1.xpose.msra.mxu0 0.0
    %2677 = vmatprep.subr.mxu0 0.0
    %2678 = vmatpush1.xpose.msra.mxu0 0.0
    %2679 = vmatprep.subr.mxu0 0.0
    %2680 = vmatpush1.xpose.msra.mxu0 0.0
    %2681 = vmatprep.subr.mxu0 0.0
    %2682 = vmatpush1.xpose.msra.mxu0 0.0
    %2683 = vmatprep.subr.mxu0 0.0
    %2684 = vmatpush1.xpose.msra.mxu0 %v2651
    %2685 = vmatprep.subr.mxu0 0.0
    %2686 = vmatpush2.xpose.msra.mxu0 0.0
    %2687 = vmatprep.subr.mxu0 0.0
    %2688 = vmatpush2.xpose.msra.mxu0 0.0
    %2689 = vmatprep.subr.mxu0 0.0
    %2690 = vmatpush2.xpose.msra.mxu0 0.0
    %2691 = vmatprep.subr.mxu0 0.0
    %2692 = vmatpush2.xpose.msra.mxu0 0.0
    %2693 = vmatprep.subr.mxu0 0.0
    %2694 = vmatpush2.xpose.msra.mxu0 0.0
    %2695 = vmatprep.subr.mxu0 0.0
    %2696 = vmatpush2.xpose.msra.mxu0 0.0
    %2697 = vmatprep.subr.mxu0 0.0
    %2698 = vmatpush2.xpose.msra.mxu0 0.0
    %2699 = vmatprep.subr.mxu0 0.0
    %2700 = vmatpush2.xpose.msra.mxu0 0.0
    %2701 = vmatprep.subr.mxu0 0.0
    %2702 = vmatpush2.xpose.msra.mxu0 0.0
    %2703 = vmatprep.subr.mxu0 0.0
    %2704 = vmatpush2.xpose.msra.mxu0 0.0
    %2705 = vmatprep.subr.mxu0 0.0
    %2706 = vmatpush2.xpose.msra.mxu0 0.0
    %2707 = vmatprep.subr.mxu0 0.0
    %2708 = vmatpush2.xpose.msra.mxu0 0.0
    %2709 = vmatprep.subr.mxu0 0.0
    %2710 = vmatpush2.xpose.msra.mxu0 0.0
    %2711 = vmatprep.subr.mxu0 0.0
    %2712 = vmatpush2.xpose.msra.mxu0 0.0
    %2713 = vmatprep.subr.mxu0 0.0
    %2714 = vmatpush2.xpose.msra.mxu0 0.0
    %2715 = vmatprep.subr.mxu0 0.0
    %2716 = vmatpush2.xpose.msra.mxu0 0.0
    %2717 = vmatprep.mubr.f32.mxu0 0.0
    %2718 = vmatmul.mubr.f32.gmra.mxu0 %v2649
    %v2719 = vpop.f32.mrf.mxu0
    %v2720 = vadd.f32 0.0, %v2719
    %v2721 = vpop.f32.mrf.mxu0
    %2722 = vdwg.mxu0
    %v2723 = vmul.f32 %v2720, 0.25
    %v2724 = vsel %vm364, %v2723, -inf
    %2725 = vmax.xlane.f32.xlu0 %v2724
    %v2726 = vpop.xlane.xlu0 %2725
    %v2727 = vsub.f32 %v2723, %v2726
    %v2728 = vmul.f32 %v2727, 1.442695
    %v2729 = vpow.pop %v2728
    %v2730 = vsel %vm364, %v2729, 0.0
    %2731 = vadd.xlane.f32.xlu0 %v2730
    %v2732 = vpop.xlane.xlu0 %2731
    %v2733 = vrcp.pop %v2732
    %v2734 = vmul.f32 %v2729, %v2733
    %2735 = vrot.lane.b32.xlu0 %v283, 32
    %v2736 = vpop.permute.xlu0 %2735
    %v2739 = vsel %vm364, %v2734, 0
    %2741 = vmatprep.subr.mxu0 0.0
    %2742 = vmatpush1.msra.mxu0 0.0
    %2743 = vmatprep.subr.mxu0 0.0
    %2744 = vmatpush1.msra.mxu0 0.0
    %2745 = vmatprep.subr.mxu0 0.0
    %2746 = vmatpush1.msra.mxu0 0.0
    %2747 = vmatprep.subr.mxu0 0.0
    %2748 = vmatpush1.msra.mxu0 0.0
    %2749 = vmatprep.subr.mxu0 0.0
    %2750 = vmatpush1.msra.mxu0 0.0
    %2751 = vmatprep.subr.mxu0 0.0
    %2752 = vmatpush1.msra.mxu0 0.0
    %2753 = vmatprep.subr.mxu0 0.0
    %2754 = vmatpush1.msra.mxu0 0.0
    %2755 = vmatprep.subr.mxu0 0.0
    %2756 = vmatpush1.msra.mxu0 0.0
    %2757 = vmatprep.subr.mxu0 0.0
    %2758 = vmatpush1.msra.mxu0 0.0
    %2759 = vmatprep.subr.mxu0 0.0
    %2760 = vmatpush1.msra.mxu0 0.0
    %2761 = vmatprep.subr.mxu0 0.0
    %2762 = vmatpush1.msra.mxu0 0.0
    %2763 = vmatprep.subr.mxu0 0.0
    %2764 = vmatpush1.msra.mxu0 0.0
    %2765 = vmatprep.subr.mxu0 0.0
    %2766 = vmatpush1.msra.mxu0 0.0
    %2767 = vmatprep.subr.mxu0 0.0
    %2768 = vmatpush1.msra.mxu0 0.0
    %2769 = vmatprep.subr.mxu0 0.0
    %2770 = vmatpush1.msra.mxu0 0.0
    %2771 = vmatprep.subr.mxu0 0.0
    %2772 = vmatpush1.msra.mxu0 %v2736
    %2773 = vmatprep.subr.mxu0 0.0
    %2774 = vmatpush2.msra.mxu0 0.0
    %2775 = vmatprep.subr.mxu0 0.0
    %2776 = vmatpush2.msra.mxu0 0.0
    %2777 = vmatprep.subr.mxu0 0.0
    %2778 = vmatpush2.msra.mxu0 0.0
    %2779 = vmatprep.subr.mxu0 0.0
    %2780 = vmatpush2.msra.mxu0 0.0
    %2781 = vmatprep.subr.mxu0 0.0
    %2782 = vmatpush2.msra.mxu0 0.0
    %2783 = vmatprep.subr.mxu0 0.0
    %2784 = vmatpush2.msra.mxu0 0.0
    %2785 = vmatprep.subr.mxu0 0.0
    %2786 = vmatpush2.msra.mxu0 0.0
    %2787 = vmatprep.subr.mxu0 0.0
    %2788 = vmatpush2.msra.mxu0 0.0
    %2789 = vmatprep.subr.mxu0 0.0
    %2790 = vmatpush2.msra.mxu0 0.0
    %2791 = vmatprep.subr.mxu0 0.0
    %2792 = vmatpush2.msra.mxu0 0.0
    %2793 = vmatprep.subr.mxu0 0.0
    %2794 = vmatpush2.msra.mxu0 0.0
    %2795 = vmatprep.subr.mxu0 0.0
    %2796 = vmatpush2.msra.mxu0 0.0
    %2797 = vmatprep.subr.mxu0 0.0
    %2798 = vmatpush2.msra.mxu0 0.0
    %2799 = vmatprep.subr.mxu0 0.0
    %2800 = vmatpush2.msra.mxu0 0.0
    %2801 = vmatprep.subr.mxu0 0.0
    %2802 = vmatpush2.msra.mxu0 0.0
    %2803 = vmatprep.subr.mxu0 0.0
    %2804 = vmatpush2.msra.mxu0 0.0
    %2805 = vmatprep.mubr.f32.mxu0 0.0
    %2806 = vmatmul.mubr.f32.gmra.mxu0 %v2739
    %v2807 = vpop.f32.mrf.mxu0
    %v2808 = vadd.f32 0.0, %v2807
    %v2809 = vpop.f32.mrf.mxu0
    %2810 = vdwg.mxu0
    %2811 = vrot.lane.b32.xlu0 %v207, 16
    %v2812 = vpop.permute.xlu0 %2811
    %2813 = vrot.lane.b32.xlu0 %v209, 16
    %v2814 = vpop.permute.xlu0 %2813
    %v2815 = vsel %vm286, %v2812, 0
    %v2817 = vsel %vm286, %v2814, 0
    %2819 = vmatprep.subr.mxu0 0.0
    %2820 = vmatpush1.xpose.msra.mxu0 0.0
    %2821 = vmatprep.subr.mxu0 0.0
    %2822 = vmatpush1.xpose.msra.mxu0 0.0
    %2823 = vmatprep.subr.mxu0 0.0
    %2824 = vmatpush1.xpose.msra.mxu0 0.0
    %2825 = vmatprep.subr.mxu0 0.0
    %2826 = vmatpush1.xpose.msra.mxu0 0.0
    %2827 = vmatprep.subr.mxu0 0.0
    %2828 = vmatpush1.xpose.msra.mxu0 0.0
    %2829 = vmatprep.subr.mxu0 0.0
    %2830 = vmatpush1.xpose.msra.mxu0 0.0
    %2831 = vmatprep.subr.mxu0 0.0
    %2832 = vmatpush1.xpose.msra.mxu0 0.0
    %2833 = vmatprep.subr.mxu0 0.0
    %2834 = vmatpush1.xpose.msra.mxu0 0.0
    %2835 = vmatprep.subr.mxu0 0.0
    %2836 = vmatpush1.xpose.msra.mxu0 0.0
    %2837 = vmatprep.subr.mxu0 0.0
    %2838 = vmatpush1.xpose.msra.mxu0 0.0
    %2839 = vmatprep.subr.mxu0 0.0
    %2840 = vmatpush1.xpose.msra.mxu0 0.0
    %2841 = vmatprep.subr.mxu0 0.0
    %2842 = vmatpush1.xpose.msra.mxu0 0.0
    %2843 = vmatprep.subr.mxu0 0.0
    %2844 = vmatpush1.xpose.msra.mxu0 0.0
    %2845 = vmatprep.subr.mxu0 0.0
    %2846 = vmatpush1.xpose.msra.mxu0 0.0
    %2847 = vmatprep.subr.mxu0 0.0
    %2848 = vmatpush1.xpose.msra.mxu0 0.0
    %2849 = vmatprep.subr.mxu0 0.0
    %2850 = vmatpush1.xpose.msra.mxu0 %v2817
    %2851 = vmatprep.subr.mxu0 0.0
    %2852 = vmatpush2.xpose.msra.mxu0 0.0
    %2853 = vmatprep.subr.mxu0 0.0
    %2854 = vmatpush2.xpose.msra.mxu0 0.0
    %2855 = vmatprep.subr.mxu0 0.0
    %2856 = vmatpush2.xpose.msra.mxu0 0.0
    %2857 = vmatprep.subr.mxu0 0.0
    %2858 = vmatpush2.xpose.msra.mxu0 0.0
    %2859 = vmatprep.subr.mxu0 0.0
    %2860 = vmatpush2.xpose.msra.mxu0 0.0
    %2861 = vmatprep.subr.mxu0 0.0
    %2862 = vmatpush2.xpose.msra.mxu0 0.0
    %2863 = vmatprep.subr.mxu0 0.0
    %2864 = vmatpush2.xpose.msra.mxu0 0.0
    %2865 = vmatprep.subr.mxu0 0.0
    %2866 = vmatpush2.xpose.msra.mxu0 0.0
    %2867 = vmatprep.subr.mxu0 0.0
    %2868 = vmatpush2.xpose.msra.mxu0 0.0
    %2869 = vmatprep.subr.mxu0 0.0
    %2870 = vmatpush2.xpose.msra.mxu0 0.0
    %2871 = vmatprep.subr.mxu0 0.0
    %2872 = vmatpush2.xpose.msra.mxu0 0.0
    %2873 = vmatprep.subr.mxu0 0.0
    %2874 = vmatpush2.xpose.msra.mxu0 0.0
    %2875 = vmatprep.subr.mxu0 0.0
    %2876 = vmatpush2.xpose.msra.mxu0 0.0
    %2877 = vmatprep.subr.mxu0 0.0
    %2878 = vmatpush2.xpose.msra.mxu0 0.0
    %2879 = vmatprep.subr.mxu0 0.0
    %2880 = vmatpush2.xpose.msra.mxu0 0.0
    %2881 = vmatprep.subr.mxu0 0.0
    %2882 = vmatpush2.xpose.msra.mxu0 0.0
    %2883 = vmatprep.mubr.f32.mxu0 0.0
    %2884 = vmatmul.mubr.f32.gmra.mxu0 %v2815
    %v2885 = vpop.f32.mrf.mxu0
    %v2886 = vadd.f32 0.0, %v2885
    %v2887 = vpop.f32.mrf.mxu0
    %2888 = vdwg.mxu0
    %v2889 = vmul.f32 %v2886, 0.25
    %v2890 = vsel %vm364, %v2889, -inf
    %2891 = vmax.xlane.f32.xlu0 %v2890
    %v2892 = vpop.xlane.xlu0 %2891
    %v2893 = vsub.f32 %v2889, %v2892
    %v2894 = vmul.f32 %v2893, 1.442695
    %v2895 = vpow.pop %v2894
    %v2896 = vsel %vm364, %v2895, 0.0
    %2897 = vadd.xlane.f32.xlu0 %v2896
    %v2898 = vpop.xlane.xlu0 %2897
    %v2899 = vrcp.pop %v2898
    %v2900 = vmul.f32 %v2895, %v2899
    %2901 = vrot.lane.b32.xlu0 %v283, 16
    %v2902 = vpop.permute.xlu0 %2901
    %v2905 = vsel %vm364, %v2900, 0
    %2907 = vmatprep.subr.mxu0 0.0
    %2908 = vmatpush1.msra.mxu0 0.0
    %2909 = vmatprep.subr.mxu0 0.0
    %2910 = vmatpush1.msra.mxu0 0.0
    %2911 = vmatprep.subr.mxu0 0.0
    %2912 = vmatpush1.msra.mxu0 0.0
    %2913 = vmatprep.subr.mxu0 0.0
    %2914 = vmatpush1.msra.mxu0 0.0
    %2915 = vmatprep.subr.mxu0 0.0
    %2916 = vmatpush1.msra.mxu0 0.0
    %2917 = vmatprep.subr.mxu0 0.0
    %2918 = vmatpush1.msra.mxu0 0.0
    %2919 = vmatprep.subr.mxu0 0.0
    %2920 = vmatpush1.msra.mxu0 0.0
    %2921 = vmatprep.subr.mxu0 0.0
    %2922 = vmatpush1.msra.mxu0 0.0
    %2923 = vmatprep.subr.mxu0 0.0
    %2924 = vmatpush1.msra.mxu0 0.0
    %2925 = vmatprep.subr.mxu0 0.0
    %2926 = vmatpush1.msra.mxu0 0.0
    %2927 = vmatprep.subr.mxu0 0.0
    %2928 = vmatpush1.msra.mxu0 0.0
    %2929 = vmatprep.subr.mxu0 0.0
    %2930 = vmatpush1.msra.mxu0 0.0
    %2931 = vmatprep.subr.mxu0 0.0
    %2932 = vmatpush1.msra.mxu0 0.0
    %2933 = vmatprep.subr.mxu0 0.0
    %2934 = vmatpush1.msra.mxu0 0.0
    %2935 = vmatprep.subr.mxu0 0.0
    %2936 = vmatpush1.msra.mxu0 0.0
    %2937 = vmatprep.subr.mxu0 0.0
    %2938 = vmatpush1.msra.mxu0 %v2902
    %2939 = vmatprep.subr.mxu0 0.0
    %2940 = vmatpush2.msra.mxu0 0.0
    %2941 = vmatprep.subr.mxu0 0.0
    %2942 = vmatpush2.msra.mxu0 0.0
    %2943 = vmatprep.subr.mxu0 0.0
    %2944 = vmatpush2.msra.mxu0 0.0
    %2945 = vmatprep.subr.mxu0 0.0
    %2946 = vmatpush2.msra.mxu0 0.0
    %2947 = vmatprep.subr.mxu0 0.0
    %2948 = vmatpush2.msra.mxu0 0.0
    %2949 = vmatprep.subr.mxu0 0.0
    %2950 = vmatpush2.msra.mxu0 0.0
    %2951 = vmatprep.subr.mxu0 0.0
    %2952 = vmatpush2.msra.mxu0 0.0
    %2953 = vmatprep.subr.mxu0 0.0
    %2954 = vmatpush2.msra.mxu0 0.0
    %2955 = vmatprep.subr.mxu0 0.0
    %2956 = vmatpush2.msra.mxu0 0.0
    %2957 = vmatprep.subr.mxu0 0.0
    %2958 = vmatpush2.msra.mxu0 0.0
    %2959 = vmatprep.subr.mxu0 0.0
    %2960 = vmatpush2.msra.mxu0 0.0
    %2961 = vmatprep.subr.mxu0 0.0
    %2962 = vmatpush2.msra.mxu0 0.0
    %2963 = vmatprep.subr.mxu0 0.0
    %2964 = vmatpush2.msra.mxu0 0.0
    %2965 = vmatprep.subr.mxu0 0.0
    %2966 = vmatpush2.msra.mxu0 0.0
    %2967 = vmatprep.subr.mxu0 0.0
    %2968 = vmatpush2.msra.mxu0 0.0
    %2969 = vmatprep.subr.mxu0 0.0
    %2970 = vmatpush2.msra.mxu0 0.0
    %2971 = vmatprep.mubr.f32.mxu0 0.0
    %2972 = vmatmul.mubr.f32.gmra.mxu0 %v2905
    %v2973 = vpop.f32.mrf.mxu0
    %v2974 = vadd.f32 0.0, %v2973
    %v2975 = vpop.f32.mrf.mxu0
    %2976 = vdwg.mxu0
    %2978 = vrot.lane.b32.xlu0 %v1978, 16
    %v2979 = vpop.permute.xlu0 %2978
    %2982 = vrot.lane.b32.xlu0 %v2144, 32
    %v2983 = vpop.permute.xlu0 %2982
    %2986 = vrot.lane.b32.xlu0 %v2310, 48
    %v2987 = vpop.permute.xlu0 %2986
    %2990 = vrot.lane.b32.xlu0 %v2476, 64
    %v2991 = vpop.permute.xlu0 %2990
    %2994 = vrot.lane.b32.xlu0 %v2642, 80
    %v2995 = vpop.permute.xlu0 %2994
    %2998 = vrot.lane.b32.xlu0 %v2808, 96
    %v2999 = vpop.permute.xlu0 %2998
    %3002 = vrot.lane.b32.xlu0 %v2974, 112
    %v3003 = vpop.permute.xlu0 %3002
    %v3005 = vsel %vm286, %v1811, %v2979
    %v3006 = vsel %vm1641, %v3005, %v2983
    %v3007 = vsel %vm1643, %v3006, %v2987
    %v3008 = vsel %vm1645, %v3007, %v2991
    %v3009 = vsel %vm1647, %v3008, %v2995
    %v3010 = vsel %vm1649, %v3009, %v2999
    %v3011 = vsel %vm1651, %v3010, %v3003
    %v3012 = vld [vmem:[%s3] sm:$0xff]
    %v3013 = vld [vmem:[%s3 + $0x8] sm:$0xff]
    %v3014 = vld [vmem:[%s3 + $0x10] sm:$0xff]
    %v3015 = vld [vmem:[%s3 + $0x18] sm:$0xff]
    %v3016 = vld [vmem:[%s3 + $0x20] sm:$0xff]
    %v3017 = vld [vmem:[%s3 + $0x28] sm:$0xff]
    %v3018 = vld [vmem:[%s3 + $0x30] sm:$0xff]
    %v3019 = vld [vmem:[%s3 + $0x38] sm:$0xff]
    %v3020 = vld [vmem:[%s3 + $0x40] sm:$0xff]
    %v3021 = vld [vmem:[%s3 + $0x48] sm:$0xff]
    %v3022 = vld [vmem:[%s3 + $0x50] sm:$0xff]
    %v3023 = vld [vmem:[%s3 + $0x58] sm:$0xff]
    %v3024 = vld [vmem:[%s3 + $0x60] sm:$0xff]
    %v3025 = vld [vmem:[%s3 + $0x68] sm:$0xff]
    %v3026 = vld [vmem:[%s3 + $0x70] sm:$0xff]
    %v3027 = vld [vmem:[%s3 + $0x78] sm:$0xff]
    %v3028 = vld [vmem:[%s4] sm:$0x1]
    %v3030 = vlaneseq
    %v3031 = vshrl.u32 %v3030, 7
    %v3032 = vsub.s32 0, %v3031
    %v3033 = vrot.slane %v3028, %v3032
    %3035 = vmatprep.subr.mxu0 0.0
    %3036 = vmatpush1.msra.mxu0 %v3027
    %3037 = vmatprep.subr.mxu0 0.0
    %3038 = vmatpush1.msra.mxu0 %v3026
    %3039 = vmatprep.subr.mxu0 0.0
    %3040 = vmatpush1.msra.mxu0 %v3025
    %3041 = vmatprep.subr.mxu0 0.0
    %3042 = vmatpush1.msra.mxu0 %v3024
    %3043 = vmatprep.subr.mxu0 0.0
    %3044 = vmatpush1.msra.mxu0 %v3023
    %3045 = vmatprep.subr.mxu0 0.0
    %3046 = vmatpush1.msra.mxu0 %v3022
    %3047 = vmatprep.subr.mxu0 0.0
    %3048 = vmatpush1.msra.mxu0 %v3021
    %3049 = vmatprep.subr.mxu0 0.0
    %3050 = vmatpush1.msra.mxu0 %v3020
    %3051 = vmatprep.subr.mxu0 0.0
    %3052 = vmatpush1.msra.mxu0 %v3019
    %3053 = vmatprep.subr.mxu0 0.0
    %3054 = vmatpush1.msra.mxu0 %v3018
    %3055 = vmatprep.subr.mxu0 0.0
    %3056 = vmatpush1.msra.mxu0 %v3017
    %3057 = vmatprep.subr.mxu0 0.0
    %3058 = vmatpush1.msra.mxu0 %v3016
    %3059 = vmatprep.subr.mxu0 0.0
    %3060 = vmatpush1.msra.mxu0 %v3015
    %3061 = vmatprep.subr.mxu0 0.0
    %3062 = vmatpush1.msra.mxu0 %v3014
    %3063 = vmatprep.subr.mxu0 0.0
    %3064 = vmatpush1.msra.mxu0 %v3013
    %3065 = vmatprep.subr.mxu0 0.0
    %3066 = vmatpush1.msra.mxu0 %v3012
    %3067 = vmatprep.subr.mxu0 0.0
    %3068 = vmatpush2.msra.mxu0 0.0
    %3069 = vmatprep.subr.mxu0 0.0
    %3070 = vmatpush2.msra.mxu0 0.0
    %3071 = vmatprep.subr.mxu0 0.0
    %3072 = vmatpush2.msra.mxu0 0.0
    %3073 = vmatprep.subr.mxu0 0.0
    %3074 = vmatpush2.msra.mxu0 0.0
    %3075 = vmatprep.subr.mxu0 0.0
    %3076 = vmatpush2.msra.mxu0 0.0
    %3077 = vmatprep.subr.mxu0 0.0
    %3078 = vmatpush2.msra.mxu0 0.0
    %3079 = vmatprep.subr.mxu0 0.0
    %3080 = vmatpush2.msra.mxu0 0.0
    %3081 = vmatprep.subr.mxu0 0.0
    %3082 = vmatpush2.msra.mxu0 0.0
    %3083 = vmatprep.subr.mxu0 0.0
    %3084 = vmatpush2.msra.mxu0 0.0
    %3085 = vmatprep.subr.mxu0 0.0
    %3086 = vmatpush2.msra.mxu0 0.0
    %3087 = vmatprep.subr.mxu0 0.0
    %3088 = vmatpush2.msra.mxu0 0.0
    %3089 = vmatprep.subr.mxu0 0.0
    %3090 = vmatpush2.msra.mxu0 0.0
    %3091 = vmatprep.subr.mxu0 0.0
    %3092 = vmatpush2.msra.mxu0 0.0
    %3093 = vmatprep.subr.mxu0 0.0
    %3094 = vmatpush2.msra.mxu0 0.0
    %3095 = vmatprep.subr.mxu0 0.0
    %3096 = vmatpush2.msra.mxu0 0.0
    %3097 = vmatprep.subr.mxu0 0.0
    %3098 = vmatpush2.msra.mxu0 0.0
    %3099 = vmatprep.mubr.f32.mxu0 0.0
    %3100 = vmatmul.mubr.f32.gmra.mxu0 %v1652
    %v3101 = vpop.f32.mrf.mxu0
    %v3102 = vadd.f32 %v3033, %v3101
    %v3103 = vpop.f32.mrf.mxu0
    %3104 = vmatprep.mubr.f32.mxu0 0.0
    %3105 = vmatmul.mubr.f32.gmra.mxu0 %v3011
    %v3106 = vpop.f32.mrf.mxu0
    %v3107 = vadd.f32 %v3033, %v3106
    %v3108 = vpop.f32.mrf.mxu0
    %3109 = vdwg.mxu0
    %v3110 = vadd.f32 %v3102, %v67
    %v3111 = vadd.f32 %v3107, %v68
    %3112 = vadd.xlane.f32.xlu0 %v3110
    %v3113 = vpop.xlane.xlu0 %3112
    %3114 = vadd.xlane.f32.xlu0 %v3111
    %v3115 = vpop.xlane.xlu0 %3114
    %v3116 = vrcp.pop 128.0
    %v3117 = vmul.f32 %v3113, %v3116
    %v3118 = vmul.f32 %v3115, %v3116
    %v3119 = vsub.f32 %v3110, %v3117
    %v3120 = vsub.f32 %v3111, %v3118
    %v3121 = vmul.f32 %v3119, %v3119
    %v3122 = vmul.f32 %v3120, %v3120
    %3123 = vadd.xlane.f32.xlu0 %v3121
    %v3124 = vpop.xlane.xlu0 %3123
    %3125 = vadd.xlane.f32.xlu0 %v3122
    %v3126 = vpop.xlane.xlu0 %3125
    %v3127 = vmul.f32 %v3124, %v3116
    %v3128 = vmul.f32 %v3126, %v3116
    %v3129 = vadd.f32 %v3127, 1e-05
    %v3130 = vadd.f32 %v3128, 1e-05
    %v3131 = vrsqrt.pop %v3129
    %v3132 = vrsqrt.pop %v3130
    %v3133 = vmul.f32 %v3119, %v3131
    %v3134 = vmul.f32 %v3120, %v3132
    %v3135 = vld [vmem:[%s5] sm:$0x1]
    %v3137 = vlaneseq
    %v3138 = vshrl.u32 %v3137, 7
    %v3139 = vsub.s32 0, %v3138
    %v3140 = vrot.slane %v3135, %v3139
    %v3142 = vmul.f32 %v3133, %v3140
    %v3143 = vmul.f32 %v3134, %v3140
    %v3144 = vld [vmem:[%s6] sm:$0x1]
    %v3146 = vlaneseq
    %v3147 = vshrl.u32 %v3146, 7
    %v3148 = vsub.s32 0, %v3147
    %v3149 = vrot.slane %v3144, %v3148
    %v3151 = vadd.f32 %v3142, %v3149
    %v3152 = vadd.f32 %v3143, %v3149
    %v3153 = vld [vmem:[%s7] sm:$0xff]
    %v3154 = vld [vmem:[%s7 + $0x8] sm:$0xff]
    %v3155 = vld [vmem:[%s7 + $0x10] sm:$0xff]
    %v3156 = vld [vmem:[%s7 + $0x18] sm:$0xff]
    %v3157 = vld [vmem:[%s7 + $0x20] sm:$0xff]
    %v3158 = vld [vmem:[%s7 + $0x28] sm:$0xff]
    %v3159 = vld [vmem:[%s7 + $0x30] sm:$0xff]
    %v3160 = vld [vmem:[%s7 + $0x38] sm:$0xff]
    %v3161 = vld [vmem:[%s7 + $0x40] sm:$0xff]
    %v3162 = vld [vmem:[%s7 + $0x48] sm:$0xff]
    %v3163 = vld [vmem:[%s7 + $0x50] sm:$0xff]
    %v3164 = vld [vmem:[%s7 + $0x58] sm:$0xff]
    %v3165 = vld [vmem:[%s7 + $0x60] sm:$0xff]
    %v3166 = vld [vmem:[%s7 + $0x68] sm:$0xff]
    %v3167 = vld [vmem:[%s7 + $0x70] sm:$0xff]
    %v3168 = vld [vmem:[%s7 + $0x78] sm:$0xff]
    %v3169 = vld [vmem:[%s8] sm:$0x1]
    %v3171 = vlaneseq
    %v3172 = vshrl.u32 %v3171, 7
    %v3173 = vsub.s32 0, %v3172
    %v3174 = vrot.slane %v3169, %v3173
    %3176 = vmatprep.subr.mxu0 0.0
    %3177 = vmatpush1.msra.mxu0 %v3168
    %3178 = vmatprep.subr.mxu0 0.0
    %3179 = vmatpush1.msra.mxu0 %v3167
    %3180 = vmatprep.subr.mxu0 0.0
    %3181 = vmatpush1.msra.mxu0 %v3166
    %3182 = vmatprep.subr.mxu0 0.0
    %3183 = vmatpush1.msra.mxu0 %v3165
    %3184 = vmatprep.subr.mxu0 0.0
    %3185 = vmatpush1.msra.mxu0 %v3164
    %3186 = vmatprep.subr.mxu0 0.0
    %3187 = vmatpush1.msra.mxu0 %v3163
    %3188 = vmatprep.subr.mxu0 0.0
    %3189 = vmatpush1.msra.mxu0 %v3162
    %3190 = vmatprep.subr.mxu0 0.0
    %3191 = vmatpush1.msra.mxu0 %v3161
    %3192 = vmatprep.subr.mxu0 0.0
    %3193 = vmatpush1.msra.mxu0 %v3160
    %3194 = vmatprep.subr.mxu0 0.0
    %3195 = vmatpush1.msra.mxu0 %v3159
    %3196 = vmatprep.subr.mxu0 0.0
    %3197 = vmatpush1.msra.mxu0 %v3158
    %3198 = vmatprep.subr.mxu0 0.0
    %3199 = vmatpush1.msra.mxu0 %v3157
    %3200 = vmatprep.subr.mxu0 0.0
    %3201 = vmatpush1.msra.mxu0 %v3156
    %3202 = vmatprep.subr.mxu0 0.0
    %3203 = vmatpush1.msra.mxu0 %v3155
    %3204 = vmatprep.subr.mxu0 0.0
    %3205 = vmatpush1.msra.mxu0 %v3154
    %3206 = vmatprep.subr.mxu0 0.0
    %3207 = vmatpush1.msra.mxu0 %v3153
    %3208 = vmatprep.subr.mxu0 0.0
    %3209 = vmatpush2.msra.mxu0 0.0
    %3210 = vmatprep.subr.mxu0 0.0
    %3211 = vmatpush2.msra.mxu0 0.0
    %3212 = vmatprep.subr.mxu0 0.0
    %3213 = vmatpush2.msra.mxu0 0.0
    %3214 = vmatprep.subr.mxu0 0.0
    %3215 = vmatpush2.msra.mxu0 0.0
    %3216 = vmatprep.subr.mxu0 0.0
    %3217 = vmatpush2.msra.mxu0 0.0
    %3218 = vmatprep.subr.mxu0 0.0
    %3219 = vmatpush2.msra.mxu0 0.0
    %3220 = vmatprep.subr.mxu0 0.0
    %3221 = vmatpush2.msra.mxu0 0.0
    %3222 = vmatprep.subr.mxu0 0.0
    %3223 = vmatpush2.msra.mxu0 0.0
    %3224 = vmatprep.subr.mxu0 0.0
    %3225 = vmatpush2.msra.mxu0 0.0
    %3226 = vmatprep.subr.mxu0 0.0
    %3227 = vmatpush2.msra.mxu0 0.0
    %3228 = vmatprep.subr.mxu0 0.0
    %3229 = vmatpush2.msra.mxu0 0.0
    %3230 = vmatprep.subr.mxu0 0.0
    %3231 = vmatpush2.msra.mxu0 0.0
    %3232 = vmatprep.subr.mxu0 0.0
    %3233 = vmatpush2.msra.mxu0 0.0
    %3234 = vmatprep.subr.mxu0 0.0
    %3235 = vmatpush2.msra.mxu0 0.0
    %3236 = vmatprep.subr.mxu0 0.0
    %3237 = vmatpush2.msra.mxu0 0.0
    %3238 = vmatprep.subr.mxu0 0.0
    %3239 = vmatpush2.msra.mxu0 0.0
    %3240 = vmatprep.mubr.f32.mxu0 0.0
    %3241 = vmatmul.mubr.f32.gmra.mxu0 %v3151
    %v3242 = vpop.f32.mrf.mxu0
    %v3243 = vadd.f32 %v3174, %v3242
    %v3244 = vpop.f32.mrf.mxu0
    %3245 = vmatprep.mubr.f32.mxu0 0.0
    %3246 = vmatmul.mubr.f32.gmra.mxu0 %v3152
    %v3247 = vpop.f32.mrf.mxu0
    %v3248 = vadd.f32 %v3174, %v3247
    %v3249 = vpop.f32.mrf.mxu0
    %3250 = vdwg.mxu0
    %v3251 = vmax.f32 %v3243, 0.0
    %v3252 = vmax.f32 %v3248, 0.0
    %v3253 = vld [vmem:[%s9] sm:$0xff]
    %v3254 = vld [vmem:[%s9 + $0x8] sm:$0xff]
    %v3255 = vld [vmem:[%s9 + $0x10] sm:$0xff]
    %v3256 = vld [vmem:[%s9 + $0x18] sm:$0xff]
    %v3257 = vld [vmem:[%s9 + $0x20] sm:$0xff]
    %v3258 = vld [vmem:[%s9 + $0x28] sm:$0xff]
    %v3259 = vld [vmem:[%s9 + $0x30] sm:$0xff]
    %v3260 = vld [vmem:[%s9 + $0x38] sm:$0xff]
    %v3261 = vld [vmem:[%s9 + $0x40] sm:$0xff]
    %v3262 = vld [vmem:[%s9 + $0x48] sm:$0xff]
    %v3263 = vld [vmem:[%s10] sm:$0x1]
    %v3265 = vlaneseq
    %v3266 = vshrl.u32 %v3265, 7
    %v3267 = vsub.s32 0, %v3266
    %v3268 = vrot.slane %v3263, %v3267
    %v3271 = vsel %vm1647, %v3251, 0
    %v3274 = vsel %vm1647, %v3252, 0
    %3276 = vmatprep.subr.mxu0 0.0
    %3277 = vmatpush1.msra.mxu0 0.0
    %3278 = vmatprep.subr.mxu0 0.0
    %3279 = vmatpush1.msra.mxu0 0.0
    %3280 = vmatprep.subr.mxu0 0.0
    %3281 = vmatpush1.msra.mxu0 0.0
    %3282 = vmatprep.subr.mxu0 0.0
    %3283 = vmatpush1.msra.mxu0 0.0
    %3284 = vmatprep.subr.mxu0 0.0
    %3285 = vmatpush1.msra.mxu0 0.0
    %3286 = vmatprep.subr.mxu0 0.0
    %3287 = vmatpush1.msra.mxu0 0.0
    %3288 = vmatprep.subr.mxu0 0.0
    %3289 = vmatpush1.msra.mxu0 %v3262
    %3290 = vmatprep.subr.mxu0 0.0
    %3291 = vmatpush1.msra.mxu0 %v3261
    %3292 = vmatprep.subr.mxu0 0.0
    %3293 = vmatpush1.msra.mxu0 %v3260
    %3294 = vmatprep.subr.mxu0 0.0
    %3295 = vmatpush1.msra.mxu0 %v3259
    %3296 = vmatprep.subr.mxu0 0.0
    %3297 = vmatpush1.msra.mxu0 %v3258
    %3298 = vmatprep.subr.mxu0 0.0
    %3299 = vmatpush1.msra.mxu0 %v3257
    %3300 = vmatprep.subr.mxu0 0.0
    %3301 = vmatpush1.msra.mxu0 %v3256
    %3302 = vmatprep.subr.mxu0 0.0
    %3303 = vmatpush1.msra.mxu0 %v3255
    %3304 = vmatprep.subr.mxu0 0.0
    %3305 = vmatpush1.msra.mxu0 %v3254
    %3306 = vmatprep.subr.mxu0 0.0
    %3307 = vmatpush1.msra.mxu0 %v3253
    %3308 = vmatprep.subr.mxu0 0.0
    %3309 = vmatpush2.msra.mxu0 0.0
    %3310 = vmatprep.subr.mxu0 0.0
    %3311 = vmatpush2.msra.mxu0 0.0
    %3312 = vmatprep.subr.mxu0 0.0
    %3313 = vmatpush2.msra.mxu0 0.0
    %3314 = vmatprep.subr.mxu0 0.0
    %3315 = vmatpush2.msra.mxu0 0.0
    %3316 = vmatprep.subr.mxu0 0.0
    %3317 = vmatpush2.msra.mxu0 0.0
    %3318 = vmatprep.subr.mxu0 0.0
    %3319 = vmatpush2.msra.mxu0 0.0
    %3320 = vmatprep.subr.mxu0 0.0
    %3321 = vmatpush2.msra.mxu0 0.0
    %3322 = vmatprep.subr.mxu0 0.0
    %3323 = vmatpush2.msra.mxu0 0.0
    %3324 = vmatprep.subr.mxu0 0.0
    %3325 = vmatpush2.msra.mxu0 0.0
    %3326 = vmatprep.subr.mxu0 0.0
    %3327 = vmatpush2.msra.mxu0 0.0
    %3328 = vmatprep.subr.mxu0 0.0
    %3329 = vmatpush2.msra.mxu0 0.0
    %3330 = vmatprep.subr.mxu0 0.0
    %3331 = vmatpush2.msra.mxu0 0.0
    %3332 = vmatprep.subr.mxu0 0.0
    %3333 = vmatpush2.msra.mxu0 0.0
    %3334 = vmatprep.subr.mxu0 0.0
    %3335 = vmatpush2.msra.mxu0 0.0
    %3336 = vmatprep.subr.mxu0 0.0
    %3337 = vmatpush2.msra.mxu0 0.0
    %3338 = vmatprep.subr.mxu0 0.0
    %3339 = vmatpush2.msra.mxu0 0.0
    %3340 = vmatprep.mubr.f32.mxu0 0.0
    %3341 = vmatmul.mubr.f32.gmra.mxu0 %v3271
    %v3342 = vpop.f32.mrf.mxu0
    %v3343 = vadd.f32 %v3268, %v3342
    %v3344 = vpop.f32.mrf.mxu0
    %3345 = vmatprep.mubr.f32.mxu0 0.0
    %3346 = vmatmul.mubr.f32.gmra.mxu0 %v3274
    %v3347 = vpop.f32.mrf.mxu0
    %v3348 = vadd.f32 %v3268, %v3347
    %v3349 = vpop.f32.mrf.mxu0
    %3350 = vdwg.mxu0
    %v3351 = vadd.f32 %v3343, %v3151
    %v3352 = vadd.f32 %v3348, %v3152
    %3353 = vadd.xlane.f32.xlu0 %v3351
    %v3354 = vpop.xlane.xlu0 %3353
    %3355 = vadd.xlane.f32.xlu0 %v3352
    %v3356 = vpop.xlane.xlu0 %3355
    %v3357 = vmul.f32 %v3354, %v3116
    %v3358 = vmul.f32 %v3356, %v3116
    %v3359 = vsub.f32 %v3351, %v3357
    %v3360 = vsub.f32 %v3352, %v3358
    %v3361 = vmul.f32 %v3359, %v3359
    %v3362 = vmul.f32 %v3360, %v3360
    %3363 = vadd.xlane.f32.xlu0 %v3361
    %v3364 = vpop.xlane.xlu0 %3363
    %3365 = vadd.xlane.f32.xlu0 %v3362
    %v3366 = vpop.xlane.xlu0 %3365
    %v3367 = vmul.f32 %v3364, %v3116
    %v3368 = vmul.f32 %v3366, %v3116
    %v3369 = vadd.f32 %v3367, 1e-05
    %v3370 = vadd.f32 %v3368, 1e-05
    %v3371 = vrsqrt.pop %v3369
    %v3372 = vrsqrt.pop %v3370
    %v3373 = vmul.f32 %v3359, %v3371
    %v3374 = vmul.f32 %v3360, %v3372
    %v3375 = vmul.f32 %v3373, %v3140
    %v3376 = vmul.f32 %v3374, %v3140
    %v3377 = vadd.f32 %v3375, %v3149
    %v3378 = vadd.f32 %v3376, %v3149
    %3379 = vst [vmem:[#allocation7] sm:$0xff] %v3377
    %3380 = vst [vmem:[#allocation7 + $0x8] sm:$0xff] %v3378
    // Predicated region
    $region54: #{tpu_custom_call.1} parent=1 // pred_check
      _
    $region55: #{tpu_custom_call.1} parent=1 // pred_check_branch
      %3382 = sbr.rel (0) target = $region57
    $region56: #{tpu_custom_call.1} parent=1 // pred_region
      %s3384 = ssub.s32 256, 256
      %3385 = vsyncadd [#allocation4], %s3384
      %s3386 = sshll.u32 [#allocation7], 4
      %s3387 = int_to_ptr.vmem [resolvable:$true] %s3386
      %3392 = dma.vmem_to_hbm [thread:$0]  %s3387, 256, %s11, [#allocation4], 128, 128, 8
    $region57: #{tpu_custom_call.1} parent=1 // pred_fallthru
      _
    // Predicated region
    $region58: #{tpu_custom_call.1} parent=1 // pred_check
      _
    $region59: #{tpu_custom_call.1} parent=1 // pred_check_branch
      %3394 = sbr.rel (0) target = $region61
    $region60: #{tpu_custom_call.1} parent=1 // pred_region
      %3395 = dma.done [#allocation4], 256
    $region61: #{tpu_custom_call.1} parent=1 // pred_fallthru
      _
    %3396 = vsyncpa [#allocation3], 1
    %3397 = vsyncpa [#allocation6], 1
    %3398 = vsyncpa [#allocation4], 1

</llo_original>
